<compile_context>
chip_gen: v7x
topology: tpu7x:2x2x1
jax: 0.10.0
libtpu: 0.0.40
codegen_flags: <defaults>
</compile_context>

<pallas_src>
import math
from functools import partial

import jax
import jax.numpy as jnp
from jax import lax
from jax.experimental import pallas as pl
from jax.experimental.pallas import tpu as pltpu


def _round_up(n, m):
    return ((n + m - 1) // m) * m


def _largest_divisor_leq(n, cap):
    cap = max(1, min(n, cap))
    for d in range(cap, 0, -1):
        if n % d == 0:
            return d
    return 1


def _vmem_limit_bytes():
    # v5e/v6e: 128 MiB physical VMEM per core, v7x: 64 MiB -> budget half of it.
    try:
        return int(pltpu.get_tpu_info().vmem_capacity_bytes) // 2
    except Exception:
        return 32 * 1024 * 1024


def convnext_block_kernel(x_ref, dww_ref, dwb_ref, lnw_ref, lnb_ref,
                          w1_ref, b1_ref, gg_ref, gb_ref, w2_ref, b2_ref,
                          out_ref, xpad_scr, dwx_scr, h_scr,
                          *, C, C4, R_DW, RS, compute_dtype, precise):
    # x_ref/out_ref: (H, W, Cp) f32 (batch dim squeezed by the BlockSpec).
    H, W, Cp = out_ref.shape
    C4p = w1_ref.shape[1]
    f32 = jnp.float32

    # ---- 1) padded-halo buffer: zero only the 3-wide ring, copy the interior ----
    # (interior is fully overwritten each step; ring is ~20% of a full zero. Kept
    #  per-step -- rather than once at program_id==0 -- so a megacore batch split
    #  stays correct.)
    xpad_scr[0:3, :, :] = jnp.zeros((3, W + 6, Cp), f32)
    xpad_scr[H + 3:H + 6, :, :] = jnp.zeros((3, W + 6, Cp), f32)
    xpad_scr[3:H + 3, 0:3, :] = jnp.zeros((H, 3, Cp), f32)
    xpad_scr[3:H + 3, W + 3:W + 6, :] = jnp.zeros((H, 3, Cp), f32)
    xpad_scr[3:H + 3, 3:W + 3, :] = x_ref[...]

    dwb = dwb_ref[...]                                   # (1, Cp)

    # ---- 2) depthwise 7x7, padding=3, groups=C: register-stripe accumulation ----
    # All 49 taps for an R_DW-row stripe are accumulated in vregs, stored once.
    def dw_body(i, carry):
        r0 = i * R_DW
        # tap (0,0) initializes the accumulator together with the bias
        acc = (xpad_scr[pl.ds(r0, R_DW), pl.ds(0, W), :]
               * dww_ref[pl.ds(0, 1), :] + dwb)
        for kh in range(7):
            for kw in range(7):
                if kh == 0 and kw == 0:
                    continue
                win = xpad_scr[pl.ds(r0 + kh, R_DW), pl.ds(kw, W), :]
                acc = acc + win * dww_ref[pl.ds(kh * 7 + kw, 1), :]
        dwx_scr[pl.ds(r0, R_DW), :, :] = acc
        return carry

    lax.fori_loop(0, H // R_DW, dw_body, 0)

    # hoisted small constants (JAX does not CSE broadcast_in_dim inside loops)
    lnw = lnw_ref[...]
    lnb = lnb_ref[...]
    b1 = b1_ref[...]

    M = RS * W                       # flattened rows per stripe (MXU M tile)
    n_s = H // RS
    inv_c = 1.0 / C

    # ---- 3) pass 1 (striped): LayerNorm -> pwconv1 -> GELU -> GRN statistics ----
    def p1_body(s, gsq):
        r0 = s * RS
        xs = dwx_scr[pl.ds(r0, RS), :, :].reshape(M, Cp)
        # LayerNorm over the true C channels (padded lanes of xs are exactly 0);
        # single-pass moments: var = E[x^2] - mu^2.
        mu = jnp.sum(xs, axis=-1, keepdims=True) * inv_c
        var = jnp.sum(xs * xs, axis=-1, keepdims=True) * inv_c - mu * mu
        xn = (xs - mu) * lax.rsqrt(var + 1e-6)
        xn = xn * lnw + lnb          # padded lanes of lnw/lnb are 0 -> stays 0
        h = jnp.dot(xn.astype(compute_dtype), w1_ref[...],
                    preferred_element_type=jnp.float32) + b1
        if precise:
            h = 0.5 * h * (1.0 + lax.erf(h * (1.0 / math.sqrt(2.0))))
        else:
            h = jax.nn.gelu(h, approximate=True)         # tanh -> EUP slot
        m0 = s * M
        if M % 8 == 0:
            m0 = pl.multiple_of(m0, 8)
        h_scr[pl.ds(m0, M), :] = h.astype(h_scr.dtype)
        return gsq + jnp.sum(h * h, axis=0, keepdims=True)

    gsq = lax.fori_loop(0, n_s, p1_body, jnp.zeros((1, C4p), jnp.float32))

    # ---- GRN statistics over all spatial positions -------------------------------
    gx = jnp.sqrt(gsq)                                          # (1, C4p)
    gmean = jnp.sum(gx, axis=-1, keepdims=True) * (1.0 / C4)    # true-channel mean
    if precise:
        nx = gx / (gmean + 1e-6)
    else:
        nx = gx * pl.reciprocal(gmean + 1e-6, approx=True)      # EUP reciprocal

    gg = gg_ref[...]
    gb = gb_ref[...]
    b2 = b2_ref[...]

    # ---- 4) pass 2 (striped): GRN apply -> pwconv2 -> residual -> output --------
    def p2_body(s, carry):
        r0 = s * RS
        m0 = s * M
        if M % 8 == 0:
            m0 = pl.multiple_of(m0, 8)
        h = h_scr[pl.ds(m0, M), :].astype(jnp.float32)
        h = gg * (h * nx) + gb + h
        y = jnp.dot(h.astype(compute_dtype), w2_ref[...],
                    preferred_element_type=jnp.float32) + b2
        out_ref[pl.ds(r0, RS), :, :] = (
            x_ref[pl.ds(r0, RS), :, :] + y.reshape(RS, W, Cp))
        return carry

    lax.fori_loop(0, n_s, p2_body, 0)


def convnext_block_nhwc(x_nhwc, params, *, compute_dtype=jnp.bfloat16, precise=False):
    """NHWC-native entry point (preferred: avoids NCHW<->NHWC HBM passes)."""
    B, H, W, C = x_nhwc.shape
    C4 = 4 * C
    Cp = _round_up(C, 128)
    C4p = _round_up(C4, 128)
    f32 = jnp.float32

    def padc(a, n):  # zero-pad last dim to n, keep f32 (padded lanes must be 0)
        a = a.astype(f32)
        return jnp.pad(a, [(0, 0)] * (a.ndim - 1) + [(0, n - a.shape[-1])])

    x = padc(x_nhwc, Cp)                                            # (B,H,W,Cp)

    dww = padc(params['dw_w'].reshape(49, C), Cp)                   # (49, Cp)
    dwb = padc(params['dw_b'].reshape(1, C), Cp)
    lnw = padc(params['ln_w'].reshape(1, C), Cp)
    lnb = padc(params['ln_b'].reshape(1, C), Cp)
    w1 = jnp.pad(params['w1'].astype(f32),
                 ((0, Cp - C), (0, C4p - C4))).astype(compute_dtype)
    b1 = padc(params['b1'].reshape(1, C4), C4p)
    gg = padc(params['grn_gamma'].reshape(1, C4), C4p)
    gb = padc(params['grn_beta'].reshape(1, C4), C4p)
    w2 = jnp.pad(params['w2'].astype(f32),
                 ((0, C4p - C4), (0, Cp - C))).astype(compute_dtype)
    b2 = padc(params['b2'].reshape(1, C), Cp)

    # dwconv register-stripe rows (acc <= ~64 KiB f32) and matmul row-stripe rows
    R_DW = _largest_divisor_leq(H, max(1, 16384 // (W * Cp)))
    RS = _largest_divisor_leq(H, max(1, 512 // W))
    HWp = _round_up(H * W, 8)

    kernel = partial(convnext_block_kernel, C=C, C4=C4, R_DW=R_DW, RS=RS,
                     compute_dtype=compute_dtype, precise=precise)

    def const(shape):
        # Constant weights/biases: block index never changes across the grid ->
        # single-buffer them (default double buffering would waste VMEM).
        nd = len(shape)
        return pl.BlockSpec(shape, lambda b, _nd=nd: (0,) * _nd,
                            pipeline_mode=pl.Buffered(1))

    # advisory cost for XLA's scheduler around this custom call
    flops = B * H * W * (2 * 49 * Cp + 4 * Cp * C4p)
    param_bytes = sum(int(a.size) * a.dtype.itemsize
                      for a in (dww, dwb, lnw, lnb, w1, b1, gg, gb, w2, b2))
    cost = pl.CostEstimate(flops=int(flops),
                           transcendentals=int(B * H * W * C4p),
                           bytes_accessed=int(x.size) * 4 * 2 + param_bytes)

    out = pl.pallas_call(
        kernel,
        out_shape=jax.ShapeDtypeStruct((B, H, W, Cp), jnp.float32),
        grid_spec=pltpu.PrefetchScalarGridSpec(
            num_scalar_prefetch=0,
            grid=(B,),
            in_specs=[
                pl.BlockSpec((None, H, W, Cp), lambda b: (b, 0, 0, 0)),
                const((49, Cp)),
                const((1, Cp)),
                const((1, Cp)),
                const((1, Cp)),
                const((Cp, C4p)),
                const((1, C4p)),
                const((1, C4p)),
                const((1, C4p)),
                const((C4p, Cp)),
                const((1, Cp)),
            ],
            out_specs=pl.BlockSpec((None, H, W, Cp), lambda b: (b, 0, 0, 0)),
            scratch_shapes=[
                pltpu.VMEM((H + 6, W + 6, Cp), jnp.float32),   # padded-halo input
                pltpu.VMEM((H, W, Cp), jnp.float32),           # dwconv output
                pltpu.VMEM((HWp, C4p), compute_dtype),         # pwconv1/GELU activations
            ],
        ),
        compiler_params=pltpu.CompilerParams(
            dimension_semantics=("parallel",),
            vmem_limit_bytes=_vmem_limit_bytes(),
        ),
        cost_estimate=cost,
    )(x, dww, dwb, lnw, lnb, w1, b1, gg, gb, w2, b2)

    return out[..., :C]                                             # drop padded lanes


@partial(jax.jit, static_argnames=("compute_dtype", "precise"))
def convnext_block(x_nchw, params, *, compute_dtype=jnp.bfloat16, precise=False):
    """PyTorch-interface wrapper (NCHW in/out); layout plumbing only."""
    x = jnp.transpose(x_nchw, (0, 2, 3, 1)).astype(jnp.float32)     # NHWC
    out = convnext_block_nhwc(x, params, compute_dtype=compute_dtype, precise=precise)
    return jnp.transpose(out, (0, 3, 1, 2))                         # back to NCHW


def reference_block(x_nchw, p):
    """Pure-JAX reference matching the PyTorch forward."""
    C = x_nchw.shape[1]
    w = jnp.transpose(p['dw_w'], (2, 0, 1))[:, None, :, :]          # (C,1,7,7)
    y = jax.lax.conv_general_dilated(
        x_nchw, w, (1, 1), [(3, 3), (3, 3)],
        feature_group_count=C,
        dimension_numbers=('NCHW', 'OIHW', 'NCHW'))
    y = y + p['dw_b'][None, :, None, None]
    y = jnp.transpose(y, (0, 2, 3, 1))                              # NHWC
    mu = y.mean(-1, keepdims=True)
    var = ((y - mu) ** 2).mean(-1, keepdims=True)
    y = (y - mu) / jnp.sqrt(var + 1e-6) * p['ln_w'] + p['ln_b']
    y = y @ p['w1'] + p['b1']
    y = 0.5 * y * (1.0 + jax.lax.erf(y / math.sqrt(2.0)))
    gx = jnp.sqrt(jnp.sum(y * y, axis=(1, 2), keepdims=True))
    nx = gx / (jnp.mean(gx, axis=-1, keepdims=True) + 1e-6)
    y = p['grn_gamma'] * (y * nx) + p['grn_beta'] + y
    y = y @ p['w2'] + p['b2']
    return x_nchw + jnp.transpose(y, (0, 3, 1, 2))


if __name__ == "__main__":
    key = jax.random.PRNGKey(0)
    B, dim, H, W = 2, 4, 16, 16
    ks = jax.random.split(key, 12)

    x = jax.random.normal(ks[0], (B, dim, H, W), jnp.float32)

    params = {
        'dw_w': 0.1 * jax.random.normal(ks[1], (7, 7, dim), jnp.float32),
        'dw_b': 0.1 * jax.random.normal(ks[2], (dim,), jnp.float32),
        'ln_w': 1.0 + 0.1 * jax.random.normal(ks[3], (dim,), jnp.float32),
        'ln_b': 0.1 * jax.random.normal(ks[4], (dim,), jnp.float32),
        'w1': 0.1 * jax.random.normal(ks[5], (dim, 4 * dim), jnp.float32),
        'b1': 0.1 * jax.random.normal(ks[6], (4 * dim,), jnp.float32),
        # GRN params init to zero in the module; use nonzero here to exercise the path
        'grn_gamma': 0.1 * jax.random.normal(ks[7], (4 * dim,), jnp.float32),
        'grn_beta': 0.1 * jax.random.normal(ks[8], (4 * dim,), jnp.float32),
        'w2': 0.1 * jax.random.normal(ks[9], (4 * dim, dim), jnp.float32),
        'b2': 0.1 * jax.random.normal(ks[10], (dim,), jnp.float32),
    }

    ref = reference_block(x, params)

    # parity path: f32 matmuls, exact erf GELU, exact GRN divide
    out_f32 = jax.block_until_ready(
        convnext_block(x, params, compute_dtype=jnp.float32, precise=True))
    assert out_f32.shape == (B, dim, H, W)
    assert jnp.allclose(out_f32, ref, rtol=2e-3, atol=2e-3), \
        f"f32 max err {jnp.max(jnp.abs(out_f32 - ref))}"

    # performance default: bf16 MXU operands, tanh GELU, approx GRN reciprocal
    out_bf16 = jax.block_until_ready(
        convnext_block(x, params, compute_dtype=jnp.bfloat16, precise=False))
    assert out_bf16.shape == (B, dim, H, W)
    assert jnp.allclose(out_bf16, ref, rtol=5e-2, atol=5e-2), \
        f"bf16 max err {jnp.max(jnp.abs(out_bf16 - ref))}"

    print("KERNEL_OK")
</pallas_src>

<mosaic_0001>
module attributes {stable_mosaic.version = 11 : i64} {
  func.func @convnext_block_kernel(%arg0: i32, %arg1: memref<1x16x16x128xf32, #tpu.memory_space<vmem>>, %arg2: memref<49x128xf32, #tpu.memory_space<vmem>>, %arg3: memref<1x128xf32, #tpu.memory_space<vmem>>, %arg4: memref<1x128xf32, #tpu.memory_space<vmem>>, %arg5: memref<1x128xf32, #tpu.memory_space<vmem>>, %arg6: memref<128x128xf32, #tpu.memory_space<vmem>>, %arg7: memref<1x128xf32, #tpu.memory_space<vmem>>, %arg8: memref<1x128xf32, #tpu.memory_space<vmem>>, %arg9: memref<1x128xf32, #tpu.memory_space<vmem>>, %arg10: memref<128x128xf32, #tpu.memory_space<vmem>>, %arg11: memref<1x128xf32, #tpu.memory_space<vmem>>, %arg12: memref<1x16x16x128xf32, #tpu.memory_space<vmem>>, %arg13: memref<22x22x128xf32, #tpu.memory_space<vmem>>, %arg14: memref<16x16x128xf32, #tpu.memory_space<vmem>>, %arg15: memref<256x128xf32, #tpu.memory_space<vmem>>) attributes {dimension_semantics = [#tpu.dimension_semantics<parallel>], iteration_bounds = array<i64: 2>, scalar_prefetch = 0 : i64, scratch_operands = 3 : i64, tpu.core_type = #tpu.core_type<tc>, window_params = [{transform_indices = @transform_0, window_bounds = array<i64: 1, 16, 16, 128>}, {pipeline_mode = #tpu.pipeline_mode<synchronous>, transform_indices = @transform_1, window_bounds = array<i64: 49, 128>}, {pipeline_mode = #tpu.pipeline_mode<synchronous>, transform_indices = @transform_2, window_bounds = array<i64: 1, 128>}, {pipeline_mode = #tpu.pipeline_mode<synchronous>, transform_indices = @transform_3, window_bounds = array<i64: 1, 128>}, {pipeline_mode = #tpu.pipeline_mode<synchronous>, transform_indices = @transform_4, window_bounds = array<i64: 1, 128>}, {pipeline_mode = #tpu.pipeline_mode<synchronous>, transform_indices = @transform_5, window_bounds = array<i64: 128, 128>}, {pipeline_mode = #tpu.pipeline_mode<synchronous>, transform_indices = @transform_6, window_bounds = array<i64: 1, 128>}, {pipeline_mode = #tpu.pipeline_mode<synchronous>, transform_indices = @transform_7, window_bounds = array<i64: 1, 128>}, {pipeline_mode = #tpu.pipeline_mode<synchronous>, transform_indices = @transform_8, window_bounds = array<i64: 1, 128>}, {pipeline_mode = #tpu.pipeline_mode<synchronous>, transform_indices = @transform_9, window_bounds = array<i64: 128, 128>}, {pipeline_mode = #tpu.pipeline_mode<synchronous>, transform_indices = @transform_10, window_bounds = array<i64: 1, 128>}, {transform_indices = @transform_11, window_bounds = array<i64: 1, 16, 16, 128>}]} {
    %cst = arith.constant 0.000000e+00 : f32
    %0 = vector.broadcast %cst : f32 to vector<3x22x128xf32>
    %c0 = arith.constant 0 : index
    %c0_0 = arith.constant 0 : index
    %c0_1 = arith.constant 0 : index
    %1 = vector.load %arg13[%c0, %c0_0, %c0_1] : memref<22x22x128xf32, #tpu.memory_space<vmem>>, vector<3x22x128xf32>
    tpu.vector_store %arg13[%c0, %c0_0, %c0_1], %0 {strides = array<i32>} : memref<22x22x128xf32, #tpu.memory_space<vmem>>, vector<3x22x128xf32>,
    %cst_2 = arith.constant 0.000000e+00 : f32
    %2 = vector.broadcast %cst_2 : f32 to vector<3x22x128xf32>
    %c19 = arith.constant 19 : index
    %c0_3 = arith.constant 0 : index
    %c0_4 = arith.constant 0 : index
    %3 = vector.load %arg13[%c19, %c0_3, %c0_4] : memref<22x22x128xf32, #tpu.memory_space<vmem>>, vector<3x22x128xf32>
    tpu.vector_store %arg13[%c19, %c0_3, %c0_4], %2 {strides = array<i32>} : memref<22x22x128xf32, #tpu.memory_space<vmem>>, vector<3x22x128xf32>,
    %cst_5 = arith.constant 0.000000e+00 : f32
    %4 = vector.broadcast %cst_5 : f32 to vector<16x3x128xf32>
    %c3 = arith.constant 3 : index
    %c0_6 = arith.constant 0 : index
    %c0_7 = arith.constant 0 : index
    %5 = vector.load %arg13[%c3, %c0_6, %c0_7] : memref<22x22x128xf32, #tpu.memory_space<vmem>>, vector<16x3x128xf32>
    tpu.vector_store %arg13[%c3, %c0_6, %c0_7], %4 {strides = array<i32>} : memref<22x22x128xf32, #tpu.memory_space<vmem>>, vector<16x3x128xf32>,
    %cst_8 = arith.constant 0.000000e+00 : f32
    %6 = vector.broadcast %cst_8 : f32 to vector<16x3x128xf32>
    %c3_9 = arith.constant 3 : index
    %c19_10 = arith.constant 19 : index
    %c0_11 = arith.constant 0 : index
    %7 = vector.load %arg13[%c3_9, %c19_10, %c0_11] : memref<22x22x128xf32, #tpu.memory_space<vmem>>, vector<16x3x128xf32>
    tpu.vector_store %arg13[%c3_9, %c19_10, %c0_11], %6 {strides = array<i32>} : memref<22x22x128xf32, #tpu.memory_space<vmem>>, vector<16x3x128xf32>,
    %c0_12 = arith.constant 0 : index
    %c0_13 = arith.constant 0 : index
    %c0_14 = arith.constant 0 : index
    %c0_15 = arith.constant 0 : index
    %8 = vector.load %arg1[%c0_12, %c0_13, %c0_14, %c0_15] : memref<1x16x16x128xf32, #tpu.memory_space<vmem>>, vector<1x16x16x128xf32>
    %9 = vector.shape_cast %8 : vector<1x16x16x128xf32> to vector<16x16x128xf32>
    %c3_16 = arith.constant 3 : index
    %c3_17 = arith.constant 3 : index
    %c0_18 = arith.constant 0 : index
    %10 = vector.load %arg13[%c3_16, %c3_17, %c0_18] : memref<22x22x128xf32, #tpu.memory_space<vmem>>, vector<16x16x128xf32>
    tpu.vector_store %arg13[%c3_16, %c3_17, %c0_18], %9 {strides = array<i32>} : memref<22x22x128xf32, #tpu.memory_space<vmem>>, vector<16x16x128xf32>,
    %c0_19 = arith.constant 0 : index
    %c0_20 = arith.constant 0 : index
    %11 = vector.load %arg3[%c0_19, %c0_20] : memref<1x128xf32, #tpu.memory_space<vmem>>, vector<1x128xf32>
    %c0_i32 = arith.constant 0 : i32
    %c2_i32 = arith.constant 2 : i32
    %12 = arith.addi %c0_i32, %c2_i32 : i32
    %c1_i32 = arith.constant 1 : i32
    scf.for %arg16 = %c0_i32 to %12 step %c1_i32  : i32 {
      %c8_i32 = arith.constant 8 : i32
      %100 = arith.muli %arg16, %c8_i32 : i32
      %101 = arith.index_cast %100 : i32 to index
      %c0_69 = arith.constant 0 : index
      %c0_70 = arith.constant 0 : index
      %102 = vector.load %arg13[%101, %c0_69, %c0_70] : memref<22x22x128xf32, #tpu.memory_space<vmem>>, vector<8x16x128xf32>
      %c0_71 = arith.constant 0 : index
      %c0_72 = arith.constant 0 : index
      %103 = vector.load %arg2[%c0_71, %c0_72] : memref<49x128xf32, #tpu.memory_space<vmem>>, vector<1x128xf32>
      %104 = vector.shape_cast %103 : vector<1x128xf32> to vector<1x1x128xf32>
      %105 = vector.broadcast %104 : vector<1x1x128xf32> to vector<8x16x128xf32>
      %106 = arith.mulf %102, %105 : vector<8x16x128xf32>
      %107 = vector.shape_cast %11 : vector<1x128xf32> to vector<1x1x128xf32>
      %108 = vector.broadcast %107 : vector<1x1x128xf32> to vector<8x16x128xf32>
      %109 = arith.addf %106, %108 : vector<8x16x128xf32>
      %c0_i32_73 = arith.constant 0 : i32
      %110 = arith.addi %100, %c0_i32_73 : i32
      %111 = arith.index_cast %110 : i32 to index
      %c1 = arith.constant 1 : index
      %c0_74 = arith.constant 0 : index
      %112 = vector.load %arg13[%111, %c1, %c0_74] : memref<22x22x128xf32, #tpu.memory_space<vmem>>, vector<8x16x128xf32>
      %c1_75 = arith.constant 1 : index
      %c0_76 = arith.constant 0 : index
      %113 = vector.load %arg2[%c1_75, %c0_76] : memref<49x128xf32, #tpu.memory_space<vmem>>, vector<1x128xf32>
      %114 = vector.shape_cast %113 : vector<1x128xf32> to vector<1x1x128xf32>
      %115 = vector.broadcast %114 : vector<1x1x128xf32> to vector<8x16x128xf32>
      %116 = arith.mulf %112, %115 : vector<8x16x128xf32>
      %117 = arith.addf %109, %116 : vector<8x16x128xf32>
      %c0_i32_77 = arith.constant 0 : i32
      %118 = arith.addi %100, %c0_i32_77 : i32
      %119 = arith.index_cast %118 : i32 to index
      %c2 = arith.constant 2 : index
      %c0_78 = arith.constant 0 : index
      %120 = vector.load %arg13[%119, %c2, %c0_78] : memref<22x22x128xf32, #tpu.memory_space<vmem>>, vector<8x16x128xf32>
      %c2_79 = arith.constant 2 : index
      %c0_80 = arith.constant 0 : index
      %121 = vector.load %arg2[%c2_79, %c0_80] : memref<49x128xf32, #tpu.memory_space<vmem>>, vector<1x128xf32>
      %122 = vector.shape_cast %121 : vector<1x128xf32> to vector<1x1x128xf32>
      %123 = vector.broadcast %122 : vector<1x1x128xf32> to vector<8x16x128xf32>
      %124 = arith.mulf %120, %123 : vector<8x16x128xf32>
      %125 = arith.addf %117, %124 : vector<8x16x128xf32>
      %c0_i32_81 = arith.constant 0 : i32
      %126 = arith.addi %100, %c0_i32_81 : i32
      %127 = arith.index_cast %126 : i32 to index
      %c3_82 = arith.constant 3 : index
      %c0_83 = arith.constant 0 : index
      %128 = vector.load %arg13[%127, %c3_82, %c0_83] : memref<22x22x128xf32, #tpu.memory_space<vmem>>, vector<8x16x128xf32>
      %c3_84 = arith.constant 3 : index
      %c0_85 = arith.constant 0 : index
      %129 = vector.load %arg2[%c3_84, %c0_85] : memref<49x128xf32, #tpu.memory_space<vmem>>, vector<1x128xf32>
      %130 = vector.shape_cast %129 : vector<1x128xf32> to vector<1x1x128xf32>
      %131 = vector.broadcast %130 : vector<1x1x128xf32> to vector<8x16x128xf32>
      %132 = arith.mulf %128, %131 : vector<8x16x128xf32>
      %133 = arith.addf %125, %132 : vector<8x16x128xf32>
      %c0_i32_86 = arith.constant 0 : i32
      %134 = arith.addi %100, %c0_i32_86 : i32
      %135 = arith.index_cast %134 : i32 to index
      %c4 = arith.constant 4 : index
      %c0_87 = arith.constant 0 : index
      %136 = vector.load %arg13[%135, %c4, %c0_87] : memref<22x22x128xf32, #tpu.memory_space<vmem>>, vector<8x16x128xf32>
      %c4_88 = arith.constant 4 : index
      %c0_89 = arith.constant 0 : index
      %137 = vector.load %arg2[%c4_88, %c0_89] : memref<49x128xf32, #tpu.memory_space<vmem>>, vector<1x128xf32>
      %138 = vector.shape_cast %137 : vector<1x128xf32> to vector<1x1x128xf32>
      %139 = vector.broadcast %138 : vector<1x1x128xf32> to vector<8x16x128xf32>
      %140 = arith.mulf %136, %139 : vector<8x16x128xf32>
      %141 = arith.addf %133, %140 : vector<8x16x128xf32>
      %c0_i32_90 = arith.constant 0 : i32
      %142 = arith.addi %100, %c0_i32_90 : i32
      %143 = arith.index_cast %142 : i32 to index
      %c5 = arith.constant 5 : index
      %c0_91 = arith.constant 0 : index
      %144 = vector.load %arg13[%143, %c5, %c0_91] : memref<22x22x128xf32, #tpu.memory_space<vmem>>, vector<8x16x128xf32>
      %c5_92 = arith.constant 5 : index
      %c0_93 = arith.constant 0 : index
      %145 = vector.load %arg2[%c5_92, %c0_93] : memref<49x128xf32, #tpu.memory_space<vmem>>, vector<1x128xf32>
      %146 = vector.shape_cast %145 : vector<1x128xf32> to vector<1x1x128xf32>
      %147 = vector.broadcast %146 : vector<1x1x128xf32> to vector<8x16x128xf32>
      %148 = arith.mulf %144, %147 : vector<8x16x128xf32>
      %149 = arith.addf %141, %148 : vector<8x16x128xf32>
      %c0_i32_94 = arith.constant 0 : i32
      %150 = arith.addi %100, %c0_i32_94 : i32
      %151 = arith.index_cast %150 : i32 to index
      %c6 = arith.constant 6 : index
      %c0_95 = arith.constant 0 : index
      %152 = vector.load %arg13[%151, %c6, %c0_95] : memref<22x22x128xf32, #tpu.memory_space<vmem>>, vector<8x16x128xf32>
      %c6_96 = arith.constant 6 : index
      %c0_97 = arith.constant 0 : index
      %153 = vector.load %arg2[%c6_96, %c0_97] : memref<49x128xf32, #tpu.memory_space<vmem>>, vector<1x128xf32>
      %154 = vector.shape_cast %153 : vector<1x128xf32> to vector<1x1x128xf32>
      %155 = vector.broadcast %154 : vector<1x1x128xf32> to vector<8x16x128xf32>
      %156 = arith.mulf %152, %155 : vector<8x16x128xf32>
      %157 = arith.addf %149, %156 : vector<8x16x128xf32>
      %c1_i32_98 = arith.constant 1 : i32
      %158 = arith.addi %100, %c1_i32_98 : i32
      %159 = arith.index_cast %158 : i32 to index
      %c0_99 = arith.constant 0 : index
      %c0_100 = arith.constant 0 : index
      %160 = vector.load %arg13[%159, %c0_99, %c0_100] : memref<22x22x128xf32, #tpu.memory_space<vmem>>, vector<8x16x128xf32>
      %c7 = arith.constant 7 : index
      %c0_101 = arith.constant 0 : index
      %161 = vector.load %arg2[%c7, %c0_101] : memref<49x128xf32, #tpu.memory_space<vmem>>, vector<1x128xf32>
      %162 = vector.shape_cast %161 : vector<1x128xf32> to vector<1x1x128xf32>
      %163 = vector.broadcast %162 : vector<1x1x128xf32> to vector<8x16x128xf32>
      %164 = arith.mulf %160, %163 : vector<8x16x128xf32>
      %165 = arith.addf %157, %164 : vector<8x16x128xf32>
      %c1_i32_102 = arith.constant 1 : i32
      %166 = arith.addi %100, %c1_i32_102 : i32
      %167 = arith.index_cast %166 : i32 to index
      %c1_103 = arith.constant 1 : index
      %c0_104 = arith.constant 0 : index
      %168 = vector.load %arg13[%167, %c1_103, %c0_104] : memref<22x22x128xf32, #tpu.memory_space<vmem>>, vector<8x16x128xf32>
      %c8 = arith.constant 8 : index
      %c0_105 = arith.constant 0 : index
      %169 = vector.load %arg2[%c8, %c0_105] : memref<49x128xf32, #tpu.memory_space<vmem>>, vector<1x128xf32>
      %170 = vector.shape_cast %169 : vector<1x128xf32> to vector<1x1x128xf32>
      %171 = vector.broadcast %170 : vector<1x1x128xf32> to vector<8x16x128xf32>
      %172 = arith.mulf %168, %171 : vector<8x16x128xf32>
      %173 = arith.addf %165, %172 : vector<8x16x128xf32>
      %c1_i32_106 = arith.constant 1 : i32
      %174 = arith.addi %100, %c1_i32_106 : i32
      %175 = arith.index_cast %174 : i32 to index
      %c2_107 = arith.constant 2 : index
      %c0_108 = arith.constant 0 : index
      %176 = vector.load %arg13[%175, %c2_107, %c0_108] : memref<22x22x128xf32, #tpu.memory_space<vmem>>, vector<8x16x128xf32>
      %c9 = arith.constant 9 : index
      %c0_109 = arith.constant 0 : index
      %177 = vector.load %arg2[%c9, %c0_109] : memref<49x128xf32, #tpu.memory_space<vmem>>, vector<1x128xf32>
      %178 = vector.shape_cast %177 : vector<1x128xf32> to vector<1x1x128xf32>
      %179 = vector.broadcast %178 : vector<1x1x128xf32> to vector<8x16x128xf32>
      %180 = arith.mulf %176, %179 : vector<8x16x128xf32>
      %181 = arith.addf %173, %180 : vector<8x16x128xf32>
      %c1_i32_110 = arith.constant 1 : i32
      %182 = arith.addi %100, %c1_i32_110 : i32
      %183 = arith.index_cast %182 : i32 to index
      %c3_111 = arith.constant 3 : index
      %c0_112 = arith.constant 0 : index
      %184 = vector.load %arg13[%183, %c3_111, %c0_112] : memref<22x22x128xf32, #tpu.memory_space<vmem>>, vector<8x16x128xf32>
      %c10 = arith.constant 10 : index
      %c0_113 = arith.constant 0 : index
      %185 = vector.load %arg2[%c10, %c0_113] : memref<49x128xf32, #tpu.memory_space<vmem>>, vector<1x128xf32>
      %186 = vector.shape_cast %185 : vector<1x128xf32> to vector<1x1x128xf32>
      %187 = vector.broadcast %186 : vector<1x1x128xf32> to vector<8x16x128xf32>
      %188 = arith.mulf %184, %187 : vector<8x16x128xf32>
      %189 = arith.addf %181, %188 : vector<8x16x128xf32>
      %c1_i32_114 = arith.constant 1 : i32
      %190 = arith.addi %100, %c1_i32_114 : i32
      %191 = arith.index_cast %190 : i32 to index
      %c4_115 = arith.constant 4 : index
      %c0_116 = arith.constant 0 : index
      %192 = vector.load %arg13[%191, %c4_115, %c0_116] : memref<22x22x128xf32, #tpu.memory_space<vmem>>, vector<8x16x128xf32>
      %c11 = arith.constant 11 : index
      %c0_117 = arith.constant 0 : index
      %193 = vector.load %arg2[%c11, %c0_117] : memref<49x128xf32, #tpu.memory_space<vmem>>, vector<1x128xf32>
      %194 = vector.shape_cast %193 : vector<1x128xf32> to vector<1x1x128xf32>
      %195 = vector.broadcast %194 : vector<1x1x128xf32> to vector<8x16x128xf32>
      %196 = arith.mulf %192, %195 : vector<8x16x128xf32>
      %197 = arith.addf %189, %196 : vector<8x16x128xf32>
      %c1_i32_118 = arith.constant 1 : i32
      %198 = arith.addi %100, %c1_i32_118 : i32
      %199 = arith.index_cast %198 : i32 to index
      %c5_119 = arith.constant 5 : index
      %c0_120 = arith.constant 0 : index
      %200 = vector.load %arg13[%199, %c5_119, %c0_120] : memref<22x22x128xf32, #tpu.memory_space<vmem>>, vector<8x16x128xf32>
      %c12 = arith.constant 12 : index
      %c0_121 = arith.constant 0 : index
      %201 = vector.load %arg2[%c12, %c0_121] : memref<49x128xf32, #tpu.memory_space<vmem>>, vector<1x128xf32>
      %202 = vector.shape_cast %201 : vector<1x128xf32> to vector<1x1x128xf32>
      %203 = vector.broadcast %202 : vector<1x1x128xf32> to vector<8x16x128xf32>
      %204 = arith.mulf %200, %203 : vector<8x16x128xf32>
      %205 = arith.addf %197, %204 : vector<8x16x128xf32>
      %c1_i32_122 = arith.constant 1 : i32
      %206 = arith.addi %100, %c1_i32_122 : i32
      %207 = arith.index_cast %206 : i32 to index
      %c6_123 = arith.constant 6 : index
      %c0_124 = arith.constant 0 : index
      %208 = vector.load %arg13[%207, %c6_123, %c0_124] : memref<22x22x128xf32, #tpu.memory_space<vmem>>, vector<8x16x128xf32>
      %c13 = arith.constant 13 : index
      %c0_125 = arith.constant 0 : index
      %209 = vector.load %arg2[%c13, %c0_125] : memref<49x128xf32, #tpu.memory_space<vmem>>, vector<1x128xf32>
      %210 = vector.shape_cast %209 : vector<1x128xf32> to vector<1x1x128xf32>
      %211 = vector.broadcast %210 : vector<1x1x128xf32> to vector<8x16x128xf32>
      %212 = arith.mulf %208, %211 : vector<8x16x128xf32>
      %213 = arith.addf %205, %212 : vector<8x16x128xf32>
      %c2_i32_126 = arith.constant 2 : i32
      %214 = arith.addi %100, %c2_i32_126 : i32
      %215 = arith.index_cast %214 : i32 to index
      %c0_127 = arith.constant 0 : index
      %c0_128 = arith.constant 0 : index
      %216 = vector.load %arg13[%215, %c0_127, %c0_128] : memref<22x22x128xf32, #tpu.memory_space<vmem>>, vector<8x16x128xf32>
      %c14 = arith.constant 14 : index
      %c0_129 = arith.constant 0 : index
      %217 = vector.load %arg2[%c14, %c0_129] : memref<49x128xf32, #tpu.memory_space<vmem>>, vector<1x128xf32>
      %218 = vector.shape_cast %217 : vector<1x128xf32> to vector<1x1x128xf32>
      %219 = vector.broadcast %218 : vector<1x1x128xf32> to vector<8x16x128xf32>
      %220 = arith.mulf %216, %219 : vector<8x16x128xf32>
      %221 = arith.addf %213, %220 : vector<8x16x128xf32>
      %c2_i32_130 = arith.constant 2 : i32
      %222 = arith.addi %100, %c2_i32_130 : i32
      %223 = arith.index_cast %222 : i32 to index
      %c1_131 = arith.constant 1 : index
      %c0_132 = arith.constant 0 : index
      %224 = vector.load %arg13[%223, %c1_131, %c0_132] : memref<22x22x128xf32, #tpu.memory_space<vmem>>, vector<8x16x128xf32>
      %c15 = arith.constant 15 : index
      %c0_133 = arith.constant 0 : index
      %225 = vector.load %arg2[%c15, %c0_133] : memref<49x128xf32, #tpu.memory_space<vmem>>, vector<1x128xf32>
      %226 = vector.shape_cast %225 : vector<1x128xf32> to vector<1x1x128xf32>
      %227 = vector.broadcast %226 : vector<1x1x128xf32> to vector<8x16x128xf32>
      %228 = arith.mulf %224, %227 : vector<8x16x128xf32>
      %229 = arith.addf %221, %228 : vector<8x16x128xf32>
      %c2_i32_134 = arith.constant 2 : i32
      %230 = arith.addi %100, %c2_i32_134 : i32
      %231 = arith.index_cast %230 : i32 to index
      %c2_135 = arith.constant 2 : index
      %c0_136 = arith.constant 0 : index
      %232 = vector.load %arg13[%231, %c2_135, %c0_136] : memref<22x22x128xf32, #tpu.memory_space<vmem>>, vector<8x16x128xf32>
      %c16 = arith.constant 16 : index
      %c0_137 = arith.constant 0 : index
      %233 = vector.load %arg2[%c16, %c0_137] : memref<49x128xf32, #tpu.memory_space<vmem>>, vector<1x128xf32>
      %234 = vector.shape_cast %233 : vector<1x128xf32> to vector<1x1x128xf32>
      %235 = vector.broadcast %234 : vector<1x1x128xf32> to vector<8x16x128xf32>
      %236 = arith.mulf %232, %235 : vector<8x16x128xf32>
      %237 = arith.addf %229, %236 : vector<8x16x128xf32>
      %c2_i32_138 = arith.constant 2 : i32
      %238 = arith.addi %100, %c2_i32_138 : i32
      %239 = arith.index_cast %238 : i32 to index
      %c3_139 = arith.constant 3 : index
      %c0_140 = arith.constant 0 : index
      %240 = vector.load %arg13[%239, %c3_139, %c0_140] : memref<22x22x128xf32, #tpu.memory_space<vmem>>, vector<8x16x128xf32>
      %c17 = arith.constant 17 : index
      %c0_141 = arith.constant 0 : index
      %241 = vector.load %arg2[%c17, %c0_141] : memref<49x128xf32, #tpu.memory_space<vmem>>, vector<1x128xf32>
      %242 = vector.shape_cast %241 : vector<1x128xf32> to vector<1x1x128xf32>
      %243 = vector.broadcast %242 : vector<1x1x128xf32> to vector<8x16x128xf32>
      %244 = arith.mulf %240, %243 : vector<8x16x128xf32>
      %245 = arith.addf %237, %244 : vector<8x16x128xf32>
      %c2_i32_142 = arith.constant 2 : i32
      %246 = arith.addi %100, %c2_i32_142 : i32
      %247 = arith.index_cast %246 : i32 to index
      %c4_143 = arith.constant 4 : index
      %c0_144 = arith.constant 0 : index
      %248 = vector.load %arg13[%247, %c4_143, %c0_144] : memref<22x22x128xf32, #tpu.memory_space<vmem>>, vector<8x16x128xf32>
      %c18 = arith.constant 18 : index
      %c0_145 = arith.constant 0 : index
      %249 = vector.load %arg2[%c18, %c0_145] : memref<49x128xf32, #tpu.memory_space<vmem>>, vector<1x128xf32>
      %250 = vector.shape_cast %249 : vector<1x128xf32> to vector<1x1x128xf32>
      %251 = vector.broadcast %250 : vector<1x1x128xf32> to vector<8x16x128xf32>
      %252 = arith.mulf %248, %251 : vector<8x16x128xf32>
      %253 = arith.addf %245, %252 : vector<8x16x128xf32>
      %c2_i32_146 = arith.constant 2 : i32
      %254 = arith.addi %100, %c2_i32_146 : i32
      %255 = arith.index_cast %254 : i32 to index
      %c5_147 = arith.constant 5 : index
      %c0_148 = arith.constant 0 : index
      %256 = vector.load %arg13[%255, %c5_147, %c0_148] : memref<22x22x128xf32, #tpu.memory_space<vmem>>, vector<8x16x128xf32>
      %c19_149 = arith.constant 19 : index
      %c0_150 = arith.constant 0 : index
      %257 = vector.load %arg2[%c19_149, %c0_150] : memref<49x128xf32, #tpu.memory_space<vmem>>, vector<1x128xf32>
      %258 = vector.shape_cast %257 : vector<1x128xf32> to vector<1x1x128xf32>
      %259 = vector.broadcast %258 : vector<1x1x128xf32> to vector<8x16x128xf32>
      %260 = arith.mulf %256, %259 : vector<8x16x128xf32>
      %261 = arith.addf %253, %260 : vector<8x16x128xf32>
      %c2_i32_151 = arith.constant 2 : i32
      %262 = arith.addi %100, %c2_i32_151 : i32
      %263 = arith.index_cast %262 : i32 to index
      %c6_152 = arith.constant 6 : index
      %c0_153 = arith.constant 0 : index
      %264 = vector.load %arg13[%263, %c6_152, %c0_153] : memref<22x22x128xf32, #tpu.memory_space<vmem>>, vector<8x16x128xf32>
      %c20 = arith.constant 20 : index
      %c0_154 = arith.constant 0 : index
      %265 = vector.load %arg2[%c20, %c0_154] : memref<49x128xf32, #tpu.memory_space<vmem>>, vector<1x128xf32>
      %266 = vector.shape_cast %265 : vector<1x128xf32> to vector<1x1x128xf32>
      %267 = vector.broadcast %266 : vector<1x1x128xf32> to vector<8x16x128xf32>
      %268 = arith.mulf %264, %267 : vector<8x16x128xf32>
      %269 = arith.addf %261, %268 : vector<8x16x128xf32>
      %c3_i32 = arith.constant 3 : i32
      %270 = arith.addi %100, %c3_i32 : i32
      %271 = arith.index_cast %270 : i32 to index
      %c0_155 = arith.constant 0 : index
      %c0_156 = arith.constant 0 : index
      %272 = vector.load %arg13[%271, %c0_155, %c0_156] : memref<22x22x128xf32, #tpu.memory_space<vmem>>, vector<8x16x128xf32>
      %c21 = arith.constant 21 : index
      %c0_157 = arith.constant 0 : index
      %273 = vector.load %arg2[%c21, %c0_157] : memref<49x128xf32, #tpu.memory_space<vmem>>, vector<1x128xf32>
      %274 = vector.shape_cast %273 : vector<1x128xf32> to vector<1x1x128xf32>
      %275 = vector.broadcast %274 : vector<1x1x128xf32> to vector<8x16x128xf32>
      %276 = arith.mulf %272, %275 : vector<8x16x128xf32>
      %277 = arith.addf %269, %276 : vector<8x16x128xf32>
      %c3_i32_158 = arith.constant 3 : i32
      %278 = arith.addi %100, %c3_i32_158 : i32
      %279 = arith.index_cast %278 : i32 to index
      %c1_159 = arith.constant 1 : index
      %c0_160 = arith.constant 0 : index
      %280 = vector.load %arg13[%279, %c1_159, %c0_160] : memref<22x22x128xf32, #tpu.memory_space<vmem>>, vector<8x16x128xf32>
      %c22 = arith.constant 22 : index
      %c0_161 = arith.constant 0 : index
      %281 = vector.load %arg2[%c22, %c0_161] : memref<49x128xf32, #tpu.memory_space<vmem>>, vector<1x128xf32>
      %282 = vector.shape_cast %281 : vector<1x128xf32> to vector<1x1x128xf32>
      %283 = vector.broadcast %282 : vector<1x1x128xf32> to vector<8x16x128xf32>
      %284 = arith.mulf %280, %283 : vector<8x16x128xf32>
      %285 = arith.addf %277, %284 : vector<8x16x128xf32>
      %c3_i32_162 = arith.constant 3 : i32
      %286 = arith.addi %100, %c3_i32_162 : i32
      %287 = arith.index_cast %286 : i32 to index
      %c2_163 = arith.constant 2 : index
      %c0_164 = arith.constant 0 : index
      %288 = vector.load %arg13[%287, %c2_163, %c0_164] : memref<22x22x128xf32, #tpu.memory_space<vmem>>, vector<8x16x128xf32>
      %c23 = arith.constant 23 : index
      %c0_165 = arith.constant 0 : index
      %289 = vector.load %arg2[%c23, %c0_165] : memref<49x128xf32, #tpu.memory_space<vmem>>, vector<1x128xf32>
      %290 = vector.shape_cast %289 : vector<1x128xf32> to vector<1x1x128xf32>
      %291 = vector.broadcast %290 : vector<1x1x128xf32> to vector<8x16x128xf32>
      %292 = arith.mulf %288, %291 : vector<8x16x128xf32>
      %293 = arith.addf %285, %292 : vector<8x16x128xf32>
      %c3_i32_166 = arith.constant 3 : i32
      %294 = arith.addi %100, %c3_i32_166 : i32
      %295 = arith.index_cast %294 : i32 to index
      %c3_167 = arith.constant 3 : index
      %c0_168 = arith.constant 0 : index
      %296 = vector.load %arg13[%295, %c3_167, %c0_168] : memref<22x22x128xf32, #tpu.memory_space<vmem>>, vector<8x16x128xf32>
      %c24 = arith.constant 24 : index
      %c0_169 = arith.constant 0 : index
      %297 = vector.load %arg2[%c24, %c0_169] : memref<49x128xf32, #tpu.memory_space<vmem>>, vector<1x128xf32>
      %298 = vector.shape_cast %297 : vector<1x128xf32> to vector<1x1x128xf32>
      %299 = vector.broadcast %298 : vector<1x1x128xf32> to vector<8x16x128xf32>
      %300 = arith.mulf %296, %299 : vector<8x16x128xf32>
      %301 = arith.addf %293, %300 : vector<8x16x128xf32>
      %c3_i32_170 = arith.constant 3 : i32
      %302 = arith.addi %100, %c3_i32_170 : i32
      %303 = arith.index_cast %302 : i32 to index
      %c4_171 = arith.constant 4 : index
      %c0_172 = arith.constant 0 : index
      %304 = vector.load %arg13[%303, %c4_171, %c0_172] : memref<22x22x128xf32, #tpu.memory_space<vmem>>, vector<8x16x128xf32>
      %c25 = arith.constant 25 : index
      %c0_173 = arith.constant 0 : index
      %305 = vector.load %arg2[%c25, %c0_173] : memref<49x128xf32, #tpu.memory_space<vmem>>, vector<1x128xf32>
      %306 = vector.shape_cast %305 : vector<1x128xf32> to vector<1x1x128xf32>
      %307 = vector.broadcast %306 : vector<1x1x128xf32> to vector<8x16x128xf32>
      %308 = arith.mulf %304, %307 : vector<8x16x128xf32>
      %309 = arith.addf %301, %308 : vector<8x16x128xf32>
      %c3_i32_174 = arith.constant 3 : i32
      %310 = arith.addi %100, %c3_i32_174 : i32
      %311 = arith.index_cast %310 : i32 to index
      %c5_175 = arith.constant 5 : index
      %c0_176 = arith.constant 0 : index
      %312 = vector.load %arg13[%311, %c5_175, %c0_176] : memref<22x22x128xf32, #tpu.memory_space<vmem>>, vector<8x16x128xf32>
      %c26 = arith.constant 26 : index
      %c0_177 = arith.constant 0 : index
      %313 = vector.load %arg2[%c26, %c0_177] : memref<49x128xf32, #tpu.memory_space<vmem>>, vector<1x128xf32>
      %314 = vector.shape_cast %313 : vector<1x128xf32> to vector<1x1x128xf32>
      %315 = vector.broadcast %314 : vector<1x1x128xf32> to vector<8x16x128xf32>
      %316 = arith.mulf %312, %315 : vector<8x16x128xf32>
      %317 = arith.addf %309, %316 : vector<8x16x128xf32>
      %c3_i32_178 = arith.constant 3 : i32
      %318 = arith.addi %100, %c3_i32_178 : i32
      %319 = arith.index_cast %318 : i32 to index
      %c6_179 = arith.constant 6 : index
      %c0_180 = arith.constant 0 : index
      %320 = vector.load %arg13[%319, %c6_179, %c0_180] : memref<22x22x128xf32, #tpu.memory_space<vmem>>, vector<8x16x128xf32>
      %c27 = arith.constant 27 : index
      %c0_181 = arith.constant 0 : index
      %321 = vector.load %arg2[%c27, %c0_181] : memref<49x128xf32, #tpu.memory_space<vmem>>, vector<1x128xf32>
      %322 = vector.shape_cast %321 : vector<1x128xf32> to vector<1x1x128xf32>
      %323 = vector.broadcast %322 : vector<1x1x128xf32> to vector<8x16x128xf32>
      %324 = arith.mulf %320, %323 : vector<8x16x128xf32>
      %325 = arith.addf %317, %324 : vector<8x16x128xf32>
      %c4_i32 = arith.constant 4 : i32
      %326 = arith.addi %100, %c4_i32 : i32
      %327 = arith.index_cast %326 : i32 to index
      %c0_182 = arith.constant 0 : index
      %c0_183 = arith.constant 0 : index
      %328 = vector.load %arg13[%327, %c0_182, %c0_183] : memref<22x22x128xf32, #tpu.memory_space<vmem>>, vector<8x16x128xf32>
      %c28 = arith.constant 28 : index
      %c0_184 = arith.constant 0 : index
      %329 = vector.load %arg2[%c28, %c0_184] : memref<49x128xf32, #tpu.memory_space<vmem>>, vector<1x128xf32>
      %330 = vector.shape_cast %329 : vector<1x128xf32> to vector<1x1x128xf32>
      %331 = vector.broadcast %330 : vector<1x1x128xf32> to vector<8x16x128xf32>
      %332 = arith.mulf %328, %331 : vector<8x16x128xf32>
      %333 = arith.addf %325, %332 : vector<8x16x128xf32>
      %c4_i32_185 = arith.constant 4 : i32
      %334 = arith.addi %100, %c4_i32_185 : i32
      %335 = arith.index_cast %334 : i32 to index
      %c1_186 = arith.constant 1 : index
      %c0_187 = arith.constant 0 : index
      %336 = vector.load %arg13[%335, %c1_186, %c0_187] : memref<22x22x128xf32, #tpu.memory_space<vmem>>, vector<8x16x128xf32>
      %c29 = arith.constant 29 : index
      %c0_188 = arith.constant 0 : index
      %337 = vector.load %arg2[%c29, %c0_188] : memref<49x128xf32, #tpu.memory_space<vmem>>, vector<1x128xf32>
      %338 = vector.shape_cast %337 : vector<1x128xf32> to vector<1x1x128xf32>
      %339 = vector.broadcast %338 : vector<1x1x128xf32> to vector<8x16x128xf32>
      %340 = arith.mulf %336, %339 : vector<8x16x128xf32>
      %341 = arith.addf %333, %340 : vector<8x16x128xf32>
      %c4_i32_189 = arith.constant 4 : i32
      %342 = arith.addi %100, %c4_i32_189 : i32
      %343 = arith.index_cast %342 : i32 to index
      %c2_190 = arith.constant 2 : index
      %c0_191 = arith.constant 0 : index
      %344 = vector.load %arg13[%343, %c2_190, %c0_191] : memref<22x22x128xf32, #tpu.memory_space<vmem>>, vector<8x16x128xf32>
      %c30 = arith.constant 30 : index
      %c0_192 = arith.constant 0 : index
      %345 = vector.load %arg2[%c30, %c0_192] : memref<49x128xf32, #tpu.memory_space<vmem>>, vector<1x128xf32>
      %346 = vector.shape_cast %345 : vector<1x128xf32> to vector<1x1x128xf32>
      %347 = vector.broadcast %346 : vector<1x1x128xf32> to vector<8x16x128xf32>
      %348 = arith.mulf %344, %347 : vector<8x16x128xf32>
      %349 = arith.addf %341, %348 : vector<8x16x128xf32>
      %c4_i32_193 = arith.constant 4 : i32
      %350 = arith.addi %100, %c4_i32_193 : i32
      %351 = arith.index_cast %350 : i32 to index
      %c3_194 = arith.constant 3 : index
      %c0_195 = arith.constant 0 : index
      %352 = vector.load %arg13[%351, %c3_194, %c0_195] : memref<22x22x128xf32, #tpu.memory_space<vmem>>, vector<8x16x128xf32>
      %c31 = arith.constant 31 : index
      %c0_196 = arith.constant 0 : index
      %353 = vector.load %arg2[%c31, %c0_196] : memref<49x128xf32, #tpu.memory_space<vmem>>, vector<1x128xf32>
      %354 = vector.shape_cast %353 : vector<1x128xf32> to vector<1x1x128xf32>
      %355 = vector.broadcast %354 : vector<1x1x128xf32> to vector<8x16x128xf32>
      %356 = arith.mulf %352, %355 : vector<8x16x128xf32>
      %357 = arith.addf %349, %356 : vector<8x16x128xf32>
      %c4_i32_197 = arith.constant 4 : i32
      %358 = arith.addi %100, %c4_i32_197 : i32
      %359 = arith.index_cast %358 : i32 to index
      %c4_198 = arith.constant 4 : index
      %c0_199 = arith.constant 0 : index
      %360 = vector.load %arg13[%359, %c4_198, %c0_199] : memref<22x22x128xf32, #tpu.memory_space<vmem>>, vector<8x16x128xf32>
      %c32 = arith.constant 32 : index
      %c0_200 = arith.constant 0 : index
      %361 = vector.load %arg2[%c32, %c0_200] : memref<49x128xf32, #tpu.memory_space<vmem>>, vector<1x128xf32>
      %362 = vector.shape_cast %361 : vector<1x128xf32> to vector<1x1x128xf32>
      %363 = vector.broadcast %362 : vector<1x1x128xf32> to vector<8x16x128xf32>
      %364 = arith.mulf %360, %363 : vector<8x16x128xf32>
      %365 = arith.addf %357, %364 : vector<8x16x128xf32>
      %c4_i32_201 = arith.constant 4 : i32
      %366 = arith.addi %100, %c4_i32_201 : i32
      %367 = arith.index_cast %366 : i32 to index
      %c5_202 = arith.constant 5 : index
      %c0_203 = arith.constant 0 : index
      %368 = vector.load %arg13[%367, %c5_202, %c0_203] : memref<22x22x128xf32, #tpu.memory_space<vmem>>, vector<8x16x128xf32>
      %c33 = arith.constant 33 : index
      %c0_204 = arith.constant 0 : index
      %369 = vector.load %arg2[%c33, %c0_204] : memref<49x128xf32, #tpu.memory_space<vmem>>, vector<1x128xf32>
      %370 = vector.shape_cast %369 : vector<1x128xf32> to vector<1x1x128xf32>
      %371 = vector.broadcast %370 : vector<1x1x128xf32> to vector<8x16x128xf32>
      %372 = arith.mulf %368, %371 : vector<8x16x128xf32>
      %373 = arith.addf %365, %372 : vector<8x16x128xf32>
      %c4_i32_205 = arith.constant 4 : i32
      %374 = arith.addi %100, %c4_i32_205 : i32
      %375 = arith.index_cast %374 : i32 to index
      %c6_206 = arith.constant 6 : index
      %c0_207 = arith.constant 0 : index
      %376 = vector.load %arg13[%375, %c6_206, %c0_207] : memref<22x22x128xf32, #tpu.memory_space<vmem>>, vector<8x16x128xf32>
      %c34 = arith.constant 34 : index
      %c0_208 = arith.constant 0 : index
      %377 = vector.load %arg2[%c34, %c0_208] : memref<49x128xf32, #tpu.memory_space<vmem>>, vector<1x128xf32>
      %378 = vector.shape_cast %377 : vector<1x128xf32> to vector<1x1x128xf32>
      %379 = vector.broadcast %378 : vector<1x1x128xf32> to vector<8x16x128xf32>
      %380 = arith.mulf %376, %379 : vector<8x16x128xf32>
      %381 = arith.addf %373, %380 : vector<8x16x128xf32>
      %c5_i32 = arith.constant 5 : i32
      %382 = arith.addi %100, %c5_i32 : i32
      %383 = arith.index_cast %382 : i32 to index
      %c0_209 = arith.constant 0 : index
      %c0_210 = arith.constant 0 : index
      %384 = vector.load %arg13[%383, %c0_209, %c0_210] : memref<22x22x128xf32, #tpu.memory_space<vmem>>, vector<8x16x128xf32>
      %c35 = arith.constant 35 : index
      %c0_211 = arith.constant 0 : index
      %385 = vector.load %arg2[%c35, %c0_211] : memref<49x128xf32, #tpu.memory_space<vmem>>, vector<1x128xf32>
      %386 = vector.shape_cast %385 : vector<1x128xf32> to vector<1x1x128xf32>
      %387 = vector.broadcast %386 : vector<1x1x128xf32> to vector<8x16x128xf32>
      %388 = arith.mulf %384, %387 : vector<8x16x128xf32>
      %389 = arith.addf %381, %388 : vector<8x16x128xf32>
      %c5_i32_212 = arith.constant 5 : i32
      %390 = arith.addi %100, %c5_i32_212 : i32
      %391 = arith.index_cast %390 : i32 to index
      %c1_213 = arith.constant 1 : index
      %c0_214 = arith.constant 0 : index
      %392 = vector.load %arg13[%391, %c1_213, %c0_214] : memref<22x22x128xf32, #tpu.memory_space<vmem>>, vector<8x16x128xf32>
      %c36 = arith.constant 36 : index
      %c0_215 = arith.constant 0 : index
      %393 = vector.load %arg2[%c36, %c0_215] : memref<49x128xf32, #tpu.memory_space<vmem>>, vector<1x128xf32>
      %394 = vector.shape_cast %393 : vector<1x128xf32> to vector<1x1x128xf32>
      %395 = vector.broadcast %394 : vector<1x1x128xf32> to vector<8x16x128xf32>
      %396 = arith.mulf %392, %395 : vector<8x16x128xf32>
      %397 = arith.addf %389, %396 : vector<8x16x128xf32>
      %c5_i32_216 = arith.constant 5 : i32
      %398 = arith.addi %100, %c5_i32_216 : i32
      %399 = arith.index_cast %398 : i32 to index
      %c2_217 = arith.constant 2 : index
      %c0_218 = arith.constant 0 : index
      %400 = vector.load %arg13[%399, %c2_217, %c0_218] : memref<22x22x128xf32, #tpu.memory_space<vmem>>, vector<8x16x128xf32>
      %c37 = arith.constant 37 : index
      %c0_219 = arith.constant 0 : index
      %401 = vector.load %arg2[%c37, %c0_219] : memref<49x128xf32, #tpu.memory_space<vmem>>, vector<1x128xf32>
      %402 = vector.shape_cast %401 : vector<1x128xf32> to vector<1x1x128xf32>
      %403 = vector.broadcast %402 : vector<1x1x128xf32> to vector<8x16x128xf32>
      %404 = arith.mulf %400, %403 : vector<8x16x128xf32>
      %405 = arith.addf %397, %404 : vector<8x16x128xf32>
      %c5_i32_220 = arith.constant 5 : i32
      %406 = arith.addi %100, %c5_i32_220 : i32
      %407 = arith.index_cast %406 : i32 to index
      %c3_221 = arith.constant 3 : index
      %c0_222 = arith.constant 0 : index
      %408 = vector.load %arg13[%407, %c3_221, %c0_222] : memref<22x22x128xf32, #tpu.memory_space<vmem>>, vector<8x16x128xf32>
      %c38 = arith.constant 38 : index
      %c0_223 = arith.constant 0 : index
      %409 = vector.load %arg2[%c38, %c0_223] : memref<49x128xf32, #tpu.memory_space<vmem>>, vector<1x128xf32>
      %410 = vector.shape_cast %409 : vector<1x128xf32> to vector<1x1x128xf32>
      %411 = vector.broadcast %410 : vector<1x1x128xf32> to vector<8x16x128xf32>
      %412 = arith.mulf %408, %411 : vector<8x16x128xf32>
      %413 = arith.addf %405, %412 : vector<8x16x128xf32>
      %c5_i32_224 = arith.constant 5 : i32
      %414 = arith.addi %100, %c5_i32_224 : i32
      %415 = arith.index_cast %414 : i32 to index
      %c4_225 = arith.constant 4 : index
      %c0_226 = arith.constant 0 : index
      %416 = vector.load %arg13[%415, %c4_225, %c0_226] : memref<22x22x128xf32, #tpu.memory_space<vmem>>, vector<8x16x128xf32>
      %c39 = arith.constant 39 : index
      %c0_227 = arith.constant 0 : index
      %417 = vector.load %arg2[%c39, %c0_227] : memref<49x128xf32, #tpu.memory_space<vmem>>, vector<1x128xf32>
      %418 = vector.shape_cast %417 : vector<1x128xf32> to vector<1x1x128xf32>
      %419 = vector.broadcast %418 : vector<1x1x128xf32> to vector<8x16x128xf32>
      %420 = arith.mulf %416, %419 : vector<8x16x128xf32>
      %421 = arith.addf %413, %420 : vector<8x16x128xf32>
      %c5_i32_228 = arith.constant 5 : i32
      %422 = arith.addi %100, %c5_i32_228 : i32
      %423 = arith.index_cast %422 : i32 to index
      %c5_229 = arith.constant 5 : index
      %c0_230 = arith.constant 0 : index
      %424 = vector.load %arg13[%423, %c5_229, %c0_230] : memref<22x22x128xf32, #tpu.memory_space<vmem>>, vector<8x16x128xf32>
      %c40 = arith.constant 40 : index
      %c0_231 = arith.constant 0 : index
      %425 = vector.load %arg2[%c40, %c0_231] : memref<49x128xf32, #tpu.memory_space<vmem>>, vector<1x128xf32>
      %426 = vector.shape_cast %425 : vector<1x128xf32> to vector<1x1x128xf32>
      %427 = vector.broadcast %426 : vector<1x1x128xf32> to vector<8x16x128xf32>
      %428 = arith.mulf %424, %427 : vector<8x16x128xf32>
      %429 = arith.addf %421, %428 : vector<8x16x128xf32>
      %c5_i32_232 = arith.constant 5 : i32
      %430 = arith.addi %100, %c5_i32_232 : i32
      %431 = arith.index_cast %430 : i32 to index
      %c6_233 = arith.constant 6 : index
      %c0_234 = arith.constant 0 : index
      %432 = vector.load %arg13[%431, %c6_233, %c0_234] : memref<22x22x128xf32, #tpu.memory_space<vmem>>, vector<8x16x128xf32>
      %c41 = arith.constant 41 : index
      %c0_235 = arith.constant 0 : index
      %433 = vector.load %arg2[%c41, %c0_235] : memref<49x128xf32, #tpu.memory_space<vmem>>, vector<1x128xf32>
      %434 = vector.shape_cast %433 : vector<1x128xf32> to vector<1x1x128xf32>
      %435 = vector.broadcast %434 : vector<1x1x128xf32> to vector<8x16x128xf32>
      %436 = arith.mulf %432, %435 : vector<8x16x128xf32>
      %437 = arith.addf %429, %436 : vector<8x16x128xf32>
      %c6_i32 = arith.constant 6 : i32
      %438 = arith.addi %100, %c6_i32 : i32
      %439 = arith.index_cast %438 : i32 to index
      %c0_236 = arith.constant 0 : index
      %c0_237 = arith.constant 0 : index
      %440 = vector.load %arg13[%439, %c0_236, %c0_237] : memref<22x22x128xf32, #tpu.memory_space<vmem>>, vector<8x16x128xf32>
      %c42 = arith.constant 42 : index
      %c0_238 = arith.constant 0 : index
      %441 = vector.load %arg2[%c42, %c0_238] : memref<49x128xf32, #tpu.memory_space<vmem>>, vector<1x128xf32>
      %442 = vector.shape_cast %441 : vector<1x128xf32> to vector<1x1x128xf32>
      %443 = vector.broadcast %442 : vector<1x1x128xf32> to vector<8x16x128xf32>
      %444 = arith.mulf %440, %443 : vector<8x16x128xf32>
      %445 = arith.addf %437, %444 : vector<8x16x128xf32>
      %c6_i32_239 = arith.constant 6 : i32
      %446 = arith.addi %100, %c6_i32_239 : i32
      %447 = arith.index_cast %446 : i32 to index
      %c1_240 = arith.constant 1 : index
      %c0_241 = arith.constant 0 : index
      %448 = vector.load %arg13[%447, %c1_240, %c0_241] : memref<22x22x128xf32, #tpu.memory_space<vmem>>, vector<8x16x128xf32>
      %c43 = arith.constant 43 : index
      %c0_242 = arith.constant 0 : index
      %449 = vector.load %arg2[%c43, %c0_242] : memref<49x128xf32, #tpu.memory_space<vmem>>, vector<1x128xf32>
      %450 = vector.shape_cast %449 : vector<1x128xf32> to vector<1x1x128xf32>
      %451 = vector.broadcast %450 : vector<1x1x128xf32> to vector<8x16x128xf32>
      %452 = arith.mulf %448, %451 : vector<8x16x128xf32>
      %453 = arith.addf %445, %452 : vector<8x16x128xf32>
      %c6_i32_243 = arith.constant 6 : i32
      %454 = arith.addi %100, %c6_i32_243 : i32
      %455 = arith.index_cast %454 : i32 to index
      %c2_244 = arith.constant 2 : index
      %c0_245 = arith.constant 0 : index
      %456 = vector.load %arg13[%455, %c2_244, %c0_245] : memref<22x22x128xf32, #tpu.memory_space<vmem>>, vector<8x16x128xf32>
      %c44 = arith.constant 44 : index
      %c0_246 = arith.constant 0 : index
      %457 = vector.load %arg2[%c44, %c0_246] : memref<49x128xf32, #tpu.memory_space<vmem>>, vector<1x128xf32>
      %458 = vector.shape_cast %457 : vector<1x128xf32> to vector<1x1x128xf32>
      %459 = vector.broadcast %458 : vector<1x1x128xf32> to vector<8x16x128xf32>
      %460 = arith.mulf %456, %459 : vector<8x16x128xf32>
      %461 = arith.addf %453, %460 : vector<8x16x128xf32>
      %c6_i32_247 = arith.constant 6 : i32
      %462 = arith.addi %100, %c6_i32_247 : i32
      %463 = arith.index_cast %462 : i32 to index
      %c3_248 = arith.constant 3 : index
      %c0_249 = arith.constant 0 : index
      %464 = vector.load %arg13[%463, %c3_248, %c0_249] : memref<22x22x128xf32, #tpu.memory_space<vmem>>, vector<8x16x128xf32>
      %c45 = arith.constant 45 : index
      %c0_250 = arith.constant 0 : index
      %465 = vector.load %arg2[%c45, %c0_250] : memref<49x128xf32, #tpu.memory_space<vmem>>, vector<1x128xf32>
      %466 = vector.shape_cast %465 : vector<1x128xf32> to vector<1x1x128xf32>
      %467 = vector.broadcast %466 : vector<1x1x128xf32> to vector<8x16x128xf32>
      %468 = arith.mulf %464, %467 : vector<8x16x128xf32>
      %469 = arith.addf %461, %468 : vector<8x16x128xf32>
      %c6_i32_251 = arith.constant 6 : i32
      %470 = arith.addi %100, %c6_i32_251 : i32
      %471 = arith.index_cast %470 : i32 to index
      %c4_252 = arith.constant 4 : index
      %c0_253 = arith.constant 0 : index
      %472 = vector.load %arg13[%471, %c4_252, %c0_253] : memref<22x22x128xf32, #tpu.memory_space<vmem>>, vector<8x16x128xf32>
      %c46 = arith.constant 46 : index
      %c0_254 = arith.constant 0 : index
      %473 = vector.load %arg2[%c46, %c0_254] : memref<49x128xf32, #tpu.memory_space<vmem>>, vector<1x128xf32>
      %474 = vector.shape_cast %473 : vector<1x128xf32> to vector<1x1x128xf32>
      %475 = vector.broadcast %474 : vector<1x1x128xf32> to vector<8x16x128xf32>
      %476 = arith.mulf %472, %475 : vector<8x16x128xf32>
      %477 = arith.addf %469, %476 : vector<8x16x128xf32>
      %c6_i32_255 = arith.constant 6 : i32
      %478 = arith.addi %100, %c6_i32_255 : i32
      %479 = arith.index_cast %478 : i32 to index
      %c5_256 = arith.constant 5 : index
      %c0_257 = arith.constant 0 : index
      %480 = vector.load %arg13[%479, %c5_256, %c0_257] : memref<22x22x128xf32, #tpu.memory_space<vmem>>, vector<8x16x128xf32>
      %c47 = arith.constant 47 : index
      %c0_258 = arith.constant 0 : index
      %481 = vector.load %arg2[%c47, %c0_258] : memref<49x128xf32, #tpu.memory_space<vmem>>, vector<1x128xf32>
      %482 = vector.shape_cast %481 : vector<1x128xf32> to vector<1x1x128xf32>
      %483 = vector.broadcast %482 : vector<1x1x128xf32> to vector<8x16x128xf32>
      %484 = arith.mulf %480, %483 : vector<8x16x128xf32>
      %485 = arith.addf %477, %484 : vector<8x16x128xf32>
      %c6_i32_259 = arith.constant 6 : i32
      %486 = arith.addi %100, %c6_i32_259 : i32
      %487 = arith.index_cast %486 : i32 to index
      %c6_260 = arith.constant 6 : index
      %c0_261 = arith.constant 0 : index
      %488 = vector.load %arg13[%487, %c6_260, %c0_261] : memref<22x22x128xf32, #tpu.memory_space<vmem>>, vector<8x16x128xf32>
      %c48 = arith.constant 48 : index
      %c0_262 = arith.constant 0 : index
      %489 = vector.load %arg2[%c48, %c0_262] : memref<49x128xf32, #tpu.memory_space<vmem>>, vector<1x128xf32>
      %490 = vector.shape_cast %489 : vector<1x128xf32> to vector<1x1x128xf32>
      %491 = vector.broadcast %490 : vector<1x1x128xf32> to vector<8x16x128xf32>
      %492 = arith.mulf %488, %491 : vector<8x16x128xf32>
      %493 = arith.addf %485, %492 : vector<8x16x128xf32>
      %494 = arith.index_cast %100 : i32 to index
      %c0_263 = arith.constant 0 : index
      %c0_264 = arith.constant 0 : index
      %495 = vector.load %arg14[%494, %c0_263, %c0_264] : memref<16x16x128xf32, #tpu.memory_space<vmem>>, vector<8x16x128xf32>
      tpu.vector_store %arg14[%494, %c0_263, %c0_264], %493 {strides = array<i32>} : memref<16x16x128xf32, #tpu.memory_space<vmem>>, vector<8x16x128xf32>,
    }
    %c2_i32_21 = arith.constant 2 : i32
    %c0_22 = arith.constant 0 : index
    %c0_23 = arith.constant 0 : index
    %13 = vector.load %arg4[%c0_22, %c0_23] : memref<1x128xf32, #tpu.memory_space<vmem>>, vector<1x128xf32>
    %c0_24 = arith.constant 0 : index
    %c0_25 = arith.constant 0 : index
    %14 = vector.load %arg5[%c0_24, %c0_25] : memref<1x128xf32, #tpu.memory_space<vmem>>, vector<1x128xf32>
    %c0_26 = arith.constant 0 : index
    %c0_27 = arith.constant 0 : index
    %15 = vector.load %arg7[%c0_26, %c0_27] : memref<1x128xf32, #tpu.memory_space<vmem>>, vector<1x128xf32>
    %cst_28 = arith.constant 0.000000e+00 : f32
    %16 = vector.broadcast %cst_28 : f32 to vector<1x128xf32>
    %c0_i32_29 = arith.constant 0 : i32
    %c16_i32 = arith.constant 16 : i32
    %17 = arith.muli %c0_i32_29, %c16_i32 : i32
    %18 = arith.index_cast %17 : i32 to index
    %c0_30 = arith.constant 0 : index
    %c0_31 = arith.constant 0 : index
    %19 = vector.load %arg14[%18, %c0_30, %c0_31] : memref<16x16x128xf32, #tpu.memory_space<vmem>>, vector<16x16x128xf32>
    %20 = vector.shape_cast %19 : vector<16x16x128xf32> to vector<256x128xf32>
    %cst_32 = arith.constant dense<0.000000e+00> : vector<256xf32>
    %21 = vector.multi_reduction <add>, %20, %cst_32 [1] : vector<256x128xf32> to vector<256xf32>
    %22 = vector.shape_cast %21 : vector<256xf32> to vector<256x1xf32>
    %cst_33 = arith.constant 2.500000e-01 : f32
    %23 = vector.broadcast %cst_33 : f32 to vector<256x1xf32>
    %24 = arith.mulf %22, %23 : vector<256x1xf32>
    %25 = arith.mulf %20, %20 : vector<256x128xf32>
    %cst_34 = arith.constant dense<0.000000e+00> : vector<256xf32>
    %26 = vector.multi_reduction <add>, %25, %cst_34 [1] : vector<256x128xf32> to vector<256xf32>
    %27 = vector.shape_cast %26 : vector<256xf32> to vector<256x1xf32>
    %cst_35 = arith.constant 2.500000e-01 : f32
    %28 = vector.broadcast %cst_35 : f32 to vector<256x1xf32>
    %29 = arith.mulf %27, %28 : vector<256x1xf32>
    %30 = arith.mulf %24, %24 : vector<256x1xf32>
    %31 = arith.subf %29, %30 : vector<256x1xf32>
    %32 = vector.broadcast %24 : vector<256x1xf32> to vector<256x128xf32>
    %33 = arith.subf %20, %32 : vector<256x128xf32>
    %cst_36 = arith.constant 9.99999997E-7 : f32
    %34 = vector.broadcast %cst_36 : f32 to vector<256x1xf32>
    %35 = arith.addf %31, %34 : vector<256x1xf32>
    %36 = math.rsqrt %35 : vector<256x1xf32>
    %37 = vector.broadcast %36 : vector<256x1xf32> to vector<256x128xf32>
    %38 = arith.mulf %33, %37 : vector<256x128xf32>
    %39 = vector.broadcast %13 : vector<1x128xf32> to vector<256x128xf32>
    %40 = arith.mulf %38, %39 : vector<256x128xf32>
    %41 = vector.broadcast %14 : vector<1x128xf32> to vector<256x128xf32>
    %42 = arith.addf %40, %41 : vector<256x128xf32>
    %c0_37 = arith.constant 0 : index
    %c0_38 = arith.constant 0 : index
    %43 = vector.load %arg6[%c0_37, %c0_38] : memref<128x128xf32, #tpu.memory_space<vmem>>, vector<128x128xf32>
    %cst_39 = arith.constant dense<0.000000e+00> : vector<256x128xf32>
    %44 = tpu.matmul %42, %43, %cst_39 {dimension_numbers = #tpu.dot_dimension_numbers<[1], [0], [0], [1], [0, 0, 1, 1], [], []>} : vector<256x128xf32>, vector<128x128xf32>, vector<256x128xf32> -> vector<256x128xf32>
    %45 = vector.broadcast %15 : vector<1x128xf32> to vector<256x128xf32>
    %46 = arith.addf %44, %45 : vector<256x128xf32>
    %cst_40 = arith.constant 5.000000e-01 : f32
    %47 = vector.broadcast %cst_40 : f32 to vector<256x128xf32>
    %48 = arith.mulf %47, %46 : vector<256x128xf32>
    %cst_41 = arith.constant 0.707106769 : f32
    %49 = vector.broadcast %cst_41 : f32 to vector<256x128xf32>
    %50 = arith.mulf %46, %49 : vector<256x128xf32>
    %51 = math.erf %50 : vector<256x128xf32>
    %cst_42 = arith.constant 1.000000e+00 : f32
    %52 = vector.broadcast %cst_42 : f32 to vector<256x128xf32>
    %53 = arith.addf %52, %51 : vector<256x128xf32>
    %54 = arith.mulf %48, %53 : vector<256x128xf32>
    %c256_i32 = arith.constant 256 : i32
    %55 = arith.muli %c0_i32_29, %c256_i32 : i32
    %56 = tpu.assume_multiple %55, 8 : i32
    %57 = arith.index_cast %56 : i32 to index
    %c0_43 = arith.constant 0 : index
    %58 = vector.load %arg15[%57, %c0_43] : memref<256x128xf32, #tpu.memory_space<vmem>>, vector<256x128xf32>
    tpu.vector_store %arg15[%57, %c0_43], %54 {strides = array<i32>} : memref<256x128xf32, #tpu.memory_space<vmem>>, vector<256x128xf32>,
    %59 = arith.mulf %54, %54 : vector<256x128xf32>
    %cst_44 = arith.constant dense<0.000000e+00> : vector<128xf32>
    %60 = vector.multi_reduction <add>, %59, %cst_44 [0] : vector<256x128xf32> to vector<128xf32>
    %61 = vector.shape_cast %60 : vector<128xf32> to vector<1x128xf32>
    %62 = arith.addf %16, %61 : vector<1x128xf32>
    %c1_i32_45 = arith.constant 1 : i32
    %63 = math.sqrt %62 : vector<1x128xf32>
    %cst_46 = arith.constant dense<0.000000e+00> : vector<1xf32>
    %64 = vector.multi_reduction <add>, %63, %cst_46 [1] : vector<1x128xf32> to vector<1xf32>
    %65 = vector.shape_cast %64 : vector<1xf32> to vector<1x1xf32>
    %cst_47 = arith.constant 6.250000e-02 : f32
    %66 = vector.broadcast %cst_47 : f32 to vector<1x1xf32>
    %67 = arith.mulf %65, %66 : vector<1x1xf32>
    %cst_48 = arith.constant 9.99999997E-7 : f32
    %68 = vector.broadcast %cst_48 : f32 to vector<1x1xf32>
    %69 = arith.addf %67, %68 : vector<1x1xf32>
    %70 = vector.broadcast %69 : vector<1x1xf32> to vector<1x128xf32>
    %71 = arith.divf %63, %70 : vector<1x128xf32>
    %c0_49 = arith.constant 0 : index
    %c0_50 = arith.constant 0 : index
    %72 = vector.load %arg8[%c0_49, %c0_50] : memref<1x128xf32, #tpu.memory_space<vmem>>, vector<1x128xf32>
    %c0_51 = arith.constant 0 : index
    %c0_52 = arith.constant 0 : index
    %73 = vector.load %arg9[%c0_51, %c0_52] : memref<1x128xf32, #tpu.memory_space<vmem>>, vector<1x128xf32>
    %c0_53 = arith.constant 0 : index
    %c0_54 = arith.constant 0 : index
    %74 = vector.load %arg11[%c0_53, %c0_54] : memref<1x128xf32, #tpu.memory_space<vmem>>, vector<1x128xf32>
    %c0_i32_55 = arith.constant 0 : i32
    %c16_i32_56 = arith.constant 16 : i32
    %75 = arith.muli %c0_i32_55, %c16_i32_56 : i32
    %c256_i32_57 = arith.constant 256 : i32
    %76 = arith.muli %c0_i32_55, %c256_i32_57 : i32
    %77 = tpu.assume_multiple %76, 8 : i32
    %78 = arith.index_cast %77 : i32 to index
    %c0_58 = arith.constant 0 : index
    %79 = vector.load %arg15[%78, %c0_58] : memref<256x128xf32, #tpu.memory_space<vmem>>, vector<256x128xf32>
    %80 = vector.broadcast %71 : vector<1x128xf32> to vector<256x128xf32>
    %81 = arith.mulf %79, %80 : vector<256x128xf32>
    %82 = vector.broadcast %72 : vector<1x128xf32> to vector<256x128xf32>
    %83 = arith.mulf %82, %81 : vector<256x128xf32>
    %84 = vector.broadcast %73 : vector<1x128xf32> to vector<256x128xf32>
    %85 = arith.addf %83, %84 : vector<256x128xf32>
    %86 = arith.addf %85, %79 : vector<256x128xf32>
    %c0_59 = arith.constant 0 : index
    %c0_60 = arith.constant 0 : index
    %87 = vector.load %arg10[%c0_59, %c0_60] : memref<128x128xf32, #tpu.memory_space<vmem>>, vector<128x128xf32>
    %cst_61 = arith.constant dense<0.000000e+00> : vector<256x128xf32>
    %88 = tpu.matmul %86, %87, %cst_61 {dimension_numbers = #tpu.dot_dimension_numbers<[1], [0], [0], [1], [0, 0, 1, 1], [], []>} : vector<256x128xf32>, vector<128x128xf32>, vector<256x128xf32> -> vector<256x128xf32>
    %89 = vector.broadcast %74 : vector<1x128xf32> to vector<256x128xf32>
    %90 = arith.addf %88, %89 : vector<256x128xf32>
    %c0_62 = arith.constant 0 : index
    %91 = arith.index_cast %75 : i32 to index
    %c0_63 = arith.constant 0 : index
    %c0_64 = arith.constant 0 : index
    %92 = vector.load %arg1[%c0_62, %91, %c0_63, %c0_64] : memref<1x16x16x128xf32, #tpu.memory_space<vmem>>, vector<1x16x16x128xf32>
    %93 = vector.shape_cast %92 : vector<1x16x16x128xf32> to vector<16x16x128xf32>
    %94 = vector.shape_cast %90 : vector<256x128xf32> to vector<16x16x128xf32>
    %95 = arith.addf %93, %94 : vector<16x16x128xf32>
    %c0_65 = arith.constant 0 : index
    %96 = arith.index_cast %75 : i32 to index
    %c0_66 = arith.constant 0 : index
    %c0_67 = arith.constant 0 : index
    %97 = vector.load %arg12[%c0_65, %96, %c0_66, %c0_67] : memref<1x16x16x128xf32, #tpu.memory_space<vmem>>, vector<1x16x16x128xf32>
    %98 = vector.shape_cast %97 : vector<1x16x16x128xf32> to vector<16x16x128xf32>
    %99 = vector.shape_cast %95 : vector<16x16x128xf32> to vector<1x16x16x128xf32>
    tpu.vector_store %arg12[%c0_65, %96, %c0_66, %c0_67], %99 {strides = array<i32>} : memref<1x16x16x128xf32, #tpu.memory_space<vmem>>, vector<1x16x16x128xf32>,
    %c1_i32_68 = arith.constant 1 : i32
    return
  }
  func.func @transform_0(%arg0: i32) -> (i32, i32, i32, i32) {
    %c0_i32 = arith.constant 0 : i32
    %c0_i32_0 = arith.constant 0 : i32
    %c0_i32_1 = arith.constant 0 : i32
    %c0_i32_2 = arith.constant 0 : i32
    return %arg0, %c0_i32, %c0_i32_0, %c0_i32_1 : i32, i32, i32, i32
  }
  func.func @transform_1(%arg0: i32) -> (i32, i32) {
    %c0_i32 = arith.constant 0 : i32
    %c0_i32_0 = arith.constant 0 : i32
    %c0_i32_1 = arith.constant 0 : i32
    return %c0_i32, %c0_i32_0 : i32, i32
  }
  func.func @transform_2(%arg0: i32) -> (i32, i32) {
    %c0_i32 = arith.constant 0 : i32
    %c0_i32_0 = arith.constant 0 : i32
    %c0_i32_1 = arith.constant 0 : i32
    return %c0_i32, %c0_i32_0 : i32, i32
  }
  func.func @transform_3(%arg0: i32) -> (i32, i32) {
    %c0_i32 = arith.constant 0 : i32
    %c0_i32_0 = arith.constant 0 : i32
    %c0_i32_1 = arith.constant 0 : i32
    return %c0_i32, %c0_i32_0 : i32, i32
  }
  func.func @transform_4(%arg0: i32) -> (i32, i32) {
    %c0_i32 = arith.constant 0 : i32
    %c0_i32_0 = arith.constant 0 : i32
    %c0_i32_1 = arith.constant 0 : i32
    return %c0_i32, %c0_i32_0 : i32, i32
  }
  func.func @transform_5(%arg0: i32) -> (i32, i32) {
    %c0_i32 = arith.constant 0 : i32
    %c0_i32_0 = arith.constant 0 : i32
    %c0_i32_1 = arith.constant 0 : i32
    return %c0_i32, %c0_i32_0 : i32, i32
  }
  func.func @transform_6(%arg0: i32) -> (i32, i32) {
    %c0_i32 = arith.constant 0 : i32
    %c0_i32_0 = arith.constant 0 : i32
    %c0_i32_1 = arith.constant 0 : i32
    return %c0_i32, %c0_i32_0 : i32, i32
  }
  func.func @transform_7(%arg0: i32) -> (i32, i32) {
    %c0_i32 = arith.constant 0 : i32
    %c0_i32_0 = arith.constant 0 : i32
    %c0_i32_1 = arith.constant 0 : i32
    return %c0_i32, %c0_i32_0 : i32, i32
  }
  func.func @transform_8(%arg0: i32) -> (i32, i32) {
    %c0_i32 = arith.constant 0 : i32
    %c0_i32_0 = arith.constant 0 : i32
    %c0_i32_1 = arith.constant 0 : i32
    return %c0_i32, %c0_i32_0 : i32, i32
  }
  func.func @transform_9(%arg0: i32) -> (i32, i32) {
    %c0_i32 = arith.constant 0 : i32
    %c0_i32_0 = arith.constant 0 : i32
    %c0_i32_1 = arith.constant 0 : i32
    return %c0_i32, %c0_i32_0 : i32, i32
  }
  func.func @transform_10(%arg0: i32) -> (i32, i32) {
    %c0_i32 = arith.constant 0 : i32
    %c0_i32_0 = arith.constant 0 : i32
    %c0_i32_1 = arith.constant 0 : i32
    return %c0_i32, %c0_i32_0 : i32, i32
  }
  func.func @transform_11(%arg0: i32) -> (i32, i32, i32, i32) {
    %c0_i32 = arith.constant 0 : i32
    %c0_i32_0 = arith.constant 0 : i32
    %c0_i32_1 = arith.constant 0 : i32
    %c0_i32_2 = arith.constant 0 : i32
    return %arg0, %c0_i32, %c0_i32_0, %c0_i32_1 : i32, i32, i32, i32
  }
}

</mosaic_0001>

<llo_original>
// kernel: convnext_block.1
$region0: #{convnext_block.1}
  #allocation0 [shape = 'u32[]', space=smem, size = 0x4, offset = 0x4, fixed_abs, tag = 'smem constant byte address 0x4 - core index']
  #allocation1 [shape = 'u32[144,128]{1,0:T(1,128)}', space=vmem, size = 0x12000, scoped, tag = 'internal scratch']
  #allocation2 [shape = 'f32[22,22,128]{2,1,0:T(8,128)}', space=vmem, size = 0x42000, scoped, tag = 'scratch operand']
  #allocation3 [shape = 'f32[16,16,128]{2,1,0:T(8,128)}', space=vmem, size = 0x20000, scoped, tag = 'scratch operand']
  #allocation4 [shape = 'f32[256,128]{1,0:T(8,128)}', space=vmem, size = 0x20000, scoped, tag = 'scratch operand']
  %s0 = inlined_call_operand.vmem [shape: f32[2,16,16,128], index: 0, kind: input, shape index: {}]
  %s1 = inlined_call_operand.vmem [shape: f32[49,128], index: 1, kind: input, shape index: {}]
  %s2 = inlined_call_operand.vmem [shape: f32[1,128], index: 2, kind: input, shape index: {}]
  %s3 = inlined_call_operand.vmem [shape: f32[1,128], index: 3, kind: input, shape index: {}]
  %s4 = inlined_call_operand.vmem [shape: f32[1,128], index: 4, kind: input, shape index: {}]
  %s5 = inlined_call_operand.vmem [shape: f32[128,128], index: 5, kind: input, shape index: {}]
  %s6 = inlined_call_operand.vmem [shape: f32[1,128], index: 6, kind: input, shape index: {}]
  %s7 = inlined_call_operand.vmem [shape: f32[1,128], index: 7, kind: input, shape index: {}]
  %s8 = inlined_call_operand.vmem [shape: f32[1,128], index: 8, kind: input, shape index: {}]
  %s9 = inlined_call_operand.vmem [shape: f32[128,128], index: 9, kind: input, shape index: {}]
  %s10 = inlined_call_operand.vmem [shape: f32[1,128], index: 10, kind: input, shape index: {}]
  %s11 = inlined_call_operand.vmem [shape: f32[2,16,16,128], index: 11, kind: output, shape index: {}]
  %s12 = sld [smem:[#allocation0]]
  $region84: #{convnext_block.1} parent=0
    _
  %s14 = ssub.s32 1, %s12
  %s15 = scalar_select 0, %s14, %s12
  loop: start=0, step=1, limit=4
  $region2: #{convnext_block.1} parent=0 // loop_pre_header
    _
  $region3: #{convnext_block.1} parent=0 // loop_header
    %s17 = sphi 0, %s21
    %p18 = scmp.ge.s32.totalorder %s17, 4
    %s27 = sphi 0, %s29
    %s30 = sphi 0, %s27
    %s31 = sphi 0, %s30
    %s47 = sphi 0, %s31
    %s51 = sphi 0, %s51
    %s53 = sphi 0, %s51
    %s54 = sphi 0, %s53
    %s68 = sphi 0, %s54
    %s72 = sphi 0, %s72
    %s74 = sphi 0, %s72
    %s75 = sphi 0, %s74
    %s89 = sphi 0, %s75
    %s93 = sphi 0, %s93
    %s95 = sphi 0, %s93
    %s96 = sphi 0, %s95
    %s110 = sphi 0, %s96
    %s114 = sphi 0, %s114
    %s116 = sphi 0, %s114
    %s117 = sphi 0, %s116
    %s131 = sphi 0, %s117
    %s135 = sphi 0, %s135
    %s137 = sphi 0, %s135
    %s138 = sphi 0, %s137
    %s152 = sphi 0, %s138
    %s156 = sphi 0, %s156
    %s158 = sphi 0, %s156
    %s159 = sphi 0, %s158
    %s173 = sphi 0, %s159
    %s177 = sphi 0, %s177
    %s179 = sphi 0, %s177
    %s180 = sphi 0, %s179
    %s194 = sphi 0, %s180
    %s198 = sphi 0, %s198
    %s200 = sphi 0, %s198
    %s201 = sphi 0, %s200
    %s215 = sphi 0, %s201
    %s219 = sphi 0, %s219
    %s221 = sphi 0, %s219
    %s222 = sphi 0, %s221
    %s236 = sphi 0, %s222
    %s240 = sphi 0, %s240
    %s242 = sphi 0, %s240
    %s243 = sphi 0, %s242
    %s257 = sphi 0, %s243
    %s263 = sphi 0, %s265
    %s266 = sphi 0, %s263
    %s267 = sphi 0, %s266
    %s283 = sphi 0, %s267
  $region4: #{convnext_block.1} parent=0 // loop_header_branch
    %20 = sbr.rel (%p18) target = $region8
  $region5: #{convnext_block.1} parent=0 // loop_body
    %s22 = ssub.s32 %s17, 1
    %s23 = ssub.s32 %s17, 2
    %s24 = sadd.s32 %s17, 1
    %s25 = ssub.s32 %s17, %s24
    %p26 = scmp.eq.s32.totalorder %s25, 0
    %s28 = sadd.s32 %s27, 1
    %s29 = scalar_select %p26, %s27, %s28
    %p32 = pneg %p26
    %p33 = scmp.eq.s32.totalorder %s17, 1
    %p34 = por %p32, %p33
    %p35 = scmp.ne.s32.totalorder %s27, %s30
    %p36 = scmp.eq.s32.totalorder %s17, 0
    %p37 = por %p35, %p36
    %p38 = scmp.ne.s32.totalorder %s27, %s30
    %p39 = scmp.eq.s32.totalorder %s22, 1
    %p40 = por %p38, %p39
    %p41 = scmp.ne.s32.totalorder %s30, %s31
    %p42 = scmp.eq.s32.totalorder %s22, 0
    %p43 = por %p41, %p42
    %p44 = scmp.ne.s32.totalorder %s30, %s31
    %p45 = scmp.eq.s32.totalorder %s23, 1
    %p46 = por %p44, %p45
    %p48 = scmp.ne.s32.totalorder %s31, %s47
    %p49 = scmp.eq.s32.totalorder %s23, 0
    %p50 = por %p48, %p49
    %s52 = sadd.s32 %s51, 1
    %p55 = scmp.eq.s32.totalorder %s17, 1
    %p56 = scmp.ne.s32.totalorder %s51, %s53
    %p57 = scmp.eq.s32.totalorder %s17, 0
    %p58 = por %p56, %p57
    %p59 = scmp.ne.s32.totalorder %s51, %s53
    %p60 = scmp.eq.s32.totalorder %s22, 1
    %p61 = por %p59, %p60
    %p62 = scmp.ne.s32.totalorder %s53, %s54
    %p63 = scmp.eq.s32.totalorder %s22, 0
    %p64 = por %p62, %p63
    %p65 = scmp.ne.s32.totalorder %s53, %s54
    %p66 = scmp.eq.s32.totalorder %s23, 1
    %p67 = por %p65, %p66
    %p69 = scmp.ne.s32.totalorder %s54, %s68
    %p70 = scmp.eq.s32.totalorder %s23, 0
    %p71 = por %p69, %p70
    %s73 = sadd.s32 %s72, 1
    %p76 = scmp.eq.s32.totalorder %s17, 1
    %p77 = scmp.ne.s32.totalorder %s72, %s74
    %p78 = scmp.eq.s32.totalorder %s17, 0
    %p79 = por %p77, %p78
    %p80 = scmp.ne.s32.totalorder %s72, %s74
    %p81 = scmp.eq.s32.totalorder %s22, 1
    %p82 = por %p80, %p81
    %p83 = scmp.ne.s32.totalorder %s74, %s75
    %p84 = scmp.eq.s32.totalorder %s22, 0
    %p85 = por %p83, %p84
    %p86 = scmp.ne.s32.totalorder %s74, %s75
    %p87 = scmp.eq.s32.totalorder %s23, 1
    %p88 = por %p86, %p87
    %p90 = scmp.ne.s32.totalorder %s75, %s89
    %p91 = scmp.eq.s32.totalorder %s23, 0
    %p92 = por %p90, %p91
    %s94 = sadd.s32 %s93, 1
    %p97 = scmp.eq.s32.totalorder %s17, 1
    %p98 = scmp.ne.s32.totalorder %s93, %s95
    %p99 = scmp.eq.s32.totalorder %s17, 0
    %p100 = por %p98, %p99
    %p101 = scmp.ne.s32.totalorder %s93, %s95
    %p102 = scmp.eq.s32.totalorder %s22, 1
    %p103 = por %p101, %p102
    %p104 = scmp.ne.s32.totalorder %s95, %s96
    %p105 = scmp.eq.s32.totalorder %s22, 0
    %p106 = por %p104, %p105
    %p107 = scmp.ne.s32.totalorder %s95, %s96
    %p108 = scmp.eq.s32.totalorder %s23, 1
    %p109 = por %p107, %p108
    %p111 = scmp.ne.s32.totalorder %s96, %s110
    %p112 = scmp.eq.s32.totalorder %s23, 0
    %p113 = por %p111, %p112
    %s115 = sadd.s32 %s114, 1
    %p118 = scmp.eq.s32.totalorder %s17, 1
    %p119 = scmp.ne.s32.totalorder %s114, %s116
    %p120 = scmp.eq.s32.totalorder %s17, 0
    %p121 = por %p119, %p120
    %p122 = scmp.ne.s32.totalorder %s114, %s116
    %p123 = scmp.eq.s32.totalorder %s22, 1
    %p124 = por %p122, %p123
    %p125 = scmp.ne.s32.totalorder %s116, %s117
    %p126 = scmp.eq.s32.totalorder %s22, 0
    %p127 = por %p125, %p126
    %p128 = scmp.ne.s32.totalorder %s116, %s117
    %p129 = scmp.eq.s32.totalorder %s23, 1
    %p130 = por %p128, %p129
    %p132 = scmp.ne.s32.totalorder %s117, %s131
    %p133 = scmp.eq.s32.totalorder %s23, 0
    %p134 = por %p132, %p133
    %s136 = sadd.s32 %s135, 1
    %p139 = scmp.eq.s32.totalorder %s17, 1
    %p140 = scmp.ne.s32.totalorder %s135, %s137
    %p141 = scmp.eq.s32.totalorder %s17, 0
    %p142 = por %p140, %p141
    %p143 = scmp.ne.s32.totalorder %s135, %s137
    %p144 = scmp.eq.s32.totalorder %s22, 1
    %p145 = por %p143, %p144
    %p146 = scmp.ne.s32.totalorder %s137, %s138
    %p147 = scmp.eq.s32.totalorder %s22, 0
    %p148 = por %p146, %p147
    %p149 = scmp.ne.s32.totalorder %s137, %s138
    %p150 = scmp.eq.s32.totalorder %s23, 1
    %p151 = por %p149, %p150
    %p153 = scmp.ne.s32.totalorder %s138, %s152
    %p154 = scmp.eq.s32.totalorder %s23, 0
    %p155 = por %p153, %p154
    %s157 = sadd.s32 %s156, 1
    %p160 = scmp.eq.s32.totalorder %s17, 1
    %p161 = scmp.ne.s32.totalorder %s156, %s158
    %p162 = scmp.eq.s32.totalorder %s17, 0
    %p163 = por %p161, %p162
    %p164 = scmp.ne.s32.totalorder %s156, %s158
    %p165 = scmp.eq.s32.totalorder %s22, 1
    %p166 = por %p164, %p165
    %p167 = scmp.ne.s32.totalorder %s158, %s159
    %p168 = scmp.eq.s32.totalorder %s22, 0
    %p169 = por %p167, %p168
    %p170 = scmp.ne.s32.totalorder %s158, %s159
    %p171 = scmp.eq.s32.totalorder %s23, 1
    %p172 = por %p170, %p171
    %p174 = scmp.ne.s32.totalorder %s159, %s173
    %p175 = scmp.eq.s32.totalorder %s23, 0
    %p176 = por %p174, %p175
    %s178 = sadd.s32 %s177, 1
    %p181 = scmp.eq.s32.totalorder %s17, 1
    %p182 = scmp.ne.s32.totalorder %s177, %s179
    %p183 = scmp.eq.s32.totalorder %s17, 0
    %p184 = por %p182, %p183
    %p185 = scmp.ne.s32.totalorder %s177, %s179
    %p186 = scmp.eq.s32.totalorder %s22, 1
    %p187 = por %p185, %p186
    %p188 = scmp.ne.s32.totalorder %s179, %s180
    %p189 = scmp.eq.s32.totalorder %s22, 0
    %p190 = por %p188, %p189
    %p191 = scmp.ne.s32.totalorder %s179, %s180
    %p192 = scmp.eq.s32.totalorder %s23, 1
    %p193 = por %p191, %p192
    %p195 = scmp.ne.s32.totalorder %s180, %s194
    %p196 = scmp.eq.s32.totalorder %s23, 0
    %p197 = por %p195, %p196
    %s199 = sadd.s32 %s198, 1
    %p202 = scmp.eq.s32.totalorder %s17, 1
    %p203 = scmp.ne.s32.totalorder %s198, %s200
    %p204 = scmp.eq.s32.totalorder %s17, 0
    %p205 = por %p203, %p204
    %p206 = scmp.ne.s32.totalorder %s198, %s200
    %p207 = scmp.eq.s32.totalorder %s22, 1
    %p208 = por %p206, %p207
    %p209 = scmp.ne.s32.totalorder %s200, %s201
    %p210 = scmp.eq.s32.totalorder %s22, 0
    %p211 = por %p209, %p210
    %p212 = scmp.ne.s32.totalorder %s200, %s201
    %p213 = scmp.eq.s32.totalorder %s23, 1
    %p214 = por %p212, %p213
    %p216 = scmp.ne.s32.totalorder %s201, %s215
    %p217 = scmp.eq.s32.totalorder %s23, 0
    %p218 = por %p216, %p217
    %s220 = sadd.s32 %s219, 1
    %p223 = scmp.eq.s32.totalorder %s17, 1
    %p224 = scmp.ne.s32.totalorder %s219, %s221
    %p225 = scmp.eq.s32.totalorder %s17, 0
    %p226 = por %p224, %p225
    %p227 = scmp.ne.s32.totalorder %s219, %s221
    %p228 = scmp.eq.s32.totalorder %s22, 1
    %p229 = por %p227, %p228
    %p230 = scmp.ne.s32.totalorder %s221, %s222
    %p231 = scmp.eq.s32.totalorder %s22, 0
    %p232 = por %p230, %p231
    %p233 = scmp.ne.s32.totalorder %s221, %s222
    %p234 = scmp.eq.s32.totalorder %s23, 1
    %p235 = por %p233, %p234
    %p237 = scmp.ne.s32.totalorder %s222, %s236
    %p238 = scmp.eq.s32.totalorder %s23, 0
    %p239 = por %p237, %p238
    %s241 = sadd.s32 %s240, 1
    %p244 = scmp.eq.s32.totalorder %s17, 1
    %p245 = scmp.ne.s32.totalorder %s240, %s242
    %p246 = scmp.eq.s32.totalorder %s17, 0
    %p247 = por %p245, %p246
    %p248 = scmp.ne.s32.totalorder %s240, %s242
    %p249 = scmp.eq.s32.totalorder %s22, 1
    %p250 = por %p248, %p249
    %p251 = scmp.ne.s32.totalorder %s242, %s243
    %p252 = scmp.eq.s32.totalorder %s22, 0
    %p253 = por %p251, %p252
    %p254 = scmp.ne.s32.totalorder %s242, %s243
    %p255 = scmp.eq.s32.totalorder %s23, 1
    %p256 = por %p254, %p255
    %p258 = scmp.ne.s32.totalorder %s243, %s257
    %p259 = scmp.eq.s32.totalorder %s23, 0
    %p260 = por %p258, %p259
    %s261 = ssub.s32 %s17, %s24
    %p262 = scmp.eq.s32.totalorder %s261, 0
    %s264 = sadd.s32 %s263, 1
    %s265 = scalar_select %p262, %s263, %s264
    %p268 = pneg %p262
    %p269 = scmp.eq.s32.totalorder %s17, 1
    %p270 = por %p268, %p269
    %p271 = scmp.ne.s32.totalorder %s263, %s266
    %p272 = scmp.eq.s32.totalorder %s17, 0
    %p273 = por %p271, %p272
    %p274 = scmp.ne.s32.totalorder %s263, %s266
    %p275 = scmp.eq.s32.totalorder %s22, 1
    %p276 = por %p274, %p275
    %p277 = scmp.ne.s32.totalorder %s266, %s267
    %p278 = scmp.eq.s32.totalorder %s22, 0
    %p279 = por %p277, %p278
    %p280 = scmp.ne.s32.totalorder %s266, %s267
    %p281 = scmp.eq.s32.totalorder %s23, 1
    %p282 = por %p280, %p281
    %p284 = scmp.ne.s32.totalorder %s267, %s283
    %p285 = scmp.eq.s32.totalorder %s23, 0
    %p286 = por %p284, %p285
    %p287 = scmp.le.s32.totalorder 1, %s17
    %p288 = scmp.lt.s32.totalorder %s17, 3
    %p289 = pnand %p287, %p288
    %p290 = pneg %p289
    // Predicated region
    $region9: #{convnext_block.1} parent=5 // pred_check
      _
    $region10: #{convnext_block.1} parent=5 // pred_check_branch
      %292 = sbr.rel (%p289) target = $region12
    $region11: #{convnext_block.1} parent=5 // pred_region
      %s293 = ssub.s32 %s17, 1
      // Predicated region
      $region13: #{convnext_block.1} parent=11 // pred_check
        %p294 = pneg %p64
      $region14: #{convnext_block.1} parent=11 // pred_check_branch
        %296 = sbr.rel (%p294) target = $region16
      $region15: #{convnext_block.1} parent=11 // pred_region
        _
      $region16: #{convnext_block.1} parent=11 // pred_fallthru
        _
      // Predicated region
      $region17: #{convnext_block.1} parent=11 // pred_check
        %p297 = pneg %p85
      $region18: #{convnext_block.1} parent=11 // pred_check_branch
        %299 = sbr.rel (%p297) target = $region20
      $region19: #{convnext_block.1} parent=11 // pred_region
        _
      $region20: #{convnext_block.1} parent=11 // pred_fallthru
        _
      // Predicated region
      $region21: #{convnext_block.1} parent=11 // pred_check
        %p300 = pneg %p106
      $region22: #{convnext_block.1} parent=11 // pred_check_branch
        %302 = sbr.rel (%p300) target = $region24
      $region23: #{convnext_block.1} parent=11 // pred_region
        _
      $region24: #{convnext_block.1} parent=11 // pred_fallthru
        _
      // Predicated region
      $region25: #{convnext_block.1} parent=11 // pred_check
        %p303 = pneg %p127
      $region26: #{convnext_block.1} parent=11 // pred_check_branch
        %305 = sbr.rel (%p303) target = $region28
      $region27: #{convnext_block.1} parent=11 // pred_region
        _
      $region28: #{convnext_block.1} parent=11 // pred_fallthru
        _
      // Predicated region
      $region29: #{convnext_block.1} parent=11 // pred_check
        %p306 = pneg %p148
      $region30: #{convnext_block.1} parent=11 // pred_check_branch
        %308 = sbr.rel (%p306) target = $region32
      $region31: #{convnext_block.1} parent=11 // pred_region
        _
      $region32: #{convnext_block.1} parent=11 // pred_fallthru
        _
      // Predicated region
      $region33: #{convnext_block.1} parent=11 // pred_check
        %p309 = pneg %p169
      $region34: #{convnext_block.1} parent=11 // pred_check_branch
        %311 = sbr.rel (%p309) target = $region36
      $region35: #{convnext_block.1} parent=11 // pred_region
        _
      $region36: #{convnext_block.1} parent=11 // pred_fallthru
        _
      // Predicated region
      $region37: #{convnext_block.1} parent=11 // pred_check
        %p312 = pneg %p190
      $region38: #{convnext_block.1} parent=11 // pred_check_branch
        %314 = sbr.rel (%p312) target = $region40
      $region39: #{convnext_block.1} parent=11 // pred_region
        _
      $region40: #{convnext_block.1} parent=11 // pred_fallthru
        _
      // Predicated region
      $region41: #{convnext_block.1} parent=11 // pred_check
        %p315 = pneg %p211
      $region42: #{convnext_block.1} parent=11 // pred_check_branch
        %317 = sbr.rel (%p315) target = $region44
      $region43: #{convnext_block.1} parent=11 // pred_region
        _
      $region44: #{convnext_block.1} parent=11 // pred_fallthru
        _
      // Predicated region
      $region45: #{convnext_block.1} parent=11 // pred_check
        %p318 = pneg %p232
      $region46: #{convnext_block.1} parent=11 // pred_check_branch
        %320 = sbr.rel (%p318) target = $region48
      $region47: #{convnext_block.1} parent=11 // pred_region
        _
      $region48: #{convnext_block.1} parent=11 // pred_fallthru
        _
      // Predicated region
      $region49: #{convnext_block.1} parent=11 // pred_check
        %p321 = pneg %p253
      $region50: #{convnext_block.1} parent=11 // pred_check_branch
        %323 = sbr.rel (%p321) target = $region52
      $region51: #{convnext_block.1} parent=11 // pred_region
        _
      $region52: #{convnext_block.1} parent=11 // pred_fallthru
        _
    $region12: #{convnext_block.1} parent=5 // pred_fallthru
      _
    %p324 = scmp.lt.s32.totalorder %s17, 2
    // Predicated region
    $region53: #{convnext_block.1} parent=5 // pred_check
      %p325 = pneg %p324
    $region54: #{convnext_block.1} parent=5 // pred_check_branch
      %327 = sbr.rel (%p325) target = $region56
    $region55: #{convnext_block.1} parent=5 // pred_region
      // Predicated region
      $region57: #{convnext_block.1} parent=55 // pred_check
        %p328 = pneg %p37
      $region58: #{convnext_block.1} parent=55 // pred_check_branch
        %330 = sbr.rel (%p328) target = $region60
      $region59: #{convnext_block.1} parent=55 // pred_region
        %p331 = scmp.lt.s32.totalorder %s17, 1
        %s332 = scalar_select %p331, %s17, 1
        %s333 = smul.addr %s332, 32
        %s334 = smul.addr %s333, 8
        %s335 = scalar_lea.vmem %s0, %s334
      $region60: #{convnext_block.1} parent=55 // pred_fallthru
        _
    $region56: #{convnext_block.1} parent=5 // pred_fallthru
      _
    %p336 = scmp.le.s32.totalorder 1, %s17
    %p337 = scmp.lt.s32.totalorder %s17, 3
    %p338 = pnand %p336, %p337
    %p339 = pneg %p338
    // Predicated region
    $region61: #{convnext_block.1} parent=5 // pred_check
      _
    $region62: #{convnext_block.1} parent=5 // pred_check_branch
      %341 = sbr.rel (%p338) target = $region64
    $region63: #{convnext_block.1} parent=5 // pred_region
      %s342 = ssub.s32 %s17, 1
      %p343 = scmp.lt.s32.totalorder %s22, 1
      %s344 = scalar_select %p343, %s22, 1
      %s345 = smul.addr %s344, 32
      %s346 = smul.addr %s345, 8
      %s347 = scalar_lea.vmem %s0, %s346
      %p348 = pneg %p43
      %p349 = pneg %p40
      %p350 = pneg %p64
      %p351 = pneg %p61
      %p352 = pneg %p85
      %p353 = pneg %p82
      %p354 = pneg %p106
      %p355 = pneg %p103
      %p356 = pneg %p127
      %p357 = pneg %p124
      %p358 = pneg %p148
      %p359 = pneg %p145
      %p360 = pneg %p169
      %p361 = pneg %p166
      %p362 = pneg %p190
      %p363 = pneg %p187
      %p364 = pneg %p211
      %p365 = pneg %p208
      %p366 = pneg %p232
      %p367 = pneg %p229
      %p368 = pneg %p253
      %p369 = pneg %p250
      %p370 = pneg %p279
      %p371 = pneg %p276
      %p372 = scmp.lt.s32.totalorder %s22, 1
      %s373 = scalar_select %p372, %s22, 1
      %s374 = smul.addr %s373, 32
      %s375 = smul.addr %s374, 8
      %s376 = scalar_lea.vmem %s11, %s375
      %p377 = scmp.lt.s32.totalorder %s22, 1
      %s378 = scalar_select %p377, %s22, 1
      %s379 = smul.addr %s378, 32
      %s380 = smul.addr %s379, 8
      %s381 = scalar_lea.vmem %s0, %s380
      %p382 = scmp.lt.s32.totalorder %s22, 1
      %s383 = scalar_select %p382, %s22, 1
      %s384 = smul.addr %s383, 32
      %s385 = smul.addr %s384, 8
      %s386 = scalar_lea.vmem %s11, %s385
      %387 = vst [vmem:[#allocation2] sm:$0xff] 0.0
      %388 = vst [vmem:[#allocation2 + $0x8] sm:$0xff] 0.0
      %389 = vst [vmem:[#allocation2 + $0x10] sm:$0x3f] 0.0
      %390 = vst [vmem:[#allocation2 + $0x18] sm:$0xff] 0.0
      %391 = vst [vmem:[#allocation2 + $0x20] sm:$0xff] 0.0
      %392 = vst [vmem:[#allocation2 + $0x28] sm:$0x3f] 0.0
      %393 = vst [vmem:[#allocation2 + $0x30] sm:$0xff] 0.0
      %394 = vst [vmem:[#allocation2 + $0x38] sm:$0xff] 0.0
      %395 = vst [vmem:[#allocation2 + $0x40] sm:$0x3f] 0.0
      %s396 = scalar_lea.vmem [#allocation2], 456
      %397 = vst [vmem:[%s396] sm:$0xff] 0.0
      %398 = vst [vmem:[%s396 + $0x8] sm:$0xff] 0.0
      %399 = vst [vmem:[%s396 + $0x10] sm:$0x3f] 0.0
      %400 = vst [vmem:[%s396 + $0x18] sm:$0xff] 0.0
      %401 = vst [vmem:[%s396 + $0x20] sm:$0xff] 0.0
      %402 = vst [vmem:[%s396 + $0x28] sm:$0x3f] 0.0
      %403 = vst [vmem:[%s396 + $0x30] sm:$0xff] 0.0
      %404 = vst [vmem:[%s396 + $0x38] sm:$0xff] 0.0
      %405 = vst [vmem:[%s396 + $0x40] sm:$0x3f] 0.0
      %s406 = scalar_lea.vmem [#allocation2], 72
      %407 = vst [vmem:[%s406] sm:$0x7] 0.0
      %408 = vst [vmem:[%s406 + $0x18] sm:$0x7] 0.0
      %409 = vst [vmem:[%s406 + $0x30] sm:$0x7] 0.0
      %410 = vst [vmem:[%s406 + $0x48] sm:$0x7] 0.0
      %411 = vst [vmem:[%s406 + $0x60] sm:$0x7] 0.0
      %412 = vst [vmem:[%s406 + $0x78] sm:$0x7] 0.0
      %413 = vst [vmem:[%s406 + $0x90] sm:$0x7] 0.0
      %414 = vst [vmem:[%s406 + $0xa8] sm:$0x7] 0.0
      %415 = vst [vmem:[%s406 + $0xc0] sm:$0x7] 0.0
      %416 = vst [vmem:[%s406 + $0xd8] sm:$0x7] 0.0
      %417 = vst [vmem:[%s406 + $0xf0] sm:$0x7] 0.0
      %418 = vst [vmem:[%s406 + $0x108] sm:$0x7] 0.0
      %419 = vst [vmem:[%s406 + $0x120] sm:$0x7] 0.0
      %420 = vst [vmem:[%s406 + $0x138] sm:$0x7] 0.0
      %421 = vst [vmem:[%s406 + $0x150] sm:$0x7] 0.0
      %422 = vst [vmem:[%s406 + $0x168] sm:$0x7] 0.0
      %423 = vst [vmem:[%s406 + $0x13] sm:$0x7] 0.0
      %424 = vst [vmem:[%s406 + $0x2b] sm:$0x7] 0.0
      %425 = vst [vmem:[%s406 + $0x43] sm:$0x7] 0.0
      %426 = vst [vmem:[%s406 + $0x5b] sm:$0x7] 0.0
      %427 = vst [vmem:[%s406 + $0x73] sm:$0x7] 0.0
      %428 = vst [vmem:[%s406 + $0x8b] sm:$0x7] 0.0
      %429 = vst [vmem:[%s406 + $0xa3] sm:$0x7] 0.0
      %430 = vst [vmem:[%s406 + $0xbb] sm:$0x7] 0.0
      %431 = vst [vmem:[%s406 + $0xd3] sm:$0x7] 0.0
      %432 = vst [vmem:[%s406 + $0xeb] sm:$0x7] 0.0
      %433 = vst [vmem:[%s406 + $0x103] sm:$0x7] 0.0
      %434 = vst [vmem:[%s406 + $0x11b] sm:$0x7] 0.0
      %435 = vst [vmem:[%s406 + $0x133] sm:$0x7] 0.0
      %436 = vst [vmem:[%s406 + $0x14b] sm:$0x7] 0.0
      %437 = vst [vmem:[%s406 + $0x163] sm:$0x7] 0.0
      %438 = vst [vmem:[%s406 + $0x17b] sm:$0x7] 0.0
      %v439 = vld [vmem:[%s381] sm:$0xff]
      %v440 = vld [vmem:[%s381 + $0x8] sm:$0xff]
      %v441 = vld [vmem:[%s381 + $0x10] sm:$0xff]
      %v442 = vld [vmem:[%s381 + $0x18] sm:$0xff]
      %v443 = vld [vmem:[%s381 + $0x20] sm:$0xff]
      %v444 = vld [vmem:[%s381 + $0x28] sm:$0xff]
      %v445 = vld [vmem:[%s381 + $0x30] sm:$0xff]
      %v446 = vld [vmem:[%s381 + $0x38] sm:$0xff]
      %v447 = vld [vmem:[%s381 + $0x40] sm:$0xff]
      %v448 = vld [vmem:[%s381 + $0x48] sm:$0xff]
      %v449 = vld [vmem:[%s381 + $0x50] sm:$0xff]
      %v450 = vld [vmem:[%s381 + $0x58] sm:$0xff]
      %v451 = vld [vmem:[%s381 + $0x60] sm:$0xff]
      %v452 = vld [vmem:[%s381 + $0x68] sm:$0xff]
      %v453 = vld [vmem:[%s381 + $0x70] sm:$0xff]
      %v454 = vld [vmem:[%s381 + $0x78] sm:$0xff]
      %v455 = vld [vmem:[%s381 + $0x80] sm:$0xff]
      %v456 = vld [vmem:[%s381 + $0x88] sm:$0xff]
      %v457 = vld [vmem:[%s381 + $0x90] sm:$0xff]
      %v458 = vld [vmem:[%s381 + $0x98] sm:$0xff]
      %v459 = vld [vmem:[%s381 + $0xa0] sm:$0xff]
      %v460 = vld [vmem:[%s381 + $0xa8] sm:$0xff]
      %v461 = vld [vmem:[%s381 + $0xb0] sm:$0xff]
      %v462 = vld [vmem:[%s381 + $0xb8] sm:$0xff]
      %v463 = vld [vmem:[%s381 + $0xc0] sm:$0xff]
      %v464 = vld [vmem:[%s381 + $0xc8] sm:$0xff]
      %v465 = vld [vmem:[%s381 + $0xd0] sm:$0xff]
      %v466 = vld [vmem:[%s381 + $0xd8] sm:$0xff]
      %v467 = vld [vmem:[%s381 + $0xe0] sm:$0xff]
      %v468 = vld [vmem:[%s381 + $0xe8] sm:$0xff]
      %v469 = vld [vmem:[%s381 + $0xf0] sm:$0xff]
      %v470 = vld [vmem:[%s381 + $0xf8] sm:$0xff]
      %471 = vst [vmem:[%s406 + $0x3] sm:$0xff] %v439
      %472 = vst [vmem:[%s406 + $0xb] sm:$0xff] %v440
      %473 = vst [vmem:[%s406 + $0x1b] sm:$0xff] %v441
      %474 = vst [vmem:[%s406 + $0x23] sm:$0xff] %v442
      %475 = vst [vmem:[%s406 + $0x33] sm:$0xff] %v443
      %476 = vst [vmem:[%s406 + $0x3b] sm:$0xff] %v444
      %477 = vst [vmem:[%s406 + $0x4b] sm:$0xff] %v445
      %478 = vst [vmem:[%s406 + $0x53] sm:$0xff] %v446
      %479 = vst [vmem:[%s406 + $0x63] sm:$0xff] %v447
      %480 = vst [vmem:[%s406 + $0x6b] sm:$0xff] %v448
      %481 = vst [vmem:[%s406 + $0x7b] sm:$0xff] %v449
      %482 = vst [vmem:[%s406 + $0x83] sm:$0xff] %v450
      %483 = vst [vmem:[%s406 + $0x93] sm:$0xff] %v451
      %484 = vst [vmem:[%s406 + $0x9b] sm:$0xff] %v452
      %485 = vst [vmem:[%s406 + $0xab] sm:$0xff] %v453
      %486 = vst [vmem:[%s406 + $0xb3] sm:$0xff] %v454
      %487 = vst [vmem:[%s406 + $0xc3] sm:$0xff] %v455
      %488 = vst [vmem:[%s406 + $0xcb] sm:$0xff] %v456
      %489 = vst [vmem:[%s406 + $0xdb] sm:$0xff] %v457
      %490 = vst [vmem:[%s406 + $0xe3] sm:$0xff] %v458
      %491 = vst [vmem:[%s406 + $0xf3] sm:$0xff] %v459
      %492 = vst [vmem:[%s406 + $0xfb] sm:$0xff] %v460
      %493 = vst [vmem:[%s406 + $0x10b] sm:$0xff] %v461
      %494 = vst [vmem:[%s406 + $0x113] sm:$0xff] %v462
      %495 = vst [vmem:[%s406 + $0x123] sm:$0xff] %v463
      %496 = vst [vmem:[%s406 + $0x12b] sm:$0xff] %v464
      %497 = vst [vmem:[%s406 + $0x13b] sm:$0xff] %v465
      %498 = vst [vmem:[%s406 + $0x143] sm:$0xff] %v466
      %499 = vst [vmem:[%s406 + $0x153] sm:$0xff] %v467
      %500 = vst [vmem:[%s406 + $0x15b] sm:$0xff] %v468
      %501 = vst [vmem:[%s406 + $0x16b] sm:$0xff] %v469
      %502 = vst [vmem:[%s406 + $0x173] sm:$0xff] %v470
      %v503 = vld [vmem:[%s2] sm:$0x1]
      loop: start=0, step=1, limit=2
      $region65: #{convnext_block.1} parent=63 // loop_pre_header
        _
      $region66: #{convnext_block.1} parent=63 // loop_header
        %s505 = sphi 0, %s509
        %p506 = scmp.ge.s32.totalorder %s505, 2
      $region67: #{convnext_block.1} parent=63 // loop_header_branch
        %508 = sbr.rel (%p506) target = $region71
      $region68: #{convnext_block.1} parent=63 // loop_body
        %s510 = smul.u32 %s505, 8
        %s511 = smul.u32 %s510, 24
        %s512 = scalar_lea.vmem [#allocation2], %s511
        %v513 = vld [vmem:[%s512] sm:$0xff]
        %v514 = vld [vmem:[%s512 + $0x8] sm:$0xff]
        %v515 = vld [vmem:[%s512 + $0x18] sm:$0xff]
        %v516 = vld [vmem:[%s512 + $0x20] sm:$0xff]
        %v517 = vld [vmem:[%s512 + $0x30] sm:$0xff]
        %v518 = vld [vmem:[%s512 + $0x38] sm:$0xff]
        %v519 = vld [vmem:[%s512 + $0x48] sm:$0xff]
        %v520 = vld [vmem:[%s512 + $0x50] sm:$0xff]
        %v521 = vld [vmem:[%s512 + $0x60] sm:$0xff]
        %v522 = vld [vmem:[%s512 + $0x68] sm:$0xff]
        %v523 = vld [vmem:[%s512 + $0x78] sm:$0xff]
        %v524 = vld [vmem:[%s512 + $0x80] sm:$0xff]
        %v525 = vld [vmem:[%s512 + $0x90] sm:$0xff]
        %v526 = vld [vmem:[%s512 + $0x98] sm:$0xff]
        %v527 = vld [vmem:[%s512 + $0xa8] sm:$0xff]
        %v528 = vld [vmem:[%s512 + $0xb0] sm:$0xff]
        %v529 = vld [vmem:[%s1] sm:$0x1]
        %v530 = vlaneseq
        %v531 = vshrl.u32 %v530, 7
        %v532 = vsub.s32 0, %v531
        %v533 = vrot.slane %v529, %v532
        %v534 = vmul.f32 %v513, %v533
        %v535 = vmul.f32 %v514, %v533
        %v536 = vmul.f32 %v515, %v533
        %v537 = vmul.f32 %v516, %v533
        %v538 = vmul.f32 %v517, %v533
        %v539 = vmul.f32 %v518, %v533
        %v540 = vmul.f32 %v519, %v533
        %v541 = vmul.f32 %v520, %v533
        %v542 = vmul.f32 %v521, %v533
        %v543 = vmul.f32 %v522, %v533
        %v544 = vmul.f32 %v523, %v533
        %v545 = vmul.f32 %v524, %v533
        %v546 = vmul.f32 %v525, %v533
        %v547 = vmul.f32 %v526, %v533
        %v548 = vmul.f32 %v527, %v533
        %v549 = vmul.f32 %v528, %v533
        %v551 = vlaneseq
        %v552 = vshrl.u32 %v551, 7
        %v553 = vsub.s32 0, %v552
        %v554 = vrot.slane %v503, %v553
        %v556 = vadd.f32 %v534, %v554
        %v557 = vadd.f32 %v535, %v554
        %v558 = vadd.f32 %v536, %v554
        %v559 = vadd.f32 %v537, %v554
        %v560 = vadd.f32 %v538, %v554
        %v561 = vadd.f32 %v539, %v554
        %v562 = vadd.f32 %v540, %v554
        %v563 = vadd.f32 %v541, %v554
        %v564 = vadd.f32 %v542, %v554
        %v565 = vadd.f32 %v543, %v554
        %v566 = vadd.f32 %v544, %v554
        %v567 = vadd.f32 %v545, %v554
        %v568 = vadd.f32 %v546, %v554
        %v569 = vadd.f32 %v547, %v554
        %v570 = vadd.f32 %v548, %v554
        %v571 = vadd.f32 %v549, %v554
        %v572 = vld [vmem:[%s512 + $0x1] sm:$0xff]
        %v573 = vld [vmem:[%s512 + $0x9] sm:$0xff]
        %v574 = vld [vmem:[%s512 + $0x19] sm:$0xff]
        %v575 = vld [vmem:[%s512 + $0x21] sm:$0xff]
        %v576 = vld [vmem:[%s512 + $0x31] sm:$0xff]
        %v577 = vld [vmem:[%s512 + $0x39] sm:$0xff]
        %v578 = vld [vmem:[%s512 + $0x49] sm:$0xff]
        %v579 = vld [vmem:[%s512 + $0x51] sm:$0xff]
        %v580 = vld [vmem:[%s512 + $0x61] sm:$0xff]
        %v581 = vld [vmem:[%s512 + $0x69] sm:$0xff]
        %v582 = vld [vmem:[%s512 + $0x79] sm:$0xff]
        %v583 = vld [vmem:[%s512 + $0x81] sm:$0xff]
        %v584 = vld [vmem:[%s512 + $0x91] sm:$0xff]
        %v585 = vld [vmem:[%s512 + $0x99] sm:$0xff]
        %v586 = vld [vmem:[%s512 + $0xa9] sm:$0xff]
        %v587 = vld [vmem:[%s512 + $0xb1] sm:$0xff]
        %v588 = vld [vmem:[%s1 + $0x1] sm:$0x1]
        %v589 = vlaneseq
        %v590 = vshrl.u32 %v589, 7
        %v591 = vsub.s32 0, %v590
        %v592 = vrot.slane %v588, %v591
        %v593 = vmul.f32 %v572, %v592
        %v594 = vmul.f32 %v573, %v592
        %v595 = vmul.f32 %v574, %v592
        %v596 = vmul.f32 %v575, %v592
        %v597 = vmul.f32 %v576, %v592
        %v598 = vmul.f32 %v577, %v592
        %v599 = vmul.f32 %v578, %v592
        %v600 = vmul.f32 %v579, %v592
        %v601 = vmul.f32 %v580, %v592
        %v602 = vmul.f32 %v581, %v592
        %v603 = vmul.f32 %v582, %v592
        %v604 = vmul.f32 %v583, %v592
        %v605 = vmul.f32 %v584, %v592
        %v606 = vmul.f32 %v585, %v592
        %v607 = vmul.f32 %v586, %v592
        %v608 = vmul.f32 %v587, %v592
        %v609 = vadd.f32 %v556, %v593
        %v610 = vadd.f32 %v557, %v594
        %v611 = vadd.f32 %v558, %v595
        %v612 = vadd.f32 %v559, %v596
        %v613 = vadd.f32 %v560, %v597
        %v614 = vadd.f32 %v561, %v598
        %v615 = vadd.f32 %v562, %v599
        %v616 = vadd.f32 %v563, %v600
        %v617 = vadd.f32 %v564, %v601
        %v618 = vadd.f32 %v565, %v602
        %v619 = vadd.f32 %v566, %v603
        %v620 = vadd.f32 %v567, %v604
        %v621 = vadd.f32 %v568, %v605
        %v622 = vadd.f32 %v569, %v606
        %v623 = vadd.f32 %v570, %v607
        %v624 = vadd.f32 %v571, %v608
        %v625 = vld [vmem:[%s512 + $0x2] sm:$0xff]
        %v626 = vld [vmem:[%s512 + $0xa] sm:$0xff]
        %v627 = vld [vmem:[%s512 + $0x1a] sm:$0xff]
        %v628 = vld [vmem:[%s512 + $0x22] sm:$0xff]
        %v629 = vld [vmem:[%s512 + $0x32] sm:$0xff]
        %v630 = vld [vmem:[%s512 + $0x3a] sm:$0xff]
        %v631 = vld [vmem:[%s512 + $0x4a] sm:$0xff]
        %v632 = vld [vmem:[%s512 + $0x52] sm:$0xff]
        %v633 = vld [vmem:[%s512 + $0x62] sm:$0xff]
        %v634 = vld [vmem:[%s512 + $0x6a] sm:$0xff]
        %v635 = vld [vmem:[%s512 + $0x7a] sm:$0xff]
        %v636 = vld [vmem:[%s512 + $0x82] sm:$0xff]
        %v637 = vld [vmem:[%s512 + $0x92] sm:$0xff]
        %v638 = vld [vmem:[%s512 + $0x9a] sm:$0xff]
        %v639 = vld [vmem:[%s512 + $0xaa] sm:$0xff]
        %v640 = vld [vmem:[%s512 + $0xb2] sm:$0xff]
        %v641 = vld [vmem:[%s1 + $0x2] sm:$0x1]
        %v642 = vlaneseq
        %v643 = vshrl.u32 %v642, 7
        %v644 = vsub.s32 0, %v643
        %v645 = vrot.slane %v641, %v644
        %v646 = vmul.f32 %v625, %v645
        %v647 = vmul.f32 %v626, %v645
        %v648 = vmul.f32 %v627, %v645
        %v649 = vmul.f32 %v628, %v645
        %v650 = vmul.f32 %v629, %v645
        %v651 = vmul.f32 %v630, %v645
        %v652 = vmul.f32 %v631, %v645
        %v653 = vmul.f32 %v632, %v645
        %v654 = vmul.f32 %v633, %v645
        %v655 = vmul.f32 %v634, %v645
        %v656 = vmul.f32 %v635, %v645
        %v657 = vmul.f32 %v636, %v645
        %v658 = vmul.f32 %v637, %v645
        %v659 = vmul.f32 %v638, %v645
        %v660 = vmul.f32 %v639, %v645
        %v661 = vmul.f32 %v640, %v645
        %v662 = vadd.f32 %v609, %v646
        %v663 = vadd.f32 %v610, %v647
        %v664 = vadd.f32 %v611, %v648
        %v665 = vadd.f32 %v612, %v649
        %v666 = vadd.f32 %v613, %v650
        %v667 = vadd.f32 %v614, %v651
        %v668 = vadd.f32 %v615, %v652
        %v669 = vadd.f32 %v616, %v653
        %v670 = vadd.f32 %v617, %v654
        %v671 = vadd.f32 %v618, %v655
        %v672 = vadd.f32 %v619, %v656
        %v673 = vadd.f32 %v620, %v657
        %v674 = vadd.f32 %v621, %v658
        %v675 = vadd.f32 %v622, %v659
        %v676 = vadd.f32 %v623, %v660
        %v677 = vadd.f32 %v624, %v661
        %v678 = vld [vmem:[%s512 + $0x3] sm:$0xff]
        %v679 = vld [vmem:[%s512 + $0xb] sm:$0xff]
        %v680 = vld [vmem:[%s512 + $0x1b] sm:$0xff]
        %v681 = vld [vmem:[%s512 + $0x23] sm:$0xff]
        %v682 = vld [vmem:[%s512 + $0x33] sm:$0xff]
        %v683 = vld [vmem:[%s512 + $0x3b] sm:$0xff]
        %v684 = vld [vmem:[%s512 + $0x4b] sm:$0xff]
        %v685 = vld [vmem:[%s512 + $0x53] sm:$0xff]
        %v686 = vld [vmem:[%s512 + $0x63] sm:$0xff]
        %v687 = vld [vmem:[%s512 + $0x6b] sm:$0xff]
        %v688 = vld [vmem:[%s512 + $0x7b] sm:$0xff]
        %v689 = vld [vmem:[%s512 + $0x83] sm:$0xff]
        %v690 = vld [vmem:[%s512 + $0x93] sm:$0xff]
        %v691 = vld [vmem:[%s512 + $0x9b] sm:$0xff]
        %v692 = vld [vmem:[%s512 + $0xab] sm:$0xff]
        %v693 = vld [vmem:[%s512 + $0xb3] sm:$0xff]
        %v694 = vld [vmem:[%s1 + $0x3] sm:$0x1]
        %v695 = vlaneseq
        %v696 = vshrl.u32 %v695, 7
        %v697 = vsub.s32 0, %v696
        %v698 = vrot.slane %v694, %v697
        %v699 = vmul.f32 %v678, %v698
        %v700 = vmul.f32 %v679, %v698
        %v701 = vmul.f32 %v680, %v698
        %v702 = vmul.f32 %v681, %v698
        %v703 = vmul.f32 %v682, %v698
        %v704 = vmul.f32 %v683, %v698
        %v705 = vmul.f32 %v684, %v698
        %v706 = vmul.f32 %v685, %v698
        %v707 = vmul.f32 %v686, %v698
        %v708 = vmul.f32 %v687, %v698
        %v709 = vmul.f32 %v688, %v698
        %v710 = vmul.f32 %v689, %v698
        %v711 = vmul.f32 %v690, %v698
        %v712 = vmul.f32 %v691, %v698
        %v713 = vmul.f32 %v692, %v698
        %v714 = vmul.f32 %v693, %v698
        %v715 = vadd.f32 %v662, %v699
        %v716 = vadd.f32 %v663, %v700
        %v717 = vadd.f32 %v664, %v701
        %v718 = vadd.f32 %v665, %v702
        %v719 = vadd.f32 %v666, %v703
        %v720 = vadd.f32 %v667, %v704
        %v721 = vadd.f32 %v668, %v705
        %v722 = vadd.f32 %v669, %v706
        %v723 = vadd.f32 %v670, %v707
        %v724 = vadd.f32 %v671, %v708
        %v725 = vadd.f32 %v672, %v709
        %v726 = vadd.f32 %v673, %v710
        %v727 = vadd.f32 %v674, %v711
        %v728 = vadd.f32 %v675, %v712
        %v729 = vadd.f32 %v676, %v713
        %v730 = vadd.f32 %v677, %v714
        %v731 = vld [vmem:[%s512 + $0x4] sm:$0xff]
        %v732 = vld [vmem:[%s512 + $0xc] sm:$0xff]
        %v733 = vld [vmem:[%s512 + $0x1c] sm:$0xff]
        %v734 = vld [vmem:[%s512 + $0x24] sm:$0xff]
        %v735 = vld [vmem:[%s512 + $0x34] sm:$0xff]
        %v736 = vld [vmem:[%s512 + $0x3c] sm:$0xff]
        %v737 = vld [vmem:[%s512 + $0x4c] sm:$0xff]
        %v738 = vld [vmem:[%s512 + $0x54] sm:$0xff]
        %v739 = vld [vmem:[%s512 + $0x64] sm:$0xff]
        %v740 = vld [vmem:[%s512 + $0x6c] sm:$0xff]
        %v741 = vld [vmem:[%s512 + $0x7c] sm:$0xff]
        %v742 = vld [vmem:[%s512 + $0x84] sm:$0xff]
        %v743 = vld [vmem:[%s512 + $0x94] sm:$0xff]
        %v744 = vld [vmem:[%s512 + $0x9c] sm:$0xff]
        %v745 = vld [vmem:[%s512 + $0xac] sm:$0xff]
        %v746 = vld [vmem:[%s512 + $0xb4] sm:$0xff]
        %v747 = vld [vmem:[%s1 + $0x4] sm:$0x1]
        %v748 = vlaneseq
        %v749 = vshrl.u32 %v748, 7
        %v750 = vsub.s32 0, %v749
        %v751 = vrot.slane %v747, %v750
        %v752 = vmul.f32 %v731, %v751
        %v753 = vmul.f32 %v732, %v751
        %v754 = vmul.f32 %v733, %v751
        %v755 = vmul.f32 %v734, %v751
        %v756 = vmul.f32 %v735, %v751
        %v757 = vmul.f32 %v736, %v751
        %v758 = vmul.f32 %v737, %v751
        %v759 = vmul.f32 %v738, %v751
        %v760 = vmul.f32 %v739, %v751
        %v761 = vmul.f32 %v740, %v751
        %v762 = vmul.f32 %v741, %v751
        %v763 = vmul.f32 %v742, %v751
        %v764 = vmul.f32 %v743, %v751
        %v765 = vmul.f32 %v744, %v751
        %v766 = vmul.f32 %v745, %v751
        %v767 = vmul.f32 %v746, %v751
        %v768 = vadd.f32 %v715, %v752
        %v769 = vadd.f32 %v716, %v753
        %v770 = vadd.f32 %v717, %v754
        %v771 = vadd.f32 %v718, %v755
        %v772 = vadd.f32 %v719, %v756
        %v773 = vadd.f32 %v720, %v757
        %v774 = vadd.f32 %v721, %v758
        %v775 = vadd.f32 %v722, %v759
        %v776 = vadd.f32 %v723, %v760
        %v777 = vadd.f32 %v724, %v761
        %v778 = vadd.f32 %v725, %v762
        %v779 = vadd.f32 %v726, %v763
        %v780 = vadd.f32 %v727, %v764
        %v781 = vadd.f32 %v728, %v765
        %v782 = vadd.f32 %v729, %v766
        %v783 = vadd.f32 %v730, %v767
        %v784 = vld [vmem:[%s512 + $0x5] sm:$0xff]
        %v785 = vld [vmem:[%s512 + $0xd] sm:$0xff]
        %v786 = vld [vmem:[%s512 + $0x1d] sm:$0xff]
        %v787 = vld [vmem:[%s512 + $0x25] sm:$0xff]
        %v788 = vld [vmem:[%s512 + $0x35] sm:$0xff]
        %v789 = vld [vmem:[%s512 + $0x3d] sm:$0xff]
        %v790 = vld [vmem:[%s512 + $0x4d] sm:$0xff]
        %v791 = vld [vmem:[%s512 + $0x55] sm:$0xff]
        %v792 = vld [vmem:[%s512 + $0x65] sm:$0xff]
        %v793 = vld [vmem:[%s512 + $0x6d] sm:$0xff]
        %v794 = vld [vmem:[%s512 + $0x7d] sm:$0xff]
        %v795 = vld [vmem:[%s512 + $0x85] sm:$0xff]
        %v796 = vld [vmem:[%s512 + $0x95] sm:$0xff]
        %v797 = vld [vmem:[%s512 + $0x9d] sm:$0xff]
        %v798 = vld [vmem:[%s512 + $0xad] sm:$0xff]
        %v799 = vld [vmem:[%s512 + $0xb5] sm:$0xff]
        %v800 = vld [vmem:[%s1 + $0x5] sm:$0x1]
        %v801 = vlaneseq
        %v802 = vshrl.u32 %v801, 7
        %v803 = vsub.s32 0, %v802
        %v804 = vrot.slane %v800, %v803
        %v805 = vmul.f32 %v784, %v804
        %v806 = vmul.f32 %v785, %v804
        %v807 = vmul.f32 %v786, %v804
        %v808 = vmul.f32 %v787, %v804
        %v809 = vmul.f32 %v788, %v804
        %v810 = vmul.f32 %v789, %v804
        %v811 = vmul.f32 %v790, %v804
        %v812 = vmul.f32 %v791, %v804
        %v813 = vmul.f32 %v792, %v804
        %v814 = vmul.f32 %v793, %v804
        %v815 = vmul.f32 %v794, %v804
        %v816 = vmul.f32 %v795, %v804
        %v817 = vmul.f32 %v796, %v804
        %v818 = vmul.f32 %v797, %v804
        %v819 = vmul.f32 %v798, %v804
        %v820 = vmul.f32 %v799, %v804
        %v821 = vadd.f32 %v768, %v805
        %v822 = vadd.f32 %v769, %v806
        %v823 = vadd.f32 %v770, %v807
        %v824 = vadd.f32 %v771, %v808
        %v825 = vadd.f32 %v772, %v809
        %v826 = vadd.f32 %v773, %v810
        %v827 = vadd.f32 %v774, %v811
        %v828 = vadd.f32 %v775, %v812
        %v829 = vadd.f32 %v776, %v813
        %v830 = vadd.f32 %v777, %v814
        %v831 = vadd.f32 %v778, %v815
        %v832 = vadd.f32 %v779, %v816
        %v833 = vadd.f32 %v780, %v817
        %v834 = vadd.f32 %v781, %v818
        %v835 = vadd.f32 %v782, %v819
        %v836 = vadd.f32 %v783, %v820
        %v837 = vld [vmem:[%s512 + $0x6] sm:$0xff]
        %v838 = vld [vmem:[%s512 + $0xe] sm:$0xff]
        %v839 = vld [vmem:[%s512 + $0x1e] sm:$0xff]
        %v840 = vld [vmem:[%s512 + $0x26] sm:$0xff]
        %v841 = vld [vmem:[%s512 + $0x36] sm:$0xff]
        %v842 = vld [vmem:[%s512 + $0x3e] sm:$0xff]
        %v843 = vld [vmem:[%s512 + $0x4e] sm:$0xff]
        %v844 = vld [vmem:[%s512 + $0x56] sm:$0xff]
        %v845 = vld [vmem:[%s512 + $0x66] sm:$0xff]
        %v846 = vld [vmem:[%s512 + $0x6e] sm:$0xff]
        %v847 = vld [vmem:[%s512 + $0x7e] sm:$0xff]
        %v848 = vld [vmem:[%s512 + $0x86] sm:$0xff]
        %v849 = vld [vmem:[%s512 + $0x96] sm:$0xff]
        %v850 = vld [vmem:[%s512 + $0x9e] sm:$0xff]
        %v851 = vld [vmem:[%s512 + $0xae] sm:$0xff]
        %v852 = vld [vmem:[%s512 + $0xb6] sm:$0xff]
        %v853 = vld [vmem:[%s1 + $0x6] sm:$0x1]
        %v854 = vlaneseq
        %v855 = vshrl.u32 %v854, 7
        %v856 = vsub.s32 0, %v855
        %v857 = vrot.slane %v853, %v856
        %v858 = vmul.f32 %v837, %v857
        %v859 = vmul.f32 %v838, %v857
        %v860 = vmul.f32 %v839, %v857
        %v861 = vmul.f32 %v840, %v857
        %v862 = vmul.f32 %v841, %v857
        %v863 = vmul.f32 %v842, %v857
        %v864 = vmul.f32 %v843, %v857
        %v865 = vmul.f32 %v844, %v857
        %v866 = vmul.f32 %v845, %v857
        %v867 = vmul.f32 %v846, %v857
        %v868 = vmul.f32 %v847, %v857
        %v869 = vmul.f32 %v848, %v857
        %v870 = vmul.f32 %v849, %v857
        %v871 = vmul.f32 %v850, %v857
        %v872 = vmul.f32 %v851, %v857
        %v873 = vmul.f32 %v852, %v857
        %v874 = vadd.f32 %v821, %v858
        %v875 = vadd.f32 %v822, %v859
        %v876 = vadd.f32 %v823, %v860
        %v877 = vadd.f32 %v824, %v861
        %v878 = vadd.f32 %v825, %v862
        %v879 = vadd.f32 %v826, %v863
        %v880 = vadd.f32 %v827, %v864
        %v881 = vadd.f32 %v828, %v865
        %v882 = vadd.f32 %v829, %v866
        %v883 = vadd.f32 %v830, %v867
        %v884 = vadd.f32 %v831, %v868
        %v885 = vadd.f32 %v832, %v869
        %v886 = vadd.f32 %v833, %v870
        %v887 = vadd.f32 %v834, %v871
        %v888 = vadd.f32 %v835, %v872
        %v889 = vadd.f32 %v836, %v873
        %s890 = sadd.s32 %s510, 1
        %s891 = smul.u32 %s890, 24
        %s892 = scalar_lea.vmem [#allocation2], %s891
        %v893 = vld [vmem:[%s892] sm:$0xff]
        %v894 = vld [vmem:[%s892 + $0x8] sm:$0xff]
        %v895 = vld [vmem:[%s892 + $0x18] sm:$0xff]
        %v896 = vld [vmem:[%s892 + $0x20] sm:$0xff]
        %v897 = vld [vmem:[%s892 + $0x30] sm:$0xff]
        %v898 = vld [vmem:[%s892 + $0x38] sm:$0xff]
        %v899 = vld [vmem:[%s892 + $0x48] sm:$0xff]
        %v900 = vld [vmem:[%s892 + $0x50] sm:$0xff]
        %v901 = vld [vmem:[%s892 + $0x60] sm:$0xff]
        %v902 = vld [vmem:[%s892 + $0x68] sm:$0xff]
        %v903 = vld [vmem:[%s892 + $0x78] sm:$0xff]
        %v904 = vld [vmem:[%s892 + $0x80] sm:$0xff]
        %v905 = vld [vmem:[%s892 + $0x90] sm:$0xff]
        %v906 = vld [vmem:[%s892 + $0x98] sm:$0xff]
        %v907 = vld [vmem:[%s892 + $0xa8] sm:$0xff]
        %v908 = vld [vmem:[%s892 + $0xb0] sm:$0xff]
        %v909 = vld [vmem:[%s1 + $0x7] sm:$0x1]
        %v910 = vlaneseq
        %v911 = vshrl.u32 %v910, 7
        %v912 = vsub.s32 0, %v911
        %v913 = vrot.slane %v909, %v912
        %v914 = vmul.f32 %v893, %v913
        %v915 = vmul.f32 %v894, %v913
        %v916 = vmul.f32 %v895, %v913
        %v917 = vmul.f32 %v896, %v913
        %v918 = vmul.f32 %v897, %v913
        %v919 = vmul.f32 %v898, %v913
        %v920 = vmul.f32 %v899, %v913
        %v921 = vmul.f32 %v900, %v913
        %v922 = vmul.f32 %v901, %v913
        %v923 = vmul.f32 %v902, %v913
        %v924 = vmul.f32 %v903, %v913
        %v925 = vmul.f32 %v904, %v913
        %v926 = vmul.f32 %v905, %v913
        %v927 = vmul.f32 %v906, %v913
        %v928 = vmul.f32 %v907, %v913
        %v929 = vmul.f32 %v908, %v913
        %v930 = vadd.f32 %v874, %v914
        %v931 = vadd.f32 %v875, %v915
        %v932 = vadd.f32 %v876, %v916
        %v933 = vadd.f32 %v877, %v917
        %v934 = vadd.f32 %v878, %v918
        %v935 = vadd.f32 %v879, %v919
        %v936 = vadd.f32 %v880, %v920
        %v937 = vadd.f32 %v881, %v921
        %v938 = vadd.f32 %v882, %v922
        %v939 = vadd.f32 %v883, %v923
        %v940 = vadd.f32 %v884, %v924
        %v941 = vadd.f32 %v885, %v925
        %v942 = vadd.f32 %v886, %v926
        %v943 = vadd.f32 %v887, %v927
        %v944 = vadd.f32 %v888, %v928
        %v945 = vadd.f32 %v889, %v929
        %v946 = vld [vmem:[%s892 + $0x1] sm:$0xff]
        %v947 = vld [vmem:[%s892 + $0x9] sm:$0xff]
        %v948 = vld [vmem:[%s892 + $0x19] sm:$0xff]
        %v949 = vld [vmem:[%s892 + $0x21] sm:$0xff]
        %v950 = vld [vmem:[%s892 + $0x31] sm:$0xff]
        %v951 = vld [vmem:[%s892 + $0x39] sm:$0xff]
        %v952 = vld [vmem:[%s892 + $0x49] sm:$0xff]
        %v953 = vld [vmem:[%s892 + $0x51] sm:$0xff]
        %v954 = vld [vmem:[%s892 + $0x61] sm:$0xff]
        %v955 = vld [vmem:[%s892 + $0x69] sm:$0xff]
        %v956 = vld [vmem:[%s892 + $0x79] sm:$0xff]
        %v957 = vld [vmem:[%s892 + $0x81] sm:$0xff]
        %v958 = vld [vmem:[%s892 + $0x91] sm:$0xff]
        %v959 = vld [vmem:[%s892 + $0x99] sm:$0xff]
        %v960 = vld [vmem:[%s892 + $0xa9] sm:$0xff]
        %v961 = vld [vmem:[%s892 + $0xb1] sm:$0xff]
        %v962 = vld [vmem:[%s1 + $0x8] sm:$0x1]
        %v963 = vlaneseq
        %v964 = vshrl.u32 %v963, 7
        %v965 = vsub.s32 0, %v964
        %v966 = vrot.slane %v962, %v965
        %v967 = vmul.f32 %v946, %v966
        %v968 = vmul.f32 %v947, %v966
        %v969 = vmul.f32 %v948, %v966
        %v970 = vmul.f32 %v949, %v966
        %v971 = vmul.f32 %v950, %v966
        %v972 = vmul.f32 %v951, %v966
        %v973 = vmul.f32 %v952, %v966
        %v974 = vmul.f32 %v953, %v966
        %v975 = vmul.f32 %v954, %v966
        %v976 = vmul.f32 %v955, %v966
        %v977 = vmul.f32 %v956, %v966
        %v978 = vmul.f32 %v957, %v966
        %v979 = vmul.f32 %v958, %v966
        %v980 = vmul.f32 %v959, %v966
        %v981 = vmul.f32 %v960, %v966
        %v982 = vmul.f32 %v961, %v966
        %v983 = vadd.f32 %v930, %v967
        %v984 = vadd.f32 %v931, %v968
        %v985 = vadd.f32 %v932, %v969
        %v986 = vadd.f32 %v933, %v970
        %v987 = vadd.f32 %v934, %v971
        %v988 = vadd.f32 %v935, %v972
        %v989 = vadd.f32 %v936, %v973
        %v990 = vadd.f32 %v937, %v974
        %v991 = vadd.f32 %v938, %v975
        %v992 = vadd.f32 %v939, %v976
        %v993 = vadd.f32 %v940, %v977
        %v994 = vadd.f32 %v941, %v978
        %v995 = vadd.f32 %v942, %v979
        %v996 = vadd.f32 %v943, %v980
        %v997 = vadd.f32 %v944, %v981
        %v998 = vadd.f32 %v945, %v982
        %v999 = vld [vmem:[%s892 + $0x2] sm:$0xff]
        %v1000 = vld [vmem:[%s892 + $0xa] sm:$0xff]
        %v1001 = vld [vmem:[%s892 + $0x1a] sm:$0xff]
        %v1002 = vld [vmem:[%s892 + $0x22] sm:$0xff]
        %v1003 = vld [vmem:[%s892 + $0x32] sm:$0xff]
        %v1004 = vld [vmem:[%s892 + $0x3a] sm:$0xff]
        %v1005 = vld [vmem:[%s892 + $0x4a] sm:$0xff]
        %v1006 = vld [vmem:[%s892 + $0x52] sm:$0xff]
        %v1007 = vld [vmem:[%s892 + $0x62] sm:$0xff]
        %v1008 = vld [vmem:[%s892 + $0x6a] sm:$0xff]
        %v1009 = vld [vmem:[%s892 + $0x7a] sm:$0xff]
        %v1010 = vld [vmem:[%s892 + $0x82] sm:$0xff]
        %v1011 = vld [vmem:[%s892 + $0x92] sm:$0xff]
        %v1012 = vld [vmem:[%s892 + $0x9a] sm:$0xff]
        %v1013 = vld [vmem:[%s892 + $0xaa] sm:$0xff]
        %v1014 = vld [vmem:[%s892 + $0xb2] sm:$0xff]
        %v1015 = vld [vmem:[%s1 + $0x9] sm:$0x1]
        %v1016 = vlaneseq
        %v1017 = vshrl.u32 %v1016, 7
        %v1018 = vsub.s32 0, %v1017
        %v1019 = vrot.slane %v1015, %v1018
        %v1020 = vmul.f32 %v999, %v1019
        %v1021 = vmul.f32 %v1000, %v1019
        %v1022 = vmul.f32 %v1001, %v1019
        %v1023 = vmul.f32 %v1002, %v1019
        %v1024 = vmul.f32 %v1003, %v1019
        %v1025 = vmul.f32 %v1004, %v1019
        %v1026 = vmul.f32 %v1005, %v1019
        %v1027 = vmul.f32 %v1006, %v1019
        %v1028 = vmul.f32 %v1007, %v1019
        %v1029 = vmul.f32 %v1008, %v1019
        %v1030 = vmul.f32 %v1009, %v1019
        %v1031 = vmul.f32 %v1010, %v1019
        %v1032 = vmul.f32 %v1011, %v1019
        %v1033 = vmul.f32 %v1012, %v1019
        %v1034 = vmul.f32 %v1013, %v1019
        %v1035 = vmul.f32 %v1014, %v1019
        %v1036 = vadd.f32 %v983, %v1020
        %v1037 = vadd.f32 %v984, %v1021
        %v1038 = vadd.f32 %v985, %v1022
        %v1039 = vadd.f32 %v986, %v1023
        %v1040 = vadd.f32 %v987, %v1024
        %v1041 = vadd.f32 %v988, %v1025
        %v1042 = vadd.f32 %v989, %v1026
        %v1043 = vadd.f32 %v990, %v1027
        %v1044 = vadd.f32 %v991, %v1028
        %v1045 = vadd.f32 %v992, %v1029
        %v1046 = vadd.f32 %v993, %v1030
        %v1047 = vadd.f32 %v994, %v1031
        %v1048 = vadd.f32 %v995, %v1032
        %v1049 = vadd.f32 %v996, %v1033
        %v1050 = vadd.f32 %v997, %v1034
        %v1051 = vadd.f32 %v998, %v1035
        %v1052 = vld [vmem:[%s892 + $0x3] sm:$0xff]
        %v1053 = vld [vmem:[%s892 + $0xb] sm:$0xff]
        %v1054 = vld [vmem:[%s892 + $0x1b] sm:$0xff]
        %v1055 = vld [vmem:[%s892 + $0x23] sm:$0xff]
        %v1056 = vld [vmem:[%s892 + $0x33] sm:$0xff]
        %v1057 = vld [vmem:[%s892 + $0x3b] sm:$0xff]
        %v1058 = vld [vmem:[%s892 + $0x4b] sm:$0xff]
        %v1059 = vld [vmem:[%s892 + $0x53] sm:$0xff]
        %v1060 = vld [vmem:[%s892 + $0x63] sm:$0xff]
        %v1061 = vld [vmem:[%s892 + $0x6b] sm:$0xff]
        %v1062 = vld [vmem:[%s892 + $0x7b] sm:$0xff]
        %v1063 = vld [vmem:[%s892 + $0x83] sm:$0xff]
        %v1064 = vld [vmem:[%s892 + $0x93] sm:$0xff]
        %v1065 = vld [vmem:[%s892 + $0x9b] sm:$0xff]
        %v1066 = vld [vmem:[%s892 + $0xab] sm:$0xff]
        %v1067 = vld [vmem:[%s892 + $0xb3] sm:$0xff]
        %v1068 = vld [vmem:[%s1 + $0xa] sm:$0x1]
        %v1069 = vlaneseq
        %v1070 = vshrl.u32 %v1069, 7
        %v1071 = vsub.s32 0, %v1070
        %v1072 = vrot.slane %v1068, %v1071
        %v1073 = vmul.f32 %v1052, %v1072
        %v1074 = vmul.f32 %v1053, %v1072
        %v1075 = vmul.f32 %v1054, %v1072
        %v1076 = vmul.f32 %v1055, %v1072
        %v1077 = vmul.f32 %v1056, %v1072
        %v1078 = vmul.f32 %v1057, %v1072
        %v1079 = vmul.f32 %v1058, %v1072
        %v1080 = vmul.f32 %v1059, %v1072
        %v1081 = vmul.f32 %v1060, %v1072
        %v1082 = vmul.f32 %v1061, %v1072
        %v1083 = vmul.f32 %v1062, %v1072
        %v1084 = vmul.f32 %v1063, %v1072
        %v1085 = vmul.f32 %v1064, %v1072
        %v1086 = vmul.f32 %v1065, %v1072
        %v1087 = vmul.f32 %v1066, %v1072
        %v1088 = vmul.f32 %v1067, %v1072
        %v1089 = vadd.f32 %v1036, %v1073
        %v1090 = vadd.f32 %v1037, %v1074
        %v1091 = vadd.f32 %v1038, %v1075
        %v1092 = vadd.f32 %v1039, %v1076
        %v1093 = vadd.f32 %v1040, %v1077
        %v1094 = vadd.f32 %v1041, %v1078
        %v1095 = vadd.f32 %v1042, %v1079
        %v1096 = vadd.f32 %v1043, %v1080
        %v1097 = vadd.f32 %v1044, %v1081
        %v1098 = vadd.f32 %v1045, %v1082
        %v1099 = vadd.f32 %v1046, %v1083
        %v1100 = vadd.f32 %v1047, %v1084
        %v1101 = vadd.f32 %v1048, %v1085
        %v1102 = vadd.f32 %v1049, %v1086
        %v1103 = vadd.f32 %v1050, %v1087
        %v1104 = vadd.f32 %v1051, %v1088
        %v1105 = vld [vmem:[%s892 + $0x4] sm:$0xff]
        %v1106 = vld [vmem:[%s892 + $0xc] sm:$0xff]
        %v1107 = vld [vmem:[%s892 + $0x1c] sm:$0xff]
        %v1108 = vld [vmem:[%s892 + $0x24] sm:$0xff]
        %v1109 = vld [vmem:[%s892 + $0x34] sm:$0xff]
        %v1110 = vld [vmem:[%s892 + $0x3c] sm:$0xff]
        %v1111 = vld [vmem:[%s892 + $0x4c] sm:$0xff]
        %v1112 = vld [vmem:[%s892 + $0x54] sm:$0xff]
        %v1113 = vld [vmem:[%s892 + $0x64] sm:$0xff]
        %v1114 = vld [vmem:[%s892 + $0x6c] sm:$0xff]
        %v1115 = vld [vmem:[%s892 + $0x7c] sm:$0xff]
        %v1116 = vld [vmem:[%s892 + $0x84] sm:$0xff]
        %v1117 = vld [vmem:[%s892 + $0x94] sm:$0xff]
        %v1118 = vld [vmem:[%s892 + $0x9c] sm:$0xff]
        %v1119 = vld [vmem:[%s892 + $0xac] sm:$0xff]
        %v1120 = vld [vmem:[%s892 + $0xb4] sm:$0xff]
        %v1121 = vld [vmem:[%s1 + $0xb] sm:$0x1]
        %v1122 = vlaneseq
        %v1123 = vshrl.u32 %v1122, 7
        %v1124 = vsub.s32 0, %v1123
        %v1125 = vrot.slane %v1121, %v1124
        %v1126 = vmul.f32 %v1105, %v1125
        %v1127 = vmul.f32 %v1106, %v1125
        %v1128 = vmul.f32 %v1107, %v1125
        %v1129 = vmul.f32 %v1108, %v1125
        %v1130 = vmul.f32 %v1109, %v1125
        %v1131 = vmul.f32 %v1110, %v1125
        %v1132 = vmul.f32 %v1111, %v1125
        %v1133 = vmul.f32 %v1112, %v1125
        %v1134 = vmul.f32 %v1113, %v1125
        %v1135 = vmul.f32 %v1114, %v1125
        %v1136 = vmul.f32 %v1115, %v1125
        %v1137 = vmul.f32 %v1116, %v1125
        %v1138 = vmul.f32 %v1117, %v1125
        %v1139 = vmul.f32 %v1118, %v1125
        %v1140 = vmul.f32 %v1119, %v1125
        %v1141 = vmul.f32 %v1120, %v1125
        %v1142 = vadd.f32 %v1089, %v1126
        %v1143 = vadd.f32 %v1090, %v1127
        %v1144 = vadd.f32 %v1091, %v1128
        %v1145 = vadd.f32 %v1092, %v1129
        %v1146 = vadd.f32 %v1093, %v1130
        %v1147 = vadd.f32 %v1094, %v1131
        %v1148 = vadd.f32 %v1095, %v1132
        %v1149 = vadd.f32 %v1096, %v1133
        %v1150 = vadd.f32 %v1097, %v1134
        %v1151 = vadd.f32 %v1098, %v1135
        %v1152 = vadd.f32 %v1099, %v1136
        %v1153 = vadd.f32 %v1100, %v1137
        %v1154 = vadd.f32 %v1101, %v1138
        %v1155 = vadd.f32 %v1102, %v1139
        %v1156 = vadd.f32 %v1103, %v1140
        %v1157 = vadd.f32 %v1104, %v1141
        %v1158 = vld [vmem:[%s892 + $0x5] sm:$0xff]
        %v1159 = vld [vmem:[%s892 + $0xd] sm:$0xff]
        %v1160 = vld [vmem:[%s892 + $0x1d] sm:$0xff]
        %v1161 = vld [vmem:[%s892 + $0x25] sm:$0xff]
        %v1162 = vld [vmem:[%s892 + $0x35] sm:$0xff]
        %v1163 = vld [vmem:[%s892 + $0x3d] sm:$0xff]
        %v1164 = vld [vmem:[%s892 + $0x4d] sm:$0xff]
        %v1165 = vld [vmem:[%s892 + $0x55] sm:$0xff]
        %v1166 = vld [vmem:[%s892 + $0x65] sm:$0xff]
        %v1167 = vld [vmem:[%s892 + $0x6d] sm:$0xff]
        %v1168 = vld [vmem:[%s892 + $0x7d] sm:$0xff]
        %v1169 = vld [vmem:[%s892 + $0x85] sm:$0xff]
        %v1170 = vld [vmem:[%s892 + $0x95] sm:$0xff]
        %v1171 = vld [vmem:[%s892 + $0x9d] sm:$0xff]
        %v1172 = vld [vmem:[%s892 + $0xad] sm:$0xff]
        %v1173 = vld [vmem:[%s892 + $0xb5] sm:$0xff]
        %v1174 = vld [vmem:[%s1 + $0xc] sm:$0x1]
        %v1175 = vlaneseq
        %v1176 = vshrl.u32 %v1175, 7
        %v1177 = vsub.s32 0, %v1176
        %v1178 = vrot.slane %v1174, %v1177
        %v1179 = vmul.f32 %v1158, %v1178
        %v1180 = vmul.f32 %v1159, %v1178
        %v1181 = vmul.f32 %v1160, %v1178
        %v1182 = vmul.f32 %v1161, %v1178
        %v1183 = vmul.f32 %v1162, %v1178
        %v1184 = vmul.f32 %v1163, %v1178
        %v1185 = vmul.f32 %v1164, %v1178
        %v1186 = vmul.f32 %v1165, %v1178
        %v1187 = vmul.f32 %v1166, %v1178
        %v1188 = vmul.f32 %v1167, %v1178
        %v1189 = vmul.f32 %v1168, %v1178
        %v1190 = vmul.f32 %v1169, %v1178
        %v1191 = vmul.f32 %v1170, %v1178
        %v1192 = vmul.f32 %v1171, %v1178
        %v1193 = vmul.f32 %v1172, %v1178
        %v1194 = vmul.f32 %v1173, %v1178
        %v1195 = vadd.f32 %v1142, %v1179
        %v1196 = vadd.f32 %v1143, %v1180
        %v1197 = vadd.f32 %v1144, %v1181
        %v1198 = vadd.f32 %v1145, %v1182
        %v1199 = vadd.f32 %v1146, %v1183
        %v1200 = vadd.f32 %v1147, %v1184
        %v1201 = vadd.f32 %v1148, %v1185
        %v1202 = vadd.f32 %v1149, %v1186
        %v1203 = vadd.f32 %v1150, %v1187
        %v1204 = vadd.f32 %v1151, %v1188
        %v1205 = vadd.f32 %v1152, %v1189
        %v1206 = vadd.f32 %v1153, %v1190
        %v1207 = vadd.f32 %v1154, %v1191
        %v1208 = vadd.f32 %v1155, %v1192
        %v1209 = vadd.f32 %v1156, %v1193
        %v1210 = vadd.f32 %v1157, %v1194
        %v1211 = vld [vmem:[%s892 + $0x6] sm:$0xff]
        %v1212 = vld [vmem:[%s892 + $0xe] sm:$0xff]
        %v1213 = vld [vmem:[%s892 + $0x1e] sm:$0xff]
        %v1214 = vld [vmem:[%s892 + $0x26] sm:$0xff]
        %v1215 = vld [vmem:[%s892 + $0x36] sm:$0xff]
        %v1216 = vld [vmem:[%s892 + $0x3e] sm:$0xff]
        %v1217 = vld [vmem:[%s892 + $0x4e] sm:$0xff]
        %v1218 = vld [vmem:[%s892 + $0x56] sm:$0xff]
        %v1219 = vld [vmem:[%s892 + $0x66] sm:$0xff]
        %v1220 = vld [vmem:[%s892 + $0x6e] sm:$0xff]
        %v1221 = vld [vmem:[%s892 + $0x7e] sm:$0xff]
        %v1222 = vld [vmem:[%s892 + $0x86] sm:$0xff]
        %v1223 = vld [vmem:[%s892 + $0x96] sm:$0xff]
        %v1224 = vld [vmem:[%s892 + $0x9e] sm:$0xff]
        %v1225 = vld [vmem:[%s892 + $0xae] sm:$0xff]
        %v1226 = vld [vmem:[%s892 + $0xb6] sm:$0xff]
        %v1227 = vld [vmem:[%s1 + $0xd] sm:$0x1]
        %v1228 = vlaneseq
        %v1229 = vshrl.u32 %v1228, 7
        %v1230 = vsub.s32 0, %v1229
        %v1231 = vrot.slane %v1227, %v1230
        %v1232 = vmul.f32 %v1211, %v1231
        %v1233 = vmul.f32 %v1212, %v1231
        %v1234 = vmul.f32 %v1213, %v1231
        %v1235 = vmul.f32 %v1214, %v1231
        %v1236 = vmul.f32 %v1215, %v1231
        %v1237 = vmul.f32 %v1216, %v1231
        %v1238 = vmul.f32 %v1217, %v1231
        %v1239 = vmul.f32 %v1218, %v1231
        %v1240 = vmul.f32 %v1219, %v1231
        %v1241 = vmul.f32 %v1220, %v1231
        %v1242 = vmul.f32 %v1221, %v1231
        %v1243 = vmul.f32 %v1222, %v1231
        %v1244 = vmul.f32 %v1223, %v1231
        %v1245 = vmul.f32 %v1224, %v1231
        %v1246 = vmul.f32 %v1225, %v1231
        %v1247 = vmul.f32 %v1226, %v1231
        %v1248 = vadd.f32 %v1195, %v1232
        %v1249 = vadd.f32 %v1196, %v1233
        %v1250 = vadd.f32 %v1197, %v1234
        %v1251 = vadd.f32 %v1198, %v1235
        %v1252 = vadd.f32 %v1199, %v1236
        %v1253 = vadd.f32 %v1200, %v1237
        %v1254 = vadd.f32 %v1201, %v1238
        %v1255 = vadd.f32 %v1202, %v1239
        %v1256 = vadd.f32 %v1203, %v1240
        %v1257 = vadd.f32 %v1204, %v1241
        %v1258 = vadd.f32 %v1205, %v1242
        %v1259 = vadd.f32 %v1206, %v1243
        %v1260 = vadd.f32 %v1207, %v1244
        %v1261 = vadd.f32 %v1208, %v1245
        %v1262 = vadd.f32 %v1209, %v1246
        %v1263 = vadd.f32 %v1210, %v1247
        %s1264 = sadd.s32 %s510, 2
        %s1265 = smul.u32 %s1264, 24
        %s1266 = scalar_lea.vmem [#allocation2], %s1265
        %v1267 = vld [vmem:[%s1266] sm:$0xff]
        %v1268 = vld [vmem:[%s1266 + $0x8] sm:$0xff]
        %v1269 = vld [vmem:[%s1266 + $0x18] sm:$0xff]
        %v1270 = vld [vmem:[%s1266 + $0x20] sm:$0xff]
        %v1271 = vld [vmem:[%s1266 + $0x30] sm:$0xff]
        %v1272 = vld [vmem:[%s1266 + $0x38] sm:$0xff]
        %v1273 = vld [vmem:[%s1266 + $0x48] sm:$0xff]
        %v1274 = vld [vmem:[%s1266 + $0x50] sm:$0xff]
        %v1275 = vld [vmem:[%s1266 + $0x60] sm:$0xff]
        %v1276 = vld [vmem:[%s1266 + $0x68] sm:$0xff]
        %v1277 = vld [vmem:[%s1266 + $0x78] sm:$0xff]
        %v1278 = vld [vmem:[%s1266 + $0x80] sm:$0xff]
        %v1279 = vld [vmem:[%s1266 + $0x90] sm:$0xff]
        %v1280 = vld [vmem:[%s1266 + $0x98] sm:$0xff]
        %v1281 = vld [vmem:[%s1266 + $0xa8] sm:$0xff]
        %v1282 = vld [vmem:[%s1266 + $0xb0] sm:$0xff]
        %v1283 = vld [vmem:[%s1 + $0xe] sm:$0x1]
        %v1284 = vlaneseq
        %v1285 = vshrl.u32 %v1284, 7
        %v1286 = vsub.s32 0, %v1285
        %v1287 = vrot.slane %v1283, %v1286
        %v1288 = vmul.f32 %v1267, %v1287
        %v1289 = vmul.f32 %v1268, %v1287
        %v1290 = vmul.f32 %v1269, %v1287
        %v1291 = vmul.f32 %v1270, %v1287
        %v1292 = vmul.f32 %v1271, %v1287
        %v1293 = vmul.f32 %v1272, %v1287
        %v1294 = vmul.f32 %v1273, %v1287
        %v1295 = vmul.f32 %v1274, %v1287
        %v1296 = vmul.f32 %v1275, %v1287
        %v1297 = vmul.f32 %v1276, %v1287
        %v1298 = vmul.f32 %v1277, %v1287
        %v1299 = vmul.f32 %v1278, %v1287
        %v1300 = vmul.f32 %v1279, %v1287
        %v1301 = vmul.f32 %v1280, %v1287
        %v1302 = vmul.f32 %v1281, %v1287
        %v1303 = vmul.f32 %v1282, %v1287
        %v1304 = vadd.f32 %v1248, %v1288
        %v1305 = vadd.f32 %v1249, %v1289
        %v1306 = vadd.f32 %v1250, %v1290
        %v1307 = vadd.f32 %v1251, %v1291
        %v1308 = vadd.f32 %v1252, %v1292
        %v1309 = vadd.f32 %v1253, %v1293
        %v1310 = vadd.f32 %v1254, %v1294
        %v1311 = vadd.f32 %v1255, %v1295
        %v1312 = vadd.f32 %v1256, %v1296
        %v1313 = vadd.f32 %v1257, %v1297
        %v1314 = vadd.f32 %v1258, %v1298
        %v1315 = vadd.f32 %v1259, %v1299
        %v1316 = vadd.f32 %v1260, %v1300
        %v1317 = vadd.f32 %v1261, %v1301
        %v1318 = vadd.f32 %v1262, %v1302
        %v1319 = vadd.f32 %v1263, %v1303
        %v1320 = vld [vmem:[%s1266 + $0x1] sm:$0xff]
        %v1321 = vld [vmem:[%s1266 + $0x9] sm:$0xff]
        %v1322 = vld [vmem:[%s1266 + $0x19] sm:$0xff]
        %v1323 = vld [vmem:[%s1266 + $0x21] sm:$0xff]
        %v1324 = vld [vmem:[%s1266 + $0x31] sm:$0xff]
        %v1325 = vld [vmem:[%s1266 + $0x39] sm:$0xff]
        %v1326 = vld [vmem:[%s1266 + $0x49] sm:$0xff]
        %v1327 = vld [vmem:[%s1266 + $0x51] sm:$0xff]
        %v1328 = vld [vmem:[%s1266 + $0x61] sm:$0xff]
        %v1329 = vld [vmem:[%s1266 + $0x69] sm:$0xff]
        %v1330 = vld [vmem:[%s1266 + $0x79] sm:$0xff]
        %v1331 = vld [vmem:[%s1266 + $0x81] sm:$0xff]
        %v1332 = vld [vmem:[%s1266 + $0x91] sm:$0xff]
        %v1333 = vld [vmem:[%s1266 + $0x99] sm:$0xff]
        %v1334 = vld [vmem:[%s1266 + $0xa9] sm:$0xff]
        %v1335 = vld [vmem:[%s1266 + $0xb1] sm:$0xff]
        %v1336 = vld [vmem:[%s1 + $0xf] sm:$0x1]
        %v1337 = vlaneseq
        %v1338 = vshrl.u32 %v1337, 7
        %v1339 = vsub.s32 0, %v1338
        %v1340 = vrot.slane %v1336, %v1339
        %v1341 = vmul.f32 %v1320, %v1340
        %v1342 = vmul.f32 %v1321, %v1340
        %v1343 = vmul.f32 %v1322, %v1340
        %v1344 = vmul.f32 %v1323, %v1340
        %v1345 = vmul.f32 %v1324, %v1340
        %v1346 = vmul.f32 %v1325, %v1340
        %v1347 = vmul.f32 %v1326, %v1340
        %v1348 = vmul.f32 %v1327, %v1340
        %v1349 = vmul.f32 %v1328, %v1340
        %v1350 = vmul.f32 %v1329, %v1340
        %v1351 = vmul.f32 %v1330, %v1340
        %v1352 = vmul.f32 %v1331, %v1340
        %v1353 = vmul.f32 %v1332, %v1340
        %v1354 = vmul.f32 %v1333, %v1340
        %v1355 = vmul.f32 %v1334, %v1340
        %v1356 = vmul.f32 %v1335, %v1340
        %v1357 = vadd.f32 %v1304, %v1341
        %v1358 = vadd.f32 %v1305, %v1342
        %v1359 = vadd.f32 %v1306, %v1343
        %v1360 = vadd.f32 %v1307, %v1344
        %v1361 = vadd.f32 %v1308, %v1345
        %v1362 = vadd.f32 %v1309, %v1346
        %v1363 = vadd.f32 %v1310, %v1347
        %v1364 = vadd.f32 %v1311, %v1348
        %v1365 = vadd.f32 %v1312, %v1349
        %v1366 = vadd.f32 %v1313, %v1350
        %v1367 = vadd.f32 %v1314, %v1351
        %v1368 = vadd.f32 %v1315, %v1352
        %v1369 = vadd.f32 %v1316, %v1353
        %v1370 = vadd.f32 %v1317, %v1354
        %v1371 = vadd.f32 %v1318, %v1355
        %v1372 = vadd.f32 %v1319, %v1356
        %v1373 = vld [vmem:[%s1266 + $0x2] sm:$0xff]
        %v1374 = vld [vmem:[%s1266 + $0xa] sm:$0xff]
        %v1375 = vld [vmem:[%s1266 + $0x1a] sm:$0xff]
        %v1376 = vld [vmem:[%s1266 + $0x22] sm:$0xff]
        %v1377 = vld [vmem:[%s1266 + $0x32] sm:$0xff]
        %v1378 = vld [vmem:[%s1266 + $0x3a] sm:$0xff]
        %v1379 = vld [vmem:[%s1266 + $0x4a] sm:$0xff]
        %v1380 = vld [vmem:[%s1266 + $0x52] sm:$0xff]
        %v1381 = vld [vmem:[%s1266 + $0x62] sm:$0xff]
        %v1382 = vld [vmem:[%s1266 + $0x6a] sm:$0xff]
        %v1383 = vld [vmem:[%s1266 + $0x7a] sm:$0xff]
        %v1384 = vld [vmem:[%s1266 + $0x82] sm:$0xff]
        %v1385 = vld [vmem:[%s1266 + $0x92] sm:$0xff]
        %v1386 = vld [vmem:[%s1266 + $0x9a] sm:$0xff]
        %v1387 = vld [vmem:[%s1266 + $0xaa] sm:$0xff]
        %v1388 = vld [vmem:[%s1266 + $0xb2] sm:$0xff]
        %v1389 = vld [vmem:[%s1 + $0x10] sm:$0x1]
        %v1390 = vlaneseq
        %v1391 = vshrl.u32 %v1390, 7
        %v1392 = vsub.s32 0, %v1391
        %v1393 = vrot.slane %v1389, %v1392
        %v1394 = vmul.f32 %v1373, %v1393
        %v1395 = vmul.f32 %v1374, %v1393
        %v1396 = vmul.f32 %v1375, %v1393
        %v1397 = vmul.f32 %v1376, %v1393
        %v1398 = vmul.f32 %v1377, %v1393
        %v1399 = vmul.f32 %v1378, %v1393
        %v1400 = vmul.f32 %v1379, %v1393
        %v1401 = vmul.f32 %v1380, %v1393
        %v1402 = vmul.f32 %v1381, %v1393
        %v1403 = vmul.f32 %v1382, %v1393
        %v1404 = vmul.f32 %v1383, %v1393
        %v1405 = vmul.f32 %v1384, %v1393
        %v1406 = vmul.f32 %v1385, %v1393
        %v1407 = vmul.f32 %v1386, %v1393
        %v1408 = vmul.f32 %v1387, %v1393
        %v1409 = vmul.f32 %v1388, %v1393
        %v1410 = vadd.f32 %v1357, %v1394
        %v1411 = vadd.f32 %v1358, %v1395
        %v1412 = vadd.f32 %v1359, %v1396
        %v1413 = vadd.f32 %v1360, %v1397
        %v1414 = vadd.f32 %v1361, %v1398
        %v1415 = vadd.f32 %v1362, %v1399
        %v1416 = vadd.f32 %v1363, %v1400
        %v1417 = vadd.f32 %v1364, %v1401
        %v1418 = vadd.f32 %v1365, %v1402
        %v1419 = vadd.f32 %v1366, %v1403
        %v1420 = vadd.f32 %v1367, %v1404
        %v1421 = vadd.f32 %v1368, %v1405
        %v1422 = vadd.f32 %v1369, %v1406
        %v1423 = vadd.f32 %v1370, %v1407
        %v1424 = vadd.f32 %v1371, %v1408
        %v1425 = vadd.f32 %v1372, %v1409
        %v1426 = vld [vmem:[%s1266 + $0x3] sm:$0xff]
        %v1427 = vld [vmem:[%s1266 + $0xb] sm:$0xff]
        %v1428 = vld [vmem:[%s1266 + $0x1b] sm:$0xff]
        %v1429 = vld [vmem:[%s1266 + $0x23] sm:$0xff]
        %v1430 = vld [vmem:[%s1266 + $0x33] sm:$0xff]
        %v1431 = vld [vmem:[%s1266 + $0x3b] sm:$0xff]
        %v1432 = vld [vmem:[%s1266 + $0x4b] sm:$0xff]
        %v1433 = vld [vmem:[%s1266 + $0x53] sm:$0xff]
        %v1434 = vld [vmem:[%s1266 + $0x63] sm:$0xff]
        %v1435 = vld [vmem:[%s1266 + $0x6b] sm:$0xff]
        %v1436 = vld [vmem:[%s1266 + $0x7b] sm:$0xff]
        %v1437 = vld [vmem:[%s1266 + $0x83] sm:$0xff]
        %v1438 = vld [vmem:[%s1266 + $0x93] sm:$0xff]
        %v1439 = vld [vmem:[%s1266 + $0x9b] sm:$0xff]
        %v1440 = vld [vmem:[%s1266 + $0xab] sm:$0xff]
        %v1441 = vld [vmem:[%s1266 + $0xb3] sm:$0xff]
        %v1442 = vld [vmem:[%s1 + $0x11] sm:$0x1]
        %v1443 = vlaneseq
        %v1444 = vshrl.u32 %v1443, 7
        %v1445 = vsub.s32 0, %v1444
        %v1446 = vrot.slane %v1442, %v1445
        %v1447 = vmul.f32 %v1426, %v1446
        %v1448 = vmul.f32 %v1427, %v1446
        %v1449 = vmul.f32 %v1428, %v1446
        %v1450 = vmul.f32 %v1429, %v1446
        %v1451 = vmul.f32 %v1430, %v1446
        %v1452 = vmul.f32 %v1431, %v1446
        %v1453 = vmul.f32 %v1432, %v1446
        %v1454 = vmul.f32 %v1433, %v1446
        %v1455 = vmul.f32 %v1434, %v1446
        %v1456 = vmul.f32 %v1435, %v1446
        %v1457 = vmul.f32 %v1436, %v1446
        %v1458 = vmul.f32 %v1437, %v1446
        %v1459 = vmul.f32 %v1438, %v1446
        %v1460 = vmul.f32 %v1439, %v1446
        %v1461 = vmul.f32 %v1440, %v1446
        %v1462 = vmul.f32 %v1441, %v1446
        %v1463 = vadd.f32 %v1410, %v1447
        %v1464 = vadd.f32 %v1411, %v1448
        %v1465 = vadd.f32 %v1412, %v1449
        %v1466 = vadd.f32 %v1413, %v1450
        %v1467 = vadd.f32 %v1414, %v1451
        %v1468 = vadd.f32 %v1415, %v1452
        %v1469 = vadd.f32 %v1416, %v1453
        %v1470 = vadd.f32 %v1417, %v1454
        %v1471 = vadd.f32 %v1418, %v1455
        %v1472 = vadd.f32 %v1419, %v1456
        %v1473 = vadd.f32 %v1420, %v1457
        %v1474 = vadd.f32 %v1421, %v1458
        %v1475 = vadd.f32 %v1422, %v1459
        %v1476 = vadd.f32 %v1423, %v1460
        %v1477 = vadd.f32 %v1424, %v1461
        %v1478 = vadd.f32 %v1425, %v1462
        %v1479 = vld [vmem:[%s1266 + $0x4] sm:$0xff]
        %v1480 = vld [vmem:[%s1266 + $0xc] sm:$0xff]
        %v1481 = vld [vmem:[%s1266 + $0x1c] sm:$0xff]
        %v1482 = vld [vmem:[%s1266 + $0x24] sm:$0xff]
        %v1483 = vld [vmem:[%s1266 + $0x34] sm:$0xff]
        %v1484 = vld [vmem:[%s1266 + $0x3c] sm:$0xff]
        %v1485 = vld [vmem:[%s1266 + $0x4c] sm:$0xff]
        %v1486 = vld [vmem:[%s1266 + $0x54] sm:$0xff]
        %v1487 = vld [vmem:[%s1266 + $0x64] sm:$0xff]
        %v1488 = vld [vmem:[%s1266 + $0x6c] sm:$0xff]
        %v1489 = vld [vmem:[%s1266 + $0x7c] sm:$0xff]
        %v1490 = vld [vmem:[%s1266 + $0x84] sm:$0xff]
        %v1491 = vld [vmem:[%s1266 + $0x94] sm:$0xff]
        %v1492 = vld [vmem:[%s1266 + $0x9c] sm:$0xff]
        %v1493 = vld [vmem:[%s1266 + $0xac] sm:$0xff]
        %v1494 = vld [vmem:[%s1266 + $0xb4] sm:$0xff]
        %v1495 = vld [vmem:[%s1 + $0x12] sm:$0x1]
        %v1496 = vlaneseq
        %v1497 = vshrl.u32 %v1496, 7
        %v1498 = vsub.s32 0, %v1497
        %v1499 = vrot.slane %v1495, %v1498
        %v1500 = vmul.f32 %v1479, %v1499
        %v1501 = vmul.f32 %v1480, %v1499
        %v1502 = vmul.f32 %v1481, %v1499
        %v1503 = vmul.f32 %v1482, %v1499
        %v1504 = vmul.f32 %v1483, %v1499
        %v1505 = vmul.f32 %v1484, %v1499
        %v1506 = vmul.f32 %v1485, %v1499
        %v1507 = vmul.f32 %v1486, %v1499
        %v1508 = vmul.f32 %v1487, %v1499
        %v1509 = vmul.f32 %v1488, %v1499
        %v1510 = vmul.f32 %v1489, %v1499
        %v1511 = vmul.f32 %v1490, %v1499
        %v1512 = vmul.f32 %v1491, %v1499
        %v1513 = vmul.f32 %v1492, %v1499
        %v1514 = vmul.f32 %v1493, %v1499
        %v1515 = vmul.f32 %v1494, %v1499
        %v1516 = vadd.f32 %v1463, %v1500
        %v1517 = vadd.f32 %v1464, %v1501
        %v1518 = vadd.f32 %v1465, %v1502
        %v1519 = vadd.f32 %v1466, %v1503
        %v1520 = vadd.f32 %v1467, %v1504
        %v1521 = vadd.f32 %v1468, %v1505
        %v1522 = vadd.f32 %v1469, %v1506
        %v1523 = vadd.f32 %v1470, %v1507
        %v1524 = vadd.f32 %v1471, %v1508
        %v1525 = vadd.f32 %v1472, %v1509
        %v1526 = vadd.f32 %v1473, %v1510
        %v1527 = vadd.f32 %v1474, %v1511
        %v1528 = vadd.f32 %v1475, %v1512
        %v1529 = vadd.f32 %v1476, %v1513
        %v1530 = vadd.f32 %v1477, %v1514
        %v1531 = vadd.f32 %v1478, %v1515
        %v1532 = vld [vmem:[%s1266 + $0x5] sm:$0xff]
        %v1533 = vld [vmem:[%s1266 + $0xd] sm:$0xff]
        %v1534 = vld [vmem:[%s1266 + $0x1d] sm:$0xff]
        %v1535 = vld [vmem:[%s1266 + $0x25] sm:$0xff]
        %v1536 = vld [vmem:[%s1266 + $0x35] sm:$0xff]
        %v1537 = vld [vmem:[%s1266 + $0x3d] sm:$0xff]
        %v1538 = vld [vmem:[%s1266 + $0x4d] sm:$0xff]
        %v1539 = vld [vmem:[%s1266 + $0x55] sm:$0xff]
        %v1540 = vld [vmem:[%s1266 + $0x65] sm:$0xff]
        %v1541 = vld [vmem:[%s1266 + $0x6d] sm:$0xff]
        %v1542 = vld [vmem:[%s1266 + $0x7d] sm:$0xff]
        %v1543 = vld [vmem:[%s1266 + $0x85] sm:$0xff]
        %v1544 = vld [vmem:[%s1266 + $0x95] sm:$0xff]
        %v1545 = vld [vmem:[%s1266 + $0x9d] sm:$0xff]
        %v1546 = vld [vmem:[%s1266 + $0xad] sm:$0xff]
        %v1547 = vld [vmem:[%s1266 + $0xb5] sm:$0xff]
        %v1548 = vld [vmem:[%s1 + $0x13] sm:$0x1]
        %v1549 = vlaneseq
        %v1550 = vshrl.u32 %v1549, 7
        %v1551 = vsub.s32 0, %v1550
        %v1552 = vrot.slane %v1548, %v1551
        %v1553 = vmul.f32 %v1532, %v1552
        %v1554 = vmul.f32 %v1533, %v1552
        %v1555 = vmul.f32 %v1534, %v1552
        %v1556 = vmul.f32 %v1535, %v1552
        %v1557 = vmul.f32 %v1536, %v1552
        %v1558 = vmul.f32 %v1537, %v1552
        %v1559 = vmul.f32 %v1538, %v1552
        %v1560 = vmul.f32 %v1539, %v1552
        %v1561 = vmul.f32 %v1540, %v1552
        %v1562 = vmul.f32 %v1541, %v1552
        %v1563 = vmul.f32 %v1542, %v1552
        %v1564 = vmul.f32 %v1543, %v1552
        %v1565 = vmul.f32 %v1544, %v1552
        %v1566 = vmul.f32 %v1545, %v1552
        %v1567 = vmul.f32 %v1546, %v1552
        %v1568 = vmul.f32 %v1547, %v1552
        %v1569 = vadd.f32 %v1516, %v1553
        %v1570 = vadd.f32 %v1517, %v1554
        %v1571 = vadd.f32 %v1518, %v1555
        %v1572 = vadd.f32 %v1519, %v1556
        %v1573 = vadd.f32 %v1520, %v1557
        %v1574 = vadd.f32 %v1521, %v1558
        %v1575 = vadd.f32 %v1522, %v1559
        %v1576 = vadd.f32 %v1523, %v1560
        %v1577 = vadd.f32 %v1524, %v1561
        %v1578 = vadd.f32 %v1525, %v1562
        %v1579 = vadd.f32 %v1526, %v1563
        %v1580 = vadd.f32 %v1527, %v1564
        %v1581 = vadd.f32 %v1528, %v1565
        %v1582 = vadd.f32 %v1529, %v1566
        %v1583 = vadd.f32 %v1530, %v1567
        %v1584 = vadd.f32 %v1531, %v1568
        %v1585 = vld [vmem:[%s1266 + $0x6] sm:$0xff]
        %v1586 = vld [vmem:[%s1266 + $0xe] sm:$0xff]
        %v1587 = vld [vmem:[%s1266 + $0x1e] sm:$0xff]
        %v1588 = vld [vmem:[%s1266 + $0x26] sm:$0xff]
        %v1589 = vld [vmem:[%s1266 + $0x36] sm:$0xff]
        %v1590 = vld [vmem:[%s1266 + $0x3e] sm:$0xff]
        %v1591 = vld [vmem:[%s1266 + $0x4e] sm:$0xff]
        %v1592 = vld [vmem:[%s1266 + $0x56] sm:$0xff]
        %v1593 = vld [vmem:[%s1266 + $0x66] sm:$0xff]
        %v1594 = vld [vmem:[%s1266 + $0x6e] sm:$0xff]
        %v1595 = vld [vmem:[%s1266 + $0x7e] sm:$0xff]
        %v1596 = vld [vmem:[%s1266 + $0x86] sm:$0xff]
        %v1597 = vld [vmem:[%s1266 + $0x96] sm:$0xff]
        %v1598 = vld [vmem:[%s1266 + $0x9e] sm:$0xff]
        %v1599 = vld [vmem:[%s1266 + $0xae] sm:$0xff]
        %v1600 = vld [vmem:[%s1266 + $0xb6] sm:$0xff]
        %v1601 = vld [vmem:[%s1 + $0x14] sm:$0x1]
        %v1602 = vlaneseq
        %v1603 = vshrl.u32 %v1602, 7
        %v1604 = vsub.s32 0, %v1603
        %v1605 = vrot.slane %v1601, %v1604
        %v1606 = vmul.f32 %v1585, %v1605
        %v1607 = vmul.f32 %v1586, %v1605
        %v1608 = vmul.f32 %v1587, %v1605
        %v1609 = vmul.f32 %v1588, %v1605
        %v1610 = vmul.f32 %v1589, %v1605
        %v1611 = vmul.f32 %v1590, %v1605
        %v1612 = vmul.f32 %v1591, %v1605
        %v1613 = vmul.f32 %v1592, %v1605
        %v1614 = vmul.f32 %v1593, %v1605
        %v1615 = vmul.f32 %v1594, %v1605
        %v1616 = vmul.f32 %v1595, %v1605
        %v1617 = vmul.f32 %v1596, %v1605
        %v1618 = vmul.f32 %v1597, %v1605
        %v1619 = vmul.f32 %v1598, %v1605
        %v1620 = vmul.f32 %v1599, %v1605
        %v1621 = vmul.f32 %v1600, %v1605
        %v1622 = vadd.f32 %v1569, %v1606
        %v1623 = vadd.f32 %v1570, %v1607
        %v1624 = vadd.f32 %v1571, %v1608
        %v1625 = vadd.f32 %v1572, %v1609
        %v1626 = vadd.f32 %v1573, %v1610
        %v1627 = vadd.f32 %v1574, %v1611
        %v1628 = vadd.f32 %v1575, %v1612
        %v1629 = vadd.f32 %v1576, %v1613
        %v1630 = vadd.f32 %v1577, %v1614
        %v1631 = vadd.f32 %v1578, %v1615
        %v1632 = vadd.f32 %v1579, %v1616
        %v1633 = vadd.f32 %v1580, %v1617
        %v1634 = vadd.f32 %v1581, %v1618
        %v1635 = vadd.f32 %v1582, %v1619
        %v1636 = vadd.f32 %v1583, %v1620
        %v1637 = vadd.f32 %v1584, %v1621
        %s1638 = sadd.s32 %s510, 3
        %s1639 = smul.u32 %s1638, 24
        %s1640 = scalar_lea.vmem [#allocation2], %s1639
        %v1641 = vld [vmem:[%s1640] sm:$0xff]
        %v1642 = vld [vmem:[%s1640 + $0x8] sm:$0xff]
        %v1643 = vld [vmem:[%s1640 + $0x18] sm:$0xff]
        %v1644 = vld [vmem:[%s1640 + $0x20] sm:$0xff]
        %v1645 = vld [vmem:[%s1640 + $0x30] sm:$0xff]
        %v1646 = vld [vmem:[%s1640 + $0x38] sm:$0xff]
        %v1647 = vld [vmem:[%s1640 + $0x48] sm:$0xff]
        %v1648 = vld [vmem:[%s1640 + $0x50] sm:$0xff]
        %v1649 = vld [vmem:[%s1640 + $0x60] sm:$0xff]
        %v1650 = vld [vmem:[%s1640 + $0x68] sm:$0xff]
        %v1651 = vld [vmem:[%s1640 + $0x78] sm:$0xff]
        %v1652 = vld [vmem:[%s1640 + $0x80] sm:$0xff]
        %v1653 = vld [vmem:[%s1640 + $0x90] sm:$0xff]
        %v1654 = vld [vmem:[%s1640 + $0x98] sm:$0xff]
        %v1655 = vld [vmem:[%s1640 + $0xa8] sm:$0xff]
        %v1656 = vld [vmem:[%s1640 + $0xb0] sm:$0xff]
        %v1657 = vld [vmem:[%s1 + $0x15] sm:$0x1]
        %v1658 = vlaneseq
        %v1659 = vshrl.u32 %v1658, 7
        %v1660 = vsub.s32 0, %v1659
        %v1661 = vrot.slane %v1657, %v1660
        %v1662 = vmul.f32 %v1641, %v1661
        %v1663 = vmul.f32 %v1642, %v1661
        %v1664 = vmul.f32 %v1643, %v1661
        %v1665 = vmul.f32 %v1644, %v1661
        %v1666 = vmul.f32 %v1645, %v1661
        %v1667 = vmul.f32 %v1646, %v1661
        %v1668 = vmul.f32 %v1647, %v1661
        %v1669 = vmul.f32 %v1648, %v1661
        %v1670 = vmul.f32 %v1649, %v1661
        %v1671 = vmul.f32 %v1650, %v1661
        %v1672 = vmul.f32 %v1651, %v1661
        %v1673 = vmul.f32 %v1652, %v1661
        %v1674 = vmul.f32 %v1653, %v1661
        %v1675 = vmul.f32 %v1654, %v1661
        %v1676 = vmul.f32 %v1655, %v1661
        %v1677 = vmul.f32 %v1656, %v1661
        %v1678 = vadd.f32 %v1622, %v1662
        %v1679 = vadd.f32 %v1623, %v1663
        %v1680 = vadd.f32 %v1624, %v1664
        %v1681 = vadd.f32 %v1625, %v1665
        %v1682 = vadd.f32 %v1626, %v1666
        %v1683 = vadd.f32 %v1627, %v1667
        %v1684 = vadd.f32 %v1628, %v1668
        %v1685 = vadd.f32 %v1629, %v1669
        %v1686 = vadd.f32 %v1630, %v1670
        %v1687 = vadd.f32 %v1631, %v1671
        %v1688 = vadd.f32 %v1632, %v1672
        %v1689 = vadd.f32 %v1633, %v1673
        %v1690 = vadd.f32 %v1634, %v1674
        %v1691 = vadd.f32 %v1635, %v1675
        %v1692 = vadd.f32 %v1636, %v1676
        %v1693 = vadd.f32 %v1637, %v1677
        %v1694 = vld [vmem:[%s1640 + $0x1] sm:$0xff]
        %v1695 = vld [vmem:[%s1640 + $0x9] sm:$0xff]
        %v1696 = vld [vmem:[%s1640 + $0x19] sm:$0xff]
        %v1697 = vld [vmem:[%s1640 + $0x21] sm:$0xff]
        %v1698 = vld [vmem:[%s1640 + $0x31] sm:$0xff]
        %v1699 = vld [vmem:[%s1640 + $0x39] sm:$0xff]
        %v1700 = vld [vmem:[%s1640 + $0x49] sm:$0xff]
        %v1701 = vld [vmem:[%s1640 + $0x51] sm:$0xff]
        %v1702 = vld [vmem:[%s1640 + $0x61] sm:$0xff]
        %v1703 = vld [vmem:[%s1640 + $0x69] sm:$0xff]
        %v1704 = vld [vmem:[%s1640 + $0x79] sm:$0xff]
        %v1705 = vld [vmem:[%s1640 + $0x81] sm:$0xff]
        %v1706 = vld [vmem:[%s1640 + $0x91] sm:$0xff]
        %v1707 = vld [vmem:[%s1640 + $0x99] sm:$0xff]
        %v1708 = vld [vmem:[%s1640 + $0xa9] sm:$0xff]
        %v1709 = vld [vmem:[%s1640 + $0xb1] sm:$0xff]
        %v1710 = vld [vmem:[%s1 + $0x16] sm:$0x1]
        %v1711 = vlaneseq
        %v1712 = vshrl.u32 %v1711, 7
        %v1713 = vsub.s32 0, %v1712
        %v1714 = vrot.slane %v1710, %v1713
        %v1715 = vmul.f32 %v1694, %v1714
        %v1716 = vmul.f32 %v1695, %v1714
        %v1717 = vmul.f32 %v1696, %v1714
        %v1718 = vmul.f32 %v1697, %v1714
        %v1719 = vmul.f32 %v1698, %v1714
        %v1720 = vmul.f32 %v1699, %v1714
        %v1721 = vmul.f32 %v1700, %v1714
        %v1722 = vmul.f32 %v1701, %v1714
        %v1723 = vmul.f32 %v1702, %v1714
        %v1724 = vmul.f32 %v1703, %v1714
        %v1725 = vmul.f32 %v1704, %v1714
        %v1726 = vmul.f32 %v1705, %v1714
        %v1727 = vmul.f32 %v1706, %v1714
        %v1728 = vmul.f32 %v1707, %v1714
        %v1729 = vmul.f32 %v1708, %v1714
        %v1730 = vmul.f32 %v1709, %v1714
        %v1731 = vadd.f32 %v1678, %v1715
        %v1732 = vadd.f32 %v1679, %v1716
        %v1733 = vadd.f32 %v1680, %v1717
        %v1734 = vadd.f32 %v1681, %v1718
        %v1735 = vadd.f32 %v1682, %v1719
        %v1736 = vadd.f32 %v1683, %v1720
        %v1737 = vadd.f32 %v1684, %v1721
        %v1738 = vadd.f32 %v1685, %v1722
        %v1739 = vadd.f32 %v1686, %v1723
        %v1740 = vadd.f32 %v1687, %v1724
        %v1741 = vadd.f32 %v1688, %v1725
        %v1742 = vadd.f32 %v1689, %v1726
        %v1743 = vadd.f32 %v1690, %v1727
        %v1744 = vadd.f32 %v1691, %v1728
        %v1745 = vadd.f32 %v1692, %v1729
        %v1746 = vadd.f32 %v1693, %v1730
        %v1747 = vld [vmem:[%s1640 + $0x2] sm:$0xff]
        %v1748 = vld [vmem:[%s1640 + $0xa] sm:$0xff]
        %v1749 = vld [vmem:[%s1640 + $0x1a] sm:$0xff]
        %v1750 = vld [vmem:[%s1640 + $0x22] sm:$0xff]
        %v1751 = vld [vmem:[%s1640 + $0x32] sm:$0xff]
        %v1752 = vld [vmem:[%s1640 + $0x3a] sm:$0xff]
        %v1753 = vld [vmem:[%s1640 + $0x4a] sm:$0xff]
        %v1754 = vld [vmem:[%s1640 + $0x52] sm:$0xff]
        %v1755 = vld [vmem:[%s1640 + $0x62] sm:$0xff]
        %v1756 = vld [vmem:[%s1640 + $0x6a] sm:$0xff]
        %v1757 = vld [vmem:[%s1640 + $0x7a] sm:$0xff]
        %v1758 = vld [vmem:[%s1640 + $0x82] sm:$0xff]
        %v1759 = vld [vmem:[%s1640 + $0x92] sm:$0xff]
        %v1760 = vld [vmem:[%s1640 + $0x9a] sm:$0xff]
        %v1761 = vld [vmem:[%s1640 + $0xaa] sm:$0xff]
        %v1762 = vld [vmem:[%s1640 + $0xb2] sm:$0xff]
        %v1763 = vld [vmem:[%s1 + $0x17] sm:$0x1]
        %v1764 = vlaneseq
        %v1765 = vshrl.u32 %v1764, 7
        %v1766 = vsub.s32 0, %v1765
        %v1767 = vrot.slane %v1763, %v1766
        %v1768 = vmul.f32 %v1747, %v1767
        %v1769 = vmul.f32 %v1748, %v1767
        %v1770 = vmul.f32 %v1749, %v1767
        %v1771 = vmul.f32 %v1750, %v1767
        %v1772 = vmul.f32 %v1751, %v1767
        %v1773 = vmul.f32 %v1752, %v1767
        %v1774 = vmul.f32 %v1753, %v1767
        %v1775 = vmul.f32 %v1754, %v1767
        %v1776 = vmul.f32 %v1755, %v1767
        %v1777 = vmul.f32 %v1756, %v1767
        %v1778 = vmul.f32 %v1757, %v1767
        %v1779 = vmul.f32 %v1758, %v1767
        %v1780 = vmul.f32 %v1759, %v1767
        %v1781 = vmul.f32 %v1760, %v1767
        %v1782 = vmul.f32 %v1761, %v1767
        %v1783 = vmul.f32 %v1762, %v1767
        %v1784 = vadd.f32 %v1731, %v1768
        %v1785 = vadd.f32 %v1732, %v1769
        %v1786 = vadd.f32 %v1733, %v1770
        %v1787 = vadd.f32 %v1734, %v1771
        %v1788 = vadd.f32 %v1735, %v1772
        %v1789 = vadd.f32 %v1736, %v1773
        %v1790 = vadd.f32 %v1737, %v1774
        %v1791 = vadd.f32 %v1738, %v1775
        %v1792 = vadd.f32 %v1739, %v1776
        %v1793 = vadd.f32 %v1740, %v1777
        %v1794 = vadd.f32 %v1741, %v1778
        %v1795 = vadd.f32 %v1742, %v1779
        %v1796 = vadd.f32 %v1743, %v1780
        %v1797 = vadd.f32 %v1744, %v1781
        %v1798 = vadd.f32 %v1745, %v1782
        %v1799 = vadd.f32 %v1746, %v1783
        %v1800 = vld [vmem:[%s1640 + $0x3] sm:$0xff]
        %v1801 = vld [vmem:[%s1640 + $0xb] sm:$0xff]
        %v1802 = vld [vmem:[%s1640 + $0x1b] sm:$0xff]
        %v1803 = vld [vmem:[%s1640 + $0x23] sm:$0xff]
        %v1804 = vld [vmem:[%s1640 + $0x33] sm:$0xff]
        %v1805 = vld [vmem:[%s1640 + $0x3b] sm:$0xff]
        %v1806 = vld [vmem:[%s1640 + $0x4b] sm:$0xff]
        %v1807 = vld [vmem:[%s1640 + $0x53] sm:$0xff]
        %v1808 = vld [vmem:[%s1640 + $0x63] sm:$0xff]
        %v1809 = vld [vmem:[%s1640 + $0x6b] sm:$0xff]
        %v1810 = vld [vmem:[%s1640 + $0x7b] sm:$0xff]
        %v1811 = vld [vmem:[%s1640 + $0x83] sm:$0xff]
        %v1812 = vld [vmem:[%s1640 + $0x93] sm:$0xff]
        %v1813 = vld [vmem:[%s1640 + $0x9b] sm:$0xff]
        %v1814 = vld [vmem:[%s1640 + $0xab] sm:$0xff]
        %v1815 = vld [vmem:[%s1640 + $0xb3] sm:$0xff]
        %v1816 = vld [vmem:[%s1 + $0x18] sm:$0x1]
        %v1817 = vlaneseq
        %v1818 = vshrl.u32 %v1817, 7
        %v1819 = vsub.s32 0, %v1818
        %v1820 = vrot.slane %v1816, %v1819
        %v1821 = vmul.f32 %v1800, %v1820
        %v1822 = vmul.f32 %v1801, %v1820
        %v1823 = vmul.f32 %v1802, %v1820
        %v1824 = vmul.f32 %v1803, %v1820
        %v1825 = vmul.f32 %v1804, %v1820
        %v1826 = vmul.f32 %v1805, %v1820
        %v1827 = vmul.f32 %v1806, %v1820
        %v1828 = vmul.f32 %v1807, %v1820
        %v1829 = vmul.f32 %v1808, %v1820
        %v1830 = vmul.f32 %v1809, %v1820
        %v1831 = vmul.f32 %v1810, %v1820
        %v1832 = vmul.f32 %v1811, %v1820
        %v1833 = vmul.f32 %v1812, %v1820
        %v1834 = vmul.f32 %v1813, %v1820
        %v1835 = vmul.f32 %v1814, %v1820
        %v1836 = vmul.f32 %v1815, %v1820
        %v1837 = vadd.f32 %v1784, %v1821
        %v1838 = vadd.f32 %v1785, %v1822
        %v1839 = vadd.f32 %v1786, %v1823
        %v1840 = vadd.f32 %v1787, %v1824
        %v1841 = vadd.f32 %v1788, %v1825
        %v1842 = vadd.f32 %v1789, %v1826
        %v1843 = vadd.f32 %v1790, %v1827
        %v1844 = vadd.f32 %v1791, %v1828
        %v1845 = vadd.f32 %v1792, %v1829
        %v1846 = vadd.f32 %v1793, %v1830
        %v1847 = vadd.f32 %v1794, %v1831
        %v1848 = vadd.f32 %v1795, %v1832
        %v1849 = vadd.f32 %v1796, %v1833
        %v1850 = vadd.f32 %v1797, %v1834
        %v1851 = vadd.f32 %v1798, %v1835
        %v1852 = vadd.f32 %v1799, %v1836
        %v1853 = vld [vmem:[%s1640 + $0x4] sm:$0xff]
        %v1854 = vld [vmem:[%s1640 + $0xc] sm:$0xff]
        %v1855 = vld [vmem:[%s1640 + $0x1c] sm:$0xff]
        %v1856 = vld [vmem:[%s1640 + $0x24] sm:$0xff]
        %v1857 = vld [vmem:[%s1640 + $0x34] sm:$0xff]
        %v1858 = vld [vmem:[%s1640 + $0x3c] sm:$0xff]
        %v1859 = vld [vmem:[%s1640 + $0x4c] sm:$0xff]
        %v1860 = vld [vmem:[%s1640 + $0x54] sm:$0xff]
        %v1861 = vld [vmem:[%s1640 + $0x64] sm:$0xff]
        %v1862 = vld [vmem:[%s1640 + $0x6c] sm:$0xff]
        %v1863 = vld [vmem:[%s1640 + $0x7c] sm:$0xff]
        %v1864 = vld [vmem:[%s1640 + $0x84] sm:$0xff]
        %v1865 = vld [vmem:[%s1640 + $0x94] sm:$0xff]
        %v1866 = vld [vmem:[%s1640 + $0x9c] sm:$0xff]
        %v1867 = vld [vmem:[%s1640 + $0xac] sm:$0xff]
        %v1868 = vld [vmem:[%s1640 + $0xb4] sm:$0xff]
        %v1869 = vld [vmem:[%s1 + $0x19] sm:$0x1]
        %v1870 = vlaneseq
        %v1871 = vshrl.u32 %v1870, 7
        %v1872 = vsub.s32 0, %v1871
        %v1873 = vrot.slane %v1869, %v1872
        %v1874 = vmul.f32 %v1853, %v1873
        %v1875 = vmul.f32 %v1854, %v1873
        %v1876 = vmul.f32 %v1855, %v1873
        %v1877 = vmul.f32 %v1856, %v1873
        %v1878 = vmul.f32 %v1857, %v1873
        %v1879 = vmul.f32 %v1858, %v1873
        %v1880 = vmul.f32 %v1859, %v1873
        %v1881 = vmul.f32 %v1860, %v1873
        %v1882 = vmul.f32 %v1861, %v1873
        %v1883 = vmul.f32 %v1862, %v1873
        %v1884 = vmul.f32 %v1863, %v1873
        %v1885 = vmul.f32 %v1864, %v1873
        %v1886 = vmul.f32 %v1865, %v1873
        %v1887 = vmul.f32 %v1866, %v1873
        %v1888 = vmul.f32 %v1867, %v1873
        %v1889 = vmul.f32 %v1868, %v1873
        %v1890 = vadd.f32 %v1837, %v1874
        %v1891 = vadd.f32 %v1838, %v1875
        %v1892 = vadd.f32 %v1839, %v1876
        %v1893 = vadd.f32 %v1840, %v1877
        %v1894 = vadd.f32 %v1841, %v1878
        %v1895 = vadd.f32 %v1842, %v1879
        %v1896 = vadd.f32 %v1843, %v1880
        %v1897 = vadd.f32 %v1844, %v1881
        %v1898 = vadd.f32 %v1845, %v1882
        %v1899 = vadd.f32 %v1846, %v1883
        %v1900 = vadd.f32 %v1847, %v1884
        %v1901 = vadd.f32 %v1848, %v1885
        %v1902 = vadd.f32 %v1849, %v1886
        %v1903 = vadd.f32 %v1850, %v1887
        %v1904 = vadd.f32 %v1851, %v1888
        %v1905 = vadd.f32 %v1852, %v1889
        %v1906 = vld [vmem:[%s1640 + $0x5] sm:$0xff]
        %v1907 = vld [vmem:[%s1640 + $0xd] sm:$0xff]
        %v1908 = vld [vmem:[%s1640 + $0x1d] sm:$0xff]
        %v1909 = vld [vmem:[%s1640 + $0x25] sm:$0xff]
        %v1910 = vld [vmem:[%s1640 + $0x35] sm:$0xff]
        %v1911 = vld [vmem:[%s1640 + $0x3d] sm:$0xff]
        %v1912 = vld [vmem:[%s1640 + $0x4d] sm:$0xff]
        %v1913 = vld [vmem:[%s1640 + $0x55] sm:$0xff]
        %v1914 = vld [vmem:[%s1640 + $0x65] sm:$0xff]
        %v1915 = vld [vmem:[%s1640 + $0x6d] sm:$0xff]
        %v1916 = vld [vmem:[%s1640 + $0x7d] sm:$0xff]
        %v1917 = vld [vmem:[%s1640 + $0x85] sm:$0xff]
        %v1918 = vld [vmem:[%s1640 + $0x95] sm:$0xff]
        %v1919 = vld [vmem:[%s1640 + $0x9d] sm:$0xff]
        %v1920 = vld [vmem:[%s1640 + $0xad] sm:$0xff]
        %v1921 = vld [vmem:[%s1640 + $0xb5] sm:$0xff]
        %v1922 = vld [vmem:[%s1 + $0x1a] sm:$0x1]
        %v1923 = vlaneseq
        %v1924 = vshrl.u32 %v1923, 7
        %v1925 = vsub.s32 0, %v1924
        %v1926 = vrot.slane %v1922, %v1925
        %v1927 = vmul.f32 %v1906, %v1926
        %v1928 = vmul.f32 %v1907, %v1926
        %v1929 = vmul.f32 %v1908, %v1926
        %v1930 = vmul.f32 %v1909, %v1926
        %v1931 = vmul.f32 %v1910, %v1926
        %v1932 = vmul.f32 %v1911, %v1926
        %v1933 = vmul.f32 %v1912, %v1926
        %v1934 = vmul.f32 %v1913, %v1926
        %v1935 = vmul.f32 %v1914, %v1926
        %v1936 = vmul.f32 %v1915, %v1926
        %v1937 = vmul.f32 %v1916, %v1926
        %v1938 = vmul.f32 %v1917, %v1926
        %v1939 = vmul.f32 %v1918, %v1926
        %v1940 = vmul.f32 %v1919, %v1926
        %v1941 = vmul.f32 %v1920, %v1926
        %v1942 = vmul.f32 %v1921, %v1926
        %v1943 = vadd.f32 %v1890, %v1927
        %v1944 = vadd.f32 %v1891, %v1928
        %v1945 = vadd.f32 %v1892, %v1929
        %v1946 = vadd.f32 %v1893, %v1930
        %v1947 = vadd.f32 %v1894, %v1931
        %v1948 = vadd.f32 %v1895, %v1932
        %v1949 = vadd.f32 %v1896, %v1933
        %v1950 = vadd.f32 %v1897, %v1934
        %v1951 = vadd.f32 %v1898, %v1935
        %v1952 = vadd.f32 %v1899, %v1936
        %v1953 = vadd.f32 %v1900, %v1937
        %v1954 = vadd.f32 %v1901, %v1938
        %v1955 = vadd.f32 %v1902, %v1939
        %v1956 = vadd.f32 %v1903, %v1940
        %v1957 = vadd.f32 %v1904, %v1941
        %v1958 = vadd.f32 %v1905, %v1942
        %v1959 = vld [vmem:[%s1640 + $0x6] sm:$0xff]
        %v1960 = vld [vmem:[%s1640 + $0xe] sm:$0xff]
        %v1961 = vld [vmem:[%s1640 + $0x1e] sm:$0xff]
        %v1962 = vld [vmem:[%s1640 + $0x26] sm:$0xff]
        %v1963 = vld [vmem:[%s1640 + $0x36] sm:$0xff]
        %v1964 = vld [vmem:[%s1640 + $0x3e] sm:$0xff]
        %v1965 = vld [vmem:[%s1640 + $0x4e] sm:$0xff]
        %v1966 = vld [vmem:[%s1640 + $0x56] sm:$0xff]
        %v1967 = vld [vmem:[%s1640 + $0x66] sm:$0xff]
        %v1968 = vld [vmem:[%s1640 + $0x6e] sm:$0xff]
        %v1969 = vld [vmem:[%s1640 + $0x7e] sm:$0xff]
        %v1970 = vld [vmem:[%s1640 + $0x86] sm:$0xff]
        %v1971 = vld [vmem:[%s1640 + $0x96] sm:$0xff]
        %v1972 = vld [vmem:[%s1640 + $0x9e] sm:$0xff]
        %v1973 = vld [vmem:[%s1640 + $0xae] sm:$0xff]
        %v1974 = vld [vmem:[%s1640 + $0xb6] sm:$0xff]
        %v1975 = vld [vmem:[%s1 + $0x1b] sm:$0x1]
        %v1976 = vlaneseq
        %v1977 = vshrl.u32 %v1976, 7
        %v1978 = vsub.s32 0, %v1977
        %v1979 = vrot.slane %v1975, %v1978
        %v1980 = vmul.f32 %v1959, %v1979
        %v1981 = vmul.f32 %v1960, %v1979
        %v1982 = vmul.f32 %v1961, %v1979
        %v1983 = vmul.f32 %v1962, %v1979
        %v1984 = vmul.f32 %v1963, %v1979
        %v1985 = vmul.f32 %v1964, %v1979
        %v1986 = vmul.f32 %v1965, %v1979
        %v1987 = vmul.f32 %v1966, %v1979
        %v1988 = vmul.f32 %v1967, %v1979
        %v1989 = vmul.f32 %v1968, %v1979
        %v1990 = vmul.f32 %v1969, %v1979
        %v1991 = vmul.f32 %v1970, %v1979
        %v1992 = vmul.f32 %v1971, %v1979
        %v1993 = vmul.f32 %v1972, %v1979
        %v1994 = vmul.f32 %v1973, %v1979
        %v1995 = vmul.f32 %v1974, %v1979
        %v1996 = vadd.f32 %v1943, %v1980
        %v1997 = vadd.f32 %v1944, %v1981
        %v1998 = vadd.f32 %v1945, %v1982
        %v1999 = vadd.f32 %v1946, %v1983
        %v2000 = vadd.f32 %v1947, %v1984
        %v2001 = vadd.f32 %v1948, %v1985
        %v2002 = vadd.f32 %v1949, %v1986
        %v2003 = vadd.f32 %v1950, %v1987
        %v2004 = vadd.f32 %v1951, %v1988
        %v2005 = vadd.f32 %v1952, %v1989
        %v2006 = vadd.f32 %v1953, %v1990
        %v2007 = vadd.f32 %v1954, %v1991
        %v2008 = vadd.f32 %v1955, %v1992
        %v2009 = vadd.f32 %v1956, %v1993
        %v2010 = vadd.f32 %v1957, %v1994
        %v2011 = vadd.f32 %v1958, %v1995
        %s2012 = sadd.s32 %s510, 4
        %s2013 = smul.u32 %s2012, 24
        %s2014 = scalar_lea.vmem [#allocation2], %s2013
        %v2015 = vld [vmem:[%s2014] sm:$0xff]
        %v2016 = vld [vmem:[%s2014 + $0x8] sm:$0xff]
        %v2017 = vld [vmem:[%s2014 + $0x18] sm:$0xff]
        %v2018 = vld [vmem:[%s2014 + $0x20] sm:$0xff]
        %v2019 = vld [vmem:[%s2014 + $0x30] sm:$0xff]
        %v2020 = vld [vmem:[%s2014 + $0x38] sm:$0xff]
        %v2021 = vld [vmem:[%s2014 + $0x48] sm:$0xff]
        %v2022 = vld [vmem:[%s2014 + $0x50] sm:$0xff]
        %v2023 = vld [vmem:[%s2014 + $0x60] sm:$0xff]
        %v2024 = vld [vmem:[%s2014 + $0x68] sm:$0xff]
        %v2025 = vld [vmem:[%s2014 + $0x78] sm:$0xff]
        %v2026 = vld [vmem:[%s2014 + $0x80] sm:$0xff]
        %v2027 = vld [vmem:[%s2014 + $0x90] sm:$0xff]
        %v2028 = vld [vmem:[%s2014 + $0x98] sm:$0xff]
        %v2029 = vld [vmem:[%s2014 + $0xa8] sm:$0xff]
        %v2030 = vld [vmem:[%s2014 + $0xb0] sm:$0xff]
        %v2031 = vld [vmem:[%s1 + $0x1c] sm:$0x1]
        %v2032 = vlaneseq
        %v2033 = vshrl.u32 %v2032, 7
        %v2034 = vsub.s32 0, %v2033
        %v2035 = vrot.slane %v2031, %v2034
        %v2036 = vmul.f32 %v2015, %v2035
        %v2037 = vmul.f32 %v2016, %v2035
        %v2038 = vmul.f32 %v2017, %v2035
        %v2039 = vmul.f32 %v2018, %v2035
        %v2040 = vmul.f32 %v2019, %v2035
        %v2041 = vmul.f32 %v2020, %v2035
        %v2042 = vmul.f32 %v2021, %v2035
        %v2043 = vmul.f32 %v2022, %v2035
        %v2044 = vmul.f32 %v2023, %v2035
        %v2045 = vmul.f32 %v2024, %v2035
        %v2046 = vmul.f32 %v2025, %v2035
        %v2047 = vmul.f32 %v2026, %v2035
        %v2048 = vmul.f32 %v2027, %v2035
        %v2049 = vmul.f32 %v2028, %v2035
        %v2050 = vmul.f32 %v2029, %v2035
        %v2051 = vmul.f32 %v2030, %v2035
        %v2052 = vadd.f32 %v1996, %v2036
        %v2053 = vadd.f32 %v1997, %v2037
        %v2054 = vadd.f32 %v1998, %v2038
        %v2055 = vadd.f32 %v1999, %v2039
        %v2056 = vadd.f32 %v2000, %v2040
        %v2057 = vadd.f32 %v2001, %v2041
        %v2058 = vadd.f32 %v2002, %v2042
        %v2059 = vadd.f32 %v2003, %v2043
        %v2060 = vadd.f32 %v2004, %v2044
        %v2061 = vadd.f32 %v2005, %v2045
        %v2062 = vadd.f32 %v2006, %v2046
        %v2063 = vadd.f32 %v2007, %v2047
        %v2064 = vadd.f32 %v2008, %v2048
        %v2065 = vadd.f32 %v2009, %v2049
        %v2066 = vadd.f32 %v2010, %v2050
        %v2067 = vadd.f32 %v2011, %v2051
        %v2068 = vld [vmem:[%s2014 + $0x1] sm:$0xff]
        %v2069 = vld [vmem:[%s2014 + $0x9] sm:$0xff]
        %v2070 = vld [vmem:[%s2014 + $0x19] sm:$0xff]
        %v2071 = vld [vmem:[%s2014 + $0x21] sm:$0xff]
        %v2072 = vld [vmem:[%s2014 + $0x31] sm:$0xff]
        %v2073 = vld [vmem:[%s2014 + $0x39] sm:$0xff]
        %v2074 = vld [vmem:[%s2014 + $0x49] sm:$0xff]
        %v2075 = vld [vmem:[%s2014 + $0x51] sm:$0xff]
        %v2076 = vld [vmem:[%s2014 + $0x61] sm:$0xff]
        %v2077 = vld [vmem:[%s2014 + $0x69] sm:$0xff]
        %v2078 = vld [vmem:[%s2014 + $0x79] sm:$0xff]
        %v2079 = vld [vmem:[%s2014 + $0x81] sm:$0xff]
        %v2080 = vld [vmem:[%s2014 + $0x91] sm:$0xff]
        %v2081 = vld [vmem:[%s2014 + $0x99] sm:$0xff]
        %v2082 = vld [vmem:[%s2014 + $0xa9] sm:$0xff]
        %v2083 = vld [vmem:[%s2014 + $0xb1] sm:$0xff]
        %v2084 = vld [vmem:[%s1 + $0x1d] sm:$0x1]
        %v2085 = vlaneseq
        %v2086 = vshrl.u32 %v2085, 7
        %v2087 = vsub.s32 0, %v2086
        %v2088 = vrot.slane %v2084, %v2087
        %v2089 = vmul.f32 %v2068, %v2088
        %v2090 = vmul.f32 %v2069, %v2088
        %v2091 = vmul.f32 %v2070, %v2088
        %v2092 = vmul.f32 %v2071, %v2088
        %v2093 = vmul.f32 %v2072, %v2088
        %v2094 = vmul.f32 %v2073, %v2088
        %v2095 = vmul.f32 %v2074, %v2088
        %v2096 = vmul.f32 %v2075, %v2088
        %v2097 = vmul.f32 %v2076, %v2088
        %v2098 = vmul.f32 %v2077, %v2088
        %v2099 = vmul.f32 %v2078, %v2088
        %v2100 = vmul.f32 %v2079, %v2088
        %v2101 = vmul.f32 %v2080, %v2088
        %v2102 = vmul.f32 %v2081, %v2088
        %v2103 = vmul.f32 %v2082, %v2088
        %v2104 = vmul.f32 %v2083, %v2088
        %v2105 = vadd.f32 %v2052, %v2089
        %v2106 = vadd.f32 %v2053, %v2090
        %v2107 = vadd.f32 %v2054, %v2091
        %v2108 = vadd.f32 %v2055, %v2092
        %v2109 = vadd.f32 %v2056, %v2093
        %v2110 = vadd.f32 %v2057, %v2094
        %v2111 = vadd.f32 %v2058, %v2095
        %v2112 = vadd.f32 %v2059, %v2096
        %v2113 = vadd.f32 %v2060, %v2097
        %v2114 = vadd.f32 %v2061, %v2098
        %v2115 = vadd.f32 %v2062, %v2099
        %v2116 = vadd.f32 %v2063, %v2100
        %v2117 = vadd.f32 %v2064, %v2101
        %v2118 = vadd.f32 %v2065, %v2102
        %v2119 = vadd.f32 %v2066, %v2103
        %v2120 = vadd.f32 %v2067, %v2104
        %v2121 = vld [vmem:[%s2014 + $0x2] sm:$0xff]
        %v2122 = vld [vmem:[%s2014 + $0xa] sm:$0xff]
        %v2123 = vld [vmem:[%s2014 + $0x1a] sm:$0xff]
        %v2124 = vld [vmem:[%s2014 + $0x22] sm:$0xff]
        %v2125 = vld [vmem:[%s2014 + $0x32] sm:$0xff]
        %v2126 = vld [vmem:[%s2014 + $0x3a] sm:$0xff]
        %v2127 = vld [vmem:[%s2014 + $0x4a] sm:$0xff]
        %v2128 = vld [vmem:[%s2014 + $0x52] sm:$0xff]
        %v2129 = vld [vmem:[%s2014 + $0x62] sm:$0xff]
        %v2130 = vld [vmem:[%s2014 + $0x6a] sm:$0xff]
        %v2131 = vld [vmem:[%s2014 + $0x7a] sm:$0xff]
        %v2132 = vld [vmem:[%s2014 + $0x82] sm:$0xff]
        %v2133 = vld [vmem:[%s2014 + $0x92] sm:$0xff]
        %v2134 = vld [vmem:[%s2014 + $0x9a] sm:$0xff]
        %v2135 = vld [vmem:[%s2014 + $0xaa] sm:$0xff]
        %v2136 = vld [vmem:[%s2014 + $0xb2] sm:$0xff]
        %v2137 = vld [vmem:[%s1 + $0x1e] sm:$0x1]
        %v2138 = vlaneseq
        %v2139 = vshrl.u32 %v2138, 7
        %v2140 = vsub.s32 0, %v2139
        %v2141 = vrot.slane %v2137, %v2140
        %v2142 = vmul.f32 %v2121, %v2141
        %v2143 = vmul.f32 %v2122, %v2141
        %v2144 = vmul.f32 %v2123, %v2141
        %v2145 = vmul.f32 %v2124, %v2141
        %v2146 = vmul.f32 %v2125, %v2141
        %v2147 = vmul.f32 %v2126, %v2141
        %v2148 = vmul.f32 %v2127, %v2141
        %v2149 = vmul.f32 %v2128, %v2141
        %v2150 = vmul.f32 %v2129, %v2141
        %v2151 = vmul.f32 %v2130, %v2141
        %v2152 = vmul.f32 %v2131, %v2141
        %v2153 = vmul.f32 %v2132, %v2141
        %v2154 = vmul.f32 %v2133, %v2141
        %v2155 = vmul.f32 %v2134, %v2141
        %v2156 = vmul.f32 %v2135, %v2141
        %v2157 = vmul.f32 %v2136, %v2141
        %v2158 = vadd.f32 %v2105, %v2142
        %v2159 = vadd.f32 %v2106, %v2143
        %v2160 = vadd.f32 %v2107, %v2144
        %v2161 = vadd.f32 %v2108, %v2145
        %v2162 = vadd.f32 %v2109, %v2146
        %v2163 = vadd.f32 %v2110, %v2147
        %v2164 = vadd.f32 %v2111, %v2148
        %v2165 = vadd.f32 %v2112, %v2149
        %v2166 = vadd.f32 %v2113, %v2150
        %v2167 = vadd.f32 %v2114, %v2151
        %v2168 = vadd.f32 %v2115, %v2152
        %v2169 = vadd.f32 %v2116, %v2153
        %v2170 = vadd.f32 %v2117, %v2154
        %v2171 = vadd.f32 %v2118, %v2155
        %v2172 = vadd.f32 %v2119, %v2156
        %v2173 = vadd.f32 %v2120, %v2157
        %v2174 = vld [vmem:[%s2014 + $0x3] sm:$0xff]
        %v2175 = vld [vmem:[%s2014 + $0xb] sm:$0xff]
        %v2176 = vld [vmem:[%s2014 + $0x1b] sm:$0xff]
        %v2177 = vld [vmem:[%s2014 + $0x23] sm:$0xff]
        %v2178 = vld [vmem:[%s2014 + $0x33] sm:$0xff]
        %v2179 = vld [vmem:[%s2014 + $0x3b] sm:$0xff]
        %v2180 = vld [vmem:[%s2014 + $0x4b] sm:$0xff]
        %v2181 = vld [vmem:[%s2014 + $0x53] sm:$0xff]
        %v2182 = vld [vmem:[%s2014 + $0x63] sm:$0xff]
        %v2183 = vld [vmem:[%s2014 + $0x6b] sm:$0xff]
        %v2184 = vld [vmem:[%s2014 + $0x7b] sm:$0xff]
        %v2185 = vld [vmem:[%s2014 + $0x83] sm:$0xff]
        %v2186 = vld [vmem:[%s2014 + $0x93] sm:$0xff]
        %v2187 = vld [vmem:[%s2014 + $0x9b] sm:$0xff]
        %v2188 = vld [vmem:[%s2014 + $0xab] sm:$0xff]
        %v2189 = vld [vmem:[%s2014 + $0xb3] sm:$0xff]
        %v2190 = vld [vmem:[%s1 + $0x1f] sm:$0x1]
        %v2191 = vlaneseq
        %v2192 = vshrl.u32 %v2191, 7
        %v2193 = vsub.s32 0, %v2192
        %v2194 = vrot.slane %v2190, %v2193
        %v2195 = vmul.f32 %v2174, %v2194
        %v2196 = vmul.f32 %v2175, %v2194
        %v2197 = vmul.f32 %v2176, %v2194
        %v2198 = vmul.f32 %v2177, %v2194
        %v2199 = vmul.f32 %v2178, %v2194
        %v2200 = vmul.f32 %v2179, %v2194
        %v2201 = vmul.f32 %v2180, %v2194
        %v2202 = vmul.f32 %v2181, %v2194
        %v2203 = vmul.f32 %v2182, %v2194
        %v2204 = vmul.f32 %v2183, %v2194
        %v2205 = vmul.f32 %v2184, %v2194
        %v2206 = vmul.f32 %v2185, %v2194
        %v2207 = vmul.f32 %v2186, %v2194
        %v2208 = vmul.f32 %v2187, %v2194
        %v2209 = vmul.f32 %v2188, %v2194
        %v2210 = vmul.f32 %v2189, %v2194
        %v2211 = vadd.f32 %v2158, %v2195
        %v2212 = vadd.f32 %v2159, %v2196
        %v2213 = vadd.f32 %v2160, %v2197
        %v2214 = vadd.f32 %v2161, %v2198
        %v2215 = vadd.f32 %v2162, %v2199
        %v2216 = vadd.f32 %v2163, %v2200
        %v2217 = vadd.f32 %v2164, %v2201
        %v2218 = vadd.f32 %v2165, %v2202
        %v2219 = vadd.f32 %v2166, %v2203
        %v2220 = vadd.f32 %v2167, %v2204
        %v2221 = vadd.f32 %v2168, %v2205
        %v2222 = vadd.f32 %v2169, %v2206
        %v2223 = vadd.f32 %v2170, %v2207
        %v2224 = vadd.f32 %v2171, %v2208
        %v2225 = vadd.f32 %v2172, %v2209
        %v2226 = vadd.f32 %v2173, %v2210
        %v2227 = vld [vmem:[%s2014 + $0x4] sm:$0xff]
        %v2228 = vld [vmem:[%s2014 + $0xc] sm:$0xff]
        %v2229 = vld [vmem:[%s2014 + $0x1c] sm:$0xff]
        %v2230 = vld [vmem:[%s2014 + $0x24] sm:$0xff]
        %v2231 = vld [vmem:[%s2014 + $0x34] sm:$0xff]
        %v2232 = vld [vmem:[%s2014 + $0x3c] sm:$0xff]
        %v2233 = vld [vmem:[%s2014 + $0x4c] sm:$0xff]
        %v2234 = vld [vmem:[%s2014 + $0x54] sm:$0xff]
        %v2235 = vld [vmem:[%s2014 + $0x64] sm:$0xff]
        %v2236 = vld [vmem:[%s2014 + $0x6c] sm:$0xff]
        %v2237 = vld [vmem:[%s2014 + $0x7c] sm:$0xff]
        %v2238 = vld [vmem:[%s2014 + $0x84] sm:$0xff]
        %v2239 = vld [vmem:[%s2014 + $0x94] sm:$0xff]
        %v2240 = vld [vmem:[%s2014 + $0x9c] sm:$0xff]
        %v2241 = vld [vmem:[%s2014 + $0xac] sm:$0xff]
        %v2242 = vld [vmem:[%s2014 + $0xb4] sm:$0xff]
        %v2243 = vld [vmem:[%s1 + $0x20] sm:$0x1]
        %v2244 = vlaneseq
        %v2245 = vshrl.u32 %v2244, 7
        %v2246 = vsub.s32 0, %v2245
        %v2247 = vrot.slane %v2243, %v2246
        %v2248 = vmul.f32 %v2227, %v2247
        %v2249 = vmul.f32 %v2228, %v2247
        %v2250 = vmul.f32 %v2229, %v2247
        %v2251 = vmul.f32 %v2230, %v2247
        %v2252 = vmul.f32 %v2231, %v2247
        %v2253 = vmul.f32 %v2232, %v2247
        %v2254 = vmul.f32 %v2233, %v2247
        %v2255 = vmul.f32 %v2234, %v2247
        %v2256 = vmul.f32 %v2235, %v2247
        %v2257 = vmul.f32 %v2236, %v2247
        %v2258 = vmul.f32 %v2237, %v2247
        %v2259 = vmul.f32 %v2238, %v2247
        %v2260 = vmul.f32 %v2239, %v2247
        %v2261 = vmul.f32 %v2240, %v2247
        %v2262 = vmul.f32 %v2241, %v2247
        %v2263 = vmul.f32 %v2242, %v2247
        %v2264 = vadd.f32 %v2211, %v2248
        %v2265 = vadd.f32 %v2212, %v2249
        %v2266 = vadd.f32 %v2213, %v2250
        %v2267 = vadd.f32 %v2214, %v2251
        %v2268 = vadd.f32 %v2215, %v2252
        %v2269 = vadd.f32 %v2216, %v2253
        %v2270 = vadd.f32 %v2217, %v2254
        %v2271 = vadd.f32 %v2218, %v2255
        %v2272 = vadd.f32 %v2219, %v2256
        %v2273 = vadd.f32 %v2220, %v2257
        %v2274 = vadd.f32 %v2221, %v2258
        %v2275 = vadd.f32 %v2222, %v2259
        %v2276 = vadd.f32 %v2223, %v2260
        %v2277 = vadd.f32 %v2224, %v2261
        %v2278 = vadd.f32 %v2225, %v2262
        %v2279 = vadd.f32 %v2226, %v2263
        %v2280 = vld [vmem:[%s2014 + $0x5] sm:$0xff]
        %v2281 = vld [vmem:[%s2014 + $0xd] sm:$0xff]
        %v2282 = vld [vmem:[%s2014 + $0x1d] sm:$0xff]
        %v2283 = vld [vmem:[%s2014 + $0x25] sm:$0xff]
        %v2284 = vld [vmem:[%s2014 + $0x35] sm:$0xff]
        %v2285 = vld [vmem:[%s2014 + $0x3d] sm:$0xff]
        %v2286 = vld [vmem:[%s2014 + $0x4d] sm:$0xff]
        %v2287 = vld [vmem:[%s2014 + $0x55] sm:$0xff]
        %v2288 = vld [vmem:[%s2014 + $0x65] sm:$0xff]
        %v2289 = vld [vmem:[%s2014 + $0x6d] sm:$0xff]
        %v2290 = vld [vmem:[%s2014 + $0x7d] sm:$0xff]
        %v2291 = vld [vmem:[%s2014 + $0x85] sm:$0xff]
        %v2292 = vld [vmem:[%s2014 + $0x95] sm:$0xff]
        %v2293 = vld [vmem:[%s2014 + $0x9d] sm:$0xff]
        %v2294 = vld [vmem:[%s2014 + $0xad] sm:$0xff]
        %v2295 = vld [vmem:[%s2014 + $0xb5] sm:$0xff]
        %v2296 = vld [vmem:[%s1 + $0x21] sm:$0x1]
        %v2297 = vlaneseq
        %v2298 = vshrl.u32 %v2297, 7
        %v2299 = vsub.s32 0, %v2298
        %v2300 = vrot.slane %v2296, %v2299
        %v2301 = vmul.f32 %v2280, %v2300
        %v2302 = vmul.f32 %v2281, %v2300
        %v2303 = vmul.f32 %v2282, %v2300
        %v2304 = vmul.f32 %v2283, %v2300
        %v2305 = vmul.f32 %v2284, %v2300
        %v2306 = vmul.f32 %v2285, %v2300
        %v2307 = vmul.f32 %v2286, %v2300
        %v2308 = vmul.f32 %v2287, %v2300
        %v2309 = vmul.f32 %v2288, %v2300
        %v2310 = vmul.f32 %v2289, %v2300
        %v2311 = vmul.f32 %v2290, %v2300
        %v2312 = vmul.f32 %v2291, %v2300
        %v2313 = vmul.f32 %v2292, %v2300
        %v2314 = vmul.f32 %v2293, %v2300
        %v2315 = vmul.f32 %v2294, %v2300
        %v2316 = vmul.f32 %v2295, %v2300
        %v2317 = vadd.f32 %v2264, %v2301
        %v2318 = vadd.f32 %v2265, %v2302
        %v2319 = vadd.f32 %v2266, %v2303
        %v2320 = vadd.f32 %v2267, %v2304
        %v2321 = vadd.f32 %v2268, %v2305
        %v2322 = vadd.f32 %v2269, %v2306
        %v2323 = vadd.f32 %v2270, %v2307
        %v2324 = vadd.f32 %v2271, %v2308
        %v2325 = vadd.f32 %v2272, %v2309
        %v2326 = vadd.f32 %v2273, %v2310
        %v2327 = vadd.f32 %v2274, %v2311
        %v2328 = vadd.f32 %v2275, %v2312
        %v2329 = vadd.f32 %v2276, %v2313
        %v2330 = vadd.f32 %v2277, %v2314
        %v2331 = vadd.f32 %v2278, %v2315
        %v2332 = vadd.f32 %v2279, %v2316
        %v2333 = vld [vmem:[%s2014 + $0x6] sm:$0xff]
        %v2334 = vld [vmem:[%s2014 + $0xe] sm:$0xff]
        %v2335 = vld [vmem:[%s2014 + $0x1e] sm:$0xff]
        %v2336 = vld [vmem:[%s2014 + $0x26] sm:$0xff]
        %v2337 = vld [vmem:[%s2014 + $0x36] sm:$0xff]
        %v2338 = vld [vmem:[%s2014 + $0x3e] sm:$0xff]
        %v2339 = vld [vmem:[%s2014 + $0x4e] sm:$0xff]
        %v2340 = vld [vmem:[%s2014 + $0x56] sm:$0xff]
        %v2341 = vld [vmem:[%s2014 + $0x66] sm:$0xff]
        %v2342 = vld [vmem:[%s2014 + $0x6e] sm:$0xff]
        %v2343 = vld [vmem:[%s2014 + $0x7e] sm:$0xff]
        %v2344 = vld [vmem:[%s2014 + $0x86] sm:$0xff]
        %v2345 = vld [vmem:[%s2014 + $0x96] sm:$0xff]
        %v2346 = vld [vmem:[%s2014 + $0x9e] sm:$0xff]
        %v2347 = vld [vmem:[%s2014 + $0xae] sm:$0xff]
        %v2348 = vld [vmem:[%s2014 + $0xb6] sm:$0xff]
        %v2349 = vld [vmem:[%s1 + $0x22] sm:$0x1]
        %v2350 = vlaneseq
        %v2351 = vshrl.u32 %v2350, 7
        %v2352 = vsub.s32 0, %v2351
        %v2353 = vrot.slane %v2349, %v2352
        %v2354 = vmul.f32 %v2333, %v2353
        %v2355 = vmul.f32 %v2334, %v2353
        %v2356 = vmul.f32 %v2335, %v2353
        %v2357 = vmul.f32 %v2336, %v2353
        %v2358 = vmul.f32 %v2337, %v2353
        %v2359 = vmul.f32 %v2338, %v2353
        %v2360 = vmul.f32 %v2339, %v2353
        %v2361 = vmul.f32 %v2340, %v2353
        %v2362 = vmul.f32 %v2341, %v2353
        %v2363 = vmul.f32 %v2342, %v2353
        %v2364 = vmul.f32 %v2343, %v2353
        %v2365 = vmul.f32 %v2344, %v2353
        %v2366 = vmul.f32 %v2345, %v2353
        %v2367 = vmul.f32 %v2346, %v2353
        %v2368 = vmul.f32 %v2347, %v2353
        %v2369 = vmul.f32 %v2348, %v2353
        %v2370 = vadd.f32 %v2317, %v2354
        %v2371 = vadd.f32 %v2318, %v2355
        %v2372 = vadd.f32 %v2319, %v2356
        %v2373 = vadd.f32 %v2320, %v2357
        %v2374 = vadd.f32 %v2321, %v2358
        %v2375 = vadd.f32 %v2322, %v2359
        %v2376 = vadd.f32 %v2323, %v2360
        %v2377 = vadd.f32 %v2324, %v2361
        %v2378 = vadd.f32 %v2325, %v2362
        %v2379 = vadd.f32 %v2326, %v2363
        %v2380 = vadd.f32 %v2327, %v2364
        %v2381 = vadd.f32 %v2328, %v2365
        %v2382 = vadd.f32 %v2329, %v2366
        %v2383 = vadd.f32 %v2330, %v2367
        %v2384 = vadd.f32 %v2331, %v2368
        %v2385 = vadd.f32 %v2332, %v2369
        %s2386 = sadd.s32 %s510, 5
        %s2387 = smul.u32 %s2386, 24
        %s2388 = scalar_lea.vmem [#allocation2], %s2387
        %v2389 = vld [vmem:[%s2388] sm:$0xff]
        %v2390 = vld [vmem:[%s2388 + $0x8] sm:$0xff]
        %v2391 = vld [vmem:[%s2388 + $0x18] sm:$0xff]
        %v2392 = vld [vmem:[%s2388 + $0x20] sm:$0xff]
        %v2393 = vld [vmem:[%s2388 + $0x30] sm:$0xff]
        %v2394 = vld [vmem:[%s2388 + $0x38] sm:$0xff]
        %v2395 = vld [vmem:[%s2388 + $0x48] sm:$0xff]
        %v2396 = vld [vmem:[%s2388 + $0x50] sm:$0xff]
        %v2397 = vld [vmem:[%s2388 + $0x60] sm:$0xff]
        %v2398 = vld [vmem:[%s2388 + $0x68] sm:$0xff]
        %v2399 = vld [vmem:[%s2388 + $0x78] sm:$0xff]
        %v2400 = vld [vmem:[%s2388 + $0x80] sm:$0xff]
        %v2401 = vld [vmem:[%s2388 + $0x90] sm:$0xff]
        %v2402 = vld [vmem:[%s2388 + $0x98] sm:$0xff]
        %v2403 = vld [vmem:[%s2388 + $0xa8] sm:$0xff]
        %v2404 = vld [vmem:[%s2388 + $0xb0] sm:$0xff]
        %v2405 = vld [vmem:[%s1 + $0x23] sm:$0x1]
        %v2406 = vlaneseq
        %v2407 = vshrl.u32 %v2406, 7
        %v2408 = vsub.s32 0, %v2407
        %v2409 = vrot.slane %v2405, %v2408
        %v2410 = vmul.f32 %v2389, %v2409
        %v2411 = vmul.f32 %v2390, %v2409
        %v2412 = vmul.f32 %v2391, %v2409
        %v2413 = vmul.f32 %v2392, %v2409
        %v2414 = vmul.f32 %v2393, %v2409
        %v2415 = vmul.f32 %v2394, %v2409
        %v2416 = vmul.f32 %v2395, %v2409
        %v2417 = vmul.f32 %v2396, %v2409
        %v2418 = vmul.f32 %v2397, %v2409
        %v2419 = vmul.f32 %v2398, %v2409
        %v2420 = vmul.f32 %v2399, %v2409
        %v2421 = vmul.f32 %v2400, %v2409
        %v2422 = vmul.f32 %v2401, %v2409
        %v2423 = vmul.f32 %v2402, %v2409
        %v2424 = vmul.f32 %v2403, %v2409
        %v2425 = vmul.f32 %v2404, %v2409
        %v2426 = vadd.f32 %v2370, %v2410
        %v2427 = vadd.f32 %v2371, %v2411
        %v2428 = vadd.f32 %v2372, %v2412
        %v2429 = vadd.f32 %v2373, %v2413
        %v2430 = vadd.f32 %v2374, %v2414
        %v2431 = vadd.f32 %v2375, %v2415
        %v2432 = vadd.f32 %v2376, %v2416
        %v2433 = vadd.f32 %v2377, %v2417
        %v2434 = vadd.f32 %v2378, %v2418
        %v2435 = vadd.f32 %v2379, %v2419
        %v2436 = vadd.f32 %v2380, %v2420
        %v2437 = vadd.f32 %v2381, %v2421
        %v2438 = vadd.f32 %v2382, %v2422
        %v2439 = vadd.f32 %v2383, %v2423
        %v2440 = vadd.f32 %v2384, %v2424
        %v2441 = vadd.f32 %v2385, %v2425
        %v2442 = vld [vmem:[%s2388 + $0x1] sm:$0xff]
        %v2443 = vld [vmem:[%s2388 + $0x9] sm:$0xff]
        %v2444 = vld [vmem:[%s2388 + $0x19] sm:$0xff]
        %v2445 = vld [vmem:[%s2388 + $0x21] sm:$0xff]
        %v2446 = vld [vmem:[%s2388 + $0x31] sm:$0xff]
        %v2447 = vld [vmem:[%s2388 + $0x39] sm:$0xff]
        %v2448 = vld [vmem:[%s2388 + $0x49] sm:$0xff]
        %v2449 = vld [vmem:[%s2388 + $0x51] sm:$0xff]
        %v2450 = vld [vmem:[%s2388 + $0x61] sm:$0xff]
        %v2451 = vld [vmem:[%s2388 + $0x69] sm:$0xff]
        %v2452 = vld [vmem:[%s2388 + $0x79] sm:$0xff]
        %v2453 = vld [vmem:[%s2388 + $0x81] sm:$0xff]
        %v2454 = vld [vmem:[%s2388 + $0x91] sm:$0xff]
        %v2455 = vld [vmem:[%s2388 + $0x99] sm:$0xff]
        %v2456 = vld [vmem:[%s2388 + $0xa9] sm:$0xff]
        %v2457 = vld [vmem:[%s2388 + $0xb1] sm:$0xff]
        %v2458 = vld [vmem:[%s1 + $0x24] sm:$0x1]
        %v2459 = vlaneseq
        %v2460 = vshrl.u32 %v2459, 7
        %v2461 = vsub.s32 0, %v2460
        %v2462 = vrot.slane %v2458, %v2461
        %v2463 = vmul.f32 %v2442, %v2462
        %v2464 = vmul.f32 %v2443, %v2462
        %v2465 = vmul.f32 %v2444, %v2462
        %v2466 = vmul.f32 %v2445, %v2462
        %v2467 = vmul.f32 %v2446, %v2462
        %v2468 = vmul.f32 %v2447, %v2462
        %v2469 = vmul.f32 %v2448, %v2462
        %v2470 = vmul.f32 %v2449, %v2462
        %v2471 = vmul.f32 %v2450, %v2462
        %v2472 = vmul.f32 %v2451, %v2462
        %v2473 = vmul.f32 %v2452, %v2462
        %v2474 = vmul.f32 %v2453, %v2462
        %v2475 = vmul.f32 %v2454, %v2462
        %v2476 = vmul.f32 %v2455, %v2462
        %v2477 = vmul.f32 %v2456, %v2462
        %v2478 = vmul.f32 %v2457, %v2462
        %v2479 = vadd.f32 %v2426, %v2463
        %v2480 = vadd.f32 %v2427, %v2464
        %v2481 = vadd.f32 %v2428, %v2465
        %v2482 = vadd.f32 %v2429, %v2466
        %v2483 = vadd.f32 %v2430, %v2467
        %v2484 = vadd.f32 %v2431, %v2468
        %v2485 = vadd.f32 %v2432, %v2469
        %v2486 = vadd.f32 %v2433, %v2470
        %v2487 = vadd.f32 %v2434, %v2471
        %v2488 = vadd.f32 %v2435, %v2472
        %v2489 = vadd.f32 %v2436, %v2473
        %v2490 = vadd.f32 %v2437, %v2474
        %v2491 = vadd.f32 %v2438, %v2475
        %v2492 = vadd.f32 %v2439, %v2476
        %v2493 = vadd.f32 %v2440, %v2477
        %v2494 = vadd.f32 %v2441, %v2478
        %v2495 = vld [vmem:[%s2388 + $0x2] sm:$0xff]
        %v2496 = vld [vmem:[%s2388 + $0xa] sm:$0xff]
        %v2497 = vld [vmem:[%s2388 + $0x1a] sm:$0xff]
        %v2498 = vld [vmem:[%s2388 + $0x22] sm:$0xff]
        %v2499 = vld [vmem:[%s2388 + $0x32] sm:$0xff]
        %v2500 = vld [vmem:[%s2388 + $0x3a] sm:$0xff]
        %v2501 = vld [vmem:[%s2388 + $0x4a] sm:$0xff]
        %v2502 = vld [vmem:[%s2388 + $0x52] sm:$0xff]
        %v2503 = vld [vmem:[%s2388 + $0x62] sm:$0xff]
        %v2504 = vld [vmem:[%s2388 + $0x6a] sm:$0xff]
        %v2505 = vld [vmem:[%s2388 + $0x7a] sm:$0xff]
        %v2506 = vld [vmem:[%s2388 + $0x82] sm:$0xff]
        %v2507 = vld [vmem:[%s2388 + $0x92] sm:$0xff]
        %v2508 = vld [vmem:[%s2388 + $0x9a] sm:$0xff]
        %v2509 = vld [vmem:[%s2388 + $0xaa] sm:$0xff]
        %v2510 = vld [vmem:[%s2388 + $0xb2] sm:$0xff]
        %v2511 = vld [vmem:[%s1 + $0x25] sm:$0x1]
        %v2512 = vlaneseq
        %v2513 = vshrl.u32 %v2512, 7
        %v2514 = vsub.s32 0, %v2513
        %v2515 = vrot.slane %v2511, %v2514
        %v2516 = vmul.f32 %v2495, %v2515
        %v2517 = vmul.f32 %v2496, %v2515
        %v2518 = vmul.f32 %v2497, %v2515
        %v2519 = vmul.f32 %v2498, %v2515
        %v2520 = vmul.f32 %v2499, %v2515
        %v2521 = vmul.f32 %v2500, %v2515
        %v2522 = vmul.f32 %v2501, %v2515
        %v2523 = vmul.f32 %v2502, %v2515
        %v2524 = vmul.f32 %v2503, %v2515
        %v2525 = vmul.f32 %v2504, %v2515
        %v2526 = vmul.f32 %v2505, %v2515
        %v2527 = vmul.f32 %v2506, %v2515
        %v2528 = vmul.f32 %v2507, %v2515
        %v2529 = vmul.f32 %v2508, %v2515
        %v2530 = vmul.f32 %v2509, %v2515
        %v2531 = vmul.f32 %v2510, %v2515
        %v2532 = vadd.f32 %v2479, %v2516
        %v2533 = vadd.f32 %v2480, %v2517
        %v2534 = vadd.f32 %v2481, %v2518
        %v2535 = vadd.f32 %v2482, %v2519
        %v2536 = vadd.f32 %v2483, %v2520
        %v2537 = vadd.f32 %v2484, %v2521
        %v2538 = vadd.f32 %v2485, %v2522
        %v2539 = vadd.f32 %v2486, %v2523
        %v2540 = vadd.f32 %v2487, %v2524
        %v2541 = vadd.f32 %v2488, %v2525
        %v2542 = vadd.f32 %v2489, %v2526
        %v2543 = vadd.f32 %v2490, %v2527
        %v2544 = vadd.f32 %v2491, %v2528
        %v2545 = vadd.f32 %v2492, %v2529
        %v2546 = vadd.f32 %v2493, %v2530
        %v2547 = vadd.f32 %v2494, %v2531
        %v2548 = vld [vmem:[%s2388 + $0x3] sm:$0xff]
        %v2549 = vld [vmem:[%s2388 + $0xb] sm:$0xff]
        %v2550 = vld [vmem:[%s2388 + $0x1b] sm:$0xff]
        %v2551 = vld [vmem:[%s2388 + $0x23] sm:$0xff]
        %v2552 = vld [vmem:[%s2388 + $0x33] sm:$0xff]
        %v2553 = vld [vmem:[%s2388 + $0x3b] sm:$0xff]
        %v2554 = vld [vmem:[%s2388 + $0x4b] sm:$0xff]
        %v2555 = vld [vmem:[%s2388 + $0x53] sm:$0xff]
        %v2556 = vld [vmem:[%s2388 + $0x63] sm:$0xff]
        %v2557 = vld [vmem:[%s2388 + $0x6b] sm:$0xff]
        %v2558 = vld [vmem:[%s2388 + $0x7b] sm:$0xff]
        %v2559 = vld [vmem:[%s2388 + $0x83] sm:$0xff]
        %v2560 = vld [vmem:[%s2388 + $0x93] sm:$0xff]
        %v2561 = vld [vmem:[%s2388 + $0x9b] sm:$0xff]
        %v2562 = vld [vmem:[%s2388 + $0xab] sm:$0xff]
        %v2563 = vld [vmem:[%s2388 + $0xb3] sm:$0xff]
        %v2564 = vld [vmem:[%s1 + $0x26] sm:$0x1]
        %v2565 = vlaneseq
        %v2566 = vshrl.u32 %v2565, 7
        %v2567 = vsub.s32 0, %v2566
        %v2568 = vrot.slane %v2564, %v2567
        %v2569 = vmul.f32 %v2548, %v2568
        %v2570 = vmul.f32 %v2549, %v2568
        %v2571 = vmul.f32 %v2550, %v2568
        %v2572 = vmul.f32 %v2551, %v2568
        %v2573 = vmul.f32 %v2552, %v2568
        %v2574 = vmul.f32 %v2553, %v2568
        %v2575 = vmul.f32 %v2554, %v2568
        %v2576 = vmul.f32 %v2555, %v2568
        %v2577 = vmul.f32 %v2556, %v2568
        %v2578 = vmul.f32 %v2557, %v2568
        %v2579 = vmul.f32 %v2558, %v2568
        %v2580 = vmul.f32 %v2559, %v2568
        %v2581 = vmul.f32 %v2560, %v2568
        %v2582 = vmul.f32 %v2561, %v2568
        %v2583 = vmul.f32 %v2562, %v2568
        %v2584 = vmul.f32 %v2563, %v2568
        %v2585 = vadd.f32 %v2532, %v2569
        %v2586 = vadd.f32 %v2533, %v2570
        %v2587 = vadd.f32 %v2534, %v2571
        %v2588 = vadd.f32 %v2535, %v2572
        %v2589 = vadd.f32 %v2536, %v2573
        %v2590 = vadd.f32 %v2537, %v2574
        %v2591 = vadd.f32 %v2538, %v2575
        %v2592 = vadd.f32 %v2539, %v2576
        %v2593 = vadd.f32 %v2540, %v2577
        %v2594 = vadd.f32 %v2541, %v2578
        %v2595 = vadd.f32 %v2542, %v2579
        %v2596 = vadd.f32 %v2543, %v2580
        %v2597 = vadd.f32 %v2544, %v2581
        %v2598 = vadd.f32 %v2545, %v2582
        %v2599 = vadd.f32 %v2546, %v2583
        %v2600 = vadd.f32 %v2547, %v2584
        %v2601 = vld [vmem:[%s2388 + $0x4] sm:$0xff]
        %v2602 = vld [vmem:[%s2388 + $0xc] sm:$0xff]
        %v2603 = vld [vmem:[%s2388 + $0x1c] sm:$0xff]
        %v2604 = vld [vmem:[%s2388 + $0x24] sm:$0xff]
        %v2605 = vld [vmem:[%s2388 + $0x34] sm:$0xff]
        %v2606 = vld [vmem:[%s2388 + $0x3c] sm:$0xff]
        %v2607 = vld [vmem:[%s2388 + $0x4c] sm:$0xff]
        %v2608 = vld [vmem:[%s2388 + $0x54] sm:$0xff]
        %v2609 = vld [vmem:[%s2388 + $0x64] sm:$0xff]
        %v2610 = vld [vmem:[%s2388 + $0x6c] sm:$0xff]
        %v2611 = vld [vmem:[%s2388 + $0x7c] sm:$0xff]
        %v2612 = vld [vmem:[%s2388 + $0x84] sm:$0xff]
        %v2613 = vld [vmem:[%s2388 + $0x94] sm:$0xff]
        %v2614 = vld [vmem:[%s2388 + $0x9c] sm:$0xff]
        %v2615 = vld [vmem:[%s2388 + $0xac] sm:$0xff]
        %v2616 = vld [vmem:[%s2388 + $0xb4] sm:$0xff]
        %v2617 = vld [vmem:[%s1 + $0x27] sm:$0x1]
        %v2618 = vlaneseq
        %v2619 = vshrl.u32 %v2618, 7
        %v2620 = vsub.s32 0, %v2619
        %v2621 = vrot.slane %v2617, %v2620
        %v2622 = vmul.f32 %v2601, %v2621
        %v2623 = vmul.f32 %v2602, %v2621
        %v2624 = vmul.f32 %v2603, %v2621
        %v2625 = vmul.f32 %v2604, %v2621
        %v2626 = vmul.f32 %v2605, %v2621
        %v2627 = vmul.f32 %v2606, %v2621
        %v2628 = vmul.f32 %v2607, %v2621
        %v2629 = vmul.f32 %v2608, %v2621
        %v2630 = vmul.f32 %v2609, %v2621
        %v2631 = vmul.f32 %v2610, %v2621
        %v2632 = vmul.f32 %v2611, %v2621
        %v2633 = vmul.f32 %v2612, %v2621
        %v2634 = vmul.f32 %v2613, %v2621
        %v2635 = vmul.f32 %v2614, %v2621
        %v2636 = vmul.f32 %v2615, %v2621
        %v2637 = vmul.f32 %v2616, %v2621
        %v2638 = vadd.f32 %v2585, %v2622
        %v2639 = vadd.f32 %v2586, %v2623
        %v2640 = vadd.f32 %v2587, %v2624
        %v2641 = vadd.f32 %v2588, %v2625
        %v2642 = vadd.f32 %v2589, %v2626
        %v2643 = vadd.f32 %v2590, %v2627
        %v2644 = vadd.f32 %v2591, %v2628
        %v2645 = vadd.f32 %v2592, %v2629
        %v2646 = vadd.f32 %v2593, %v2630
        %v2647 = vadd.f32 %v2594, %v2631
        %v2648 = vadd.f32 %v2595, %v2632
        %v2649 = vadd.f32 %v2596, %v2633
        %v2650 = vadd.f32 %v2597, %v2634
        %v2651 = vadd.f32 %v2598, %v2635
        %v2652 = vadd.f32 %v2599, %v2636
        %v2653 = vadd.f32 %v2600, %v2637
        %v2654 = vld [vmem:[%s2388 + $0x5] sm:$0xff]
        %v2655 = vld [vmem:[%s2388 + $0xd] sm:$0xff]
        %v2656 = vld [vmem:[%s2388 + $0x1d] sm:$0xff]
        %v2657 = vld [vmem:[%s2388 + $0x25] sm:$0xff]
        %v2658 = vld [vmem:[%s2388 + $0x35] sm:$0xff]
        %v2659 = vld [vmem:[%s2388 + $0x3d] sm:$0xff]
        %v2660 = vld [vmem:[%s2388 + $0x4d] sm:$0xff]
        %v2661 = vld [vmem:[%s2388 + $0x55] sm:$0xff]
        %v2662 = vld [vmem:[%s2388 + $0x65] sm:$0xff]
        %v2663 = vld [vmem:[%s2388 + $0x6d] sm:$0xff]
        %v2664 = vld [vmem:[%s2388 + $0x7d] sm:$0xff]
        %v2665 = vld [vmem:[%s2388 + $0x85] sm:$0xff]
        %v2666 = vld [vmem:[%s2388 + $0x95] sm:$0xff]
        %v2667 = vld [vmem:[%s2388 + $0x9d] sm:$0xff]
        %v2668 = vld [vmem:[%s2388 + $0xad] sm:$0xff]
        %v2669 = vld [vmem:[%s2388 + $0xb5] sm:$0xff]
        %v2670 = vld [vmem:[%s1 + $0x28] sm:$0x1]
        %v2671 = vlaneseq
        %v2672 = vshrl.u32 %v2671, 7
        %v2673 = vsub.s32 0, %v2672
        %v2674 = vrot.slane %v2670, %v2673
        %v2675 = vmul.f32 %v2654, %v2674
        %v2676 = vmul.f32 %v2655, %v2674
        %v2677 = vmul.f32 %v2656, %v2674
        %v2678 = vmul.f32 %v2657, %v2674
        %v2679 = vmul.f32 %v2658, %v2674
        %v2680 = vmul.f32 %v2659, %v2674
        %v2681 = vmul.f32 %v2660, %v2674
        %v2682 = vmul.f32 %v2661, %v2674
        %v2683 = vmul.f32 %v2662, %v2674
        %v2684 = vmul.f32 %v2663, %v2674
        %v2685 = vmul.f32 %v2664, %v2674
        %v2686 = vmul.f32 %v2665, %v2674
        %v2687 = vmul.f32 %v2666, %v2674
        %v2688 = vmul.f32 %v2667, %v2674
        %v2689 = vmul.f32 %v2668, %v2674
        %v2690 = vmul.f32 %v2669, %v2674
        %v2691 = vadd.f32 %v2638, %v2675
        %v2692 = vadd.f32 %v2639, %v2676
        %v2693 = vadd.f32 %v2640, %v2677
        %v2694 = vadd.f32 %v2641, %v2678
        %v2695 = vadd.f32 %v2642, %v2679
        %v2696 = vadd.f32 %v2643, %v2680
        %v2697 = vadd.f32 %v2644, %v2681
        %v2698 = vadd.f32 %v2645, %v2682
        %v2699 = vadd.f32 %v2646, %v2683
        %v2700 = vadd.f32 %v2647, %v2684
        %v2701 = vadd.f32 %v2648, %v2685
        %v2702 = vadd.f32 %v2649, %v2686
        %v2703 = vadd.f32 %v2650, %v2687
        %v2704 = vadd.f32 %v2651, %v2688
        %v2705 = vadd.f32 %v2652, %v2689
        %v2706 = vadd.f32 %v2653, %v2690
        %v2707 = vld [vmem:[%s2388 + $0x6] sm:$0xff]
        %v2708 = vld [vmem:[%s2388 + $0xe] sm:$0xff]
        %v2709 = vld [vmem:[%s2388 + $0x1e] sm:$0xff]
        %v2710 = vld [vmem:[%s2388 + $0x26] sm:$0xff]
        %v2711 = vld [vmem:[%s2388 + $0x36] sm:$0xff]
        %v2712 = vld [vmem:[%s2388 + $0x3e] sm:$0xff]
        %v2713 = vld [vmem:[%s2388 + $0x4e] sm:$0xff]
        %v2714 = vld [vmem:[%s2388 + $0x56] sm:$0xff]
        %v2715 = vld [vmem:[%s2388 + $0x66] sm:$0xff]
        %v2716 = vld [vmem:[%s2388 + $0x6e] sm:$0xff]
        %v2717 = vld [vmem:[%s2388 + $0x7e] sm:$0xff]
        %v2718 = vld [vmem:[%s2388 + $0x86] sm:$0xff]
        %v2719 = vld [vmem:[%s2388 + $0x96] sm:$0xff]
        %v2720 = vld [vmem:[%s2388 + $0x9e] sm:$0xff]
        %v2721 = vld [vmem:[%s2388 + $0xae] sm:$0xff]
        %v2722 = vld [vmem:[%s2388 + $0xb6] sm:$0xff]
        %v2723 = vld [vmem:[%s1 + $0x29] sm:$0x1]
        %v2724 = vlaneseq
        %v2725 = vshrl.u32 %v2724, 7
        %v2726 = vsub.s32 0, %v2725
        %v2727 = vrot.slane %v2723, %v2726
        %v2728 = vmul.f32 %v2707, %v2727
        %v2729 = vmul.f32 %v2708, %v2727
        %v2730 = vmul.f32 %v2709, %v2727
        %v2731 = vmul.f32 %v2710, %v2727
        %v2732 = vmul.f32 %v2711, %v2727
        %v2733 = vmul.f32 %v2712, %v2727
        %v2734 = vmul.f32 %v2713, %v2727
        %v2735 = vmul.f32 %v2714, %v2727
        %v2736 = vmul.f32 %v2715, %v2727
        %v2737 = vmul.f32 %v2716, %v2727
        %v2738 = vmul.f32 %v2717, %v2727
        %v2739 = vmul.f32 %v2718, %v2727
        %v2740 = vmul.f32 %v2719, %v2727
        %v2741 = vmul.f32 %v2720, %v2727
        %v2742 = vmul.f32 %v2721, %v2727
        %v2743 = vmul.f32 %v2722, %v2727
        %v2744 = vadd.f32 %v2691, %v2728
        %v2745 = vadd.f32 %v2692, %v2729
        %v2746 = vadd.f32 %v2693, %v2730
        %v2747 = vadd.f32 %v2694, %v2731
        %v2748 = vadd.f32 %v2695, %v2732
        %v2749 = vadd.f32 %v2696, %v2733
        %v2750 = vadd.f32 %v2697, %v2734
        %v2751 = vadd.f32 %v2698, %v2735
        %v2752 = vadd.f32 %v2699, %v2736
        %v2753 = vadd.f32 %v2700, %v2737
        %v2754 = vadd.f32 %v2701, %v2738
        %v2755 = vadd.f32 %v2702, %v2739
        %v2756 = vadd.f32 %v2703, %v2740
        %v2757 = vadd.f32 %v2704, %v2741
        %v2758 = vadd.f32 %v2705, %v2742
        %v2759 = vadd.f32 %v2706, %v2743
        %s2760 = sadd.s32 %s510, 6
        %s2761 = smul.u32 %s2760, 24
        %s2762 = scalar_lea.vmem [#allocation2], %s2761
        %v2763 = vld [vmem:[%s2762] sm:$0xff]
        %v2764 = vld [vmem:[%s2762 + $0x8] sm:$0xff]
        %v2765 = vld [vmem:[%s2762 + $0x18] sm:$0xff]
        %v2766 = vld [vmem:[%s2762 + $0x20] sm:$0xff]
        %v2767 = vld [vmem:[%s2762 + $0x30] sm:$0xff]
        %v2768 = vld [vmem:[%s2762 + $0x38] sm:$0xff]
        %v2769 = vld [vmem:[%s2762 + $0x48] sm:$0xff]
        %v2770 = vld [vmem:[%s2762 + $0x50] sm:$0xff]
        %v2771 = vld [vmem:[%s2762 + $0x60] sm:$0xff]
        %v2772 = vld [vmem:[%s2762 + $0x68] sm:$0xff]
        %v2773 = vld [vmem:[%s2762 + $0x78] sm:$0xff]
        %v2774 = vld [vmem:[%s2762 + $0x80] sm:$0xff]
        %v2775 = vld [vmem:[%s2762 + $0x90] sm:$0xff]
        %v2776 = vld [vmem:[%s2762 + $0x98] sm:$0xff]
        %v2777 = vld [vmem:[%s2762 + $0xa8] sm:$0xff]
        %v2778 = vld [vmem:[%s2762 + $0xb0] sm:$0xff]
        %v2779 = vld [vmem:[%s1 + $0x2a] sm:$0x1]
        %v2780 = vlaneseq
        %v2781 = vshrl.u32 %v2780, 7
        %v2782 = vsub.s32 0, %v2781
        %v2783 = vrot.slane %v2779, %v2782
        %v2784 = vmul.f32 %v2763, %v2783
        %v2785 = vmul.f32 %v2764, %v2783
        %v2786 = vmul.f32 %v2765, %v2783
        %v2787 = vmul.f32 %v2766, %v2783
        %v2788 = vmul.f32 %v2767, %v2783
        %v2789 = vmul.f32 %v2768, %v2783
        %v2790 = vmul.f32 %v2769, %v2783
        %v2791 = vmul.f32 %v2770, %v2783
        %v2792 = vmul.f32 %v2771, %v2783
        %v2793 = vmul.f32 %v2772, %v2783
        %v2794 = vmul.f32 %v2773, %v2783
        %v2795 = vmul.f32 %v2774, %v2783
        %v2796 = vmul.f32 %v2775, %v2783
        %v2797 = vmul.f32 %v2776, %v2783
        %v2798 = vmul.f32 %v2777, %v2783
        %v2799 = vmul.f32 %v2778, %v2783
        %v2800 = vadd.f32 %v2744, %v2784
        %v2801 = vadd.f32 %v2745, %v2785
        %v2802 = vadd.f32 %v2746, %v2786
        %v2803 = vadd.f32 %v2747, %v2787
        %v2804 = vadd.f32 %v2748, %v2788
        %v2805 = vadd.f32 %v2749, %v2789
        %v2806 = vadd.f32 %v2750, %v2790
        %v2807 = vadd.f32 %v2751, %v2791
        %v2808 = vadd.f32 %v2752, %v2792
        %v2809 = vadd.f32 %v2753, %v2793
        %v2810 = vadd.f32 %v2754, %v2794
        %v2811 = vadd.f32 %v2755, %v2795
        %v2812 = vadd.f32 %v2756, %v2796
        %v2813 = vadd.f32 %v2757, %v2797
        %v2814 = vadd.f32 %v2758, %v2798
        %v2815 = vadd.f32 %v2759, %v2799
        %v2816 = vld [vmem:[%s2762 + $0x1] sm:$0xff]
        %v2817 = vld [vmem:[%s2762 + $0x9] sm:$0xff]
        %v2818 = vld [vmem:[%s2762 + $0x19] sm:$0xff]
        %v2819 = vld [vmem:[%s2762 + $0x21] sm:$0xff]
        %v2820 = vld [vmem:[%s2762 + $0x31] sm:$0xff]
        %v2821 = vld [vmem:[%s2762 + $0x39] sm:$0xff]
        %v2822 = vld [vmem:[%s2762 + $0x49] sm:$0xff]
        %v2823 = vld [vmem:[%s2762 + $0x51] sm:$0xff]
        %v2824 = vld [vmem:[%s2762 + $0x61] sm:$0xff]
        %v2825 = vld [vmem:[%s2762 + $0x69] sm:$0xff]
        %v2826 = vld [vmem:[%s2762 + $0x79] sm:$0xff]
        %v2827 = vld [vmem:[%s2762 + $0x81] sm:$0xff]
        %v2828 = vld [vmem:[%s2762 + $0x91] sm:$0xff]
        %v2829 = vld [vmem:[%s2762 + $0x99] sm:$0xff]
        %v2830 = vld [vmem:[%s2762 + $0xa9] sm:$0xff]
        %v2831 = vld [vmem:[%s2762 + $0xb1] sm:$0xff]
        %v2832 = vld [vmem:[%s1 + $0x2b] sm:$0x1]
        %v2833 = vlaneseq
        %v2834 = vshrl.u32 %v2833, 7
        %v2835 = vsub.s32 0, %v2834
        %v2836 = vrot.slane %v2832, %v2835
        %v2837 = vmul.f32 %v2816, %v2836
        %v2838 = vmul.f32 %v2817, %v2836
        %v2839 = vmul.f32 %v2818, %v2836
        %v2840 = vmul.f32 %v2819, %v2836
        %v2841 = vmul.f32 %v2820, %v2836
        %v2842 = vmul.f32 %v2821, %v2836
        %v2843 = vmul.f32 %v2822, %v2836
        %v2844 = vmul.f32 %v2823, %v2836
        %v2845 = vmul.f32 %v2824, %v2836
        %v2846 = vmul.f32 %v2825, %v2836
        %v2847 = vmul.f32 %v2826, %v2836
        %v2848 = vmul.f32 %v2827, %v2836
        %v2849 = vmul.f32 %v2828, %v2836
        %v2850 = vmul.f32 %v2829, %v2836
        %v2851 = vmul.f32 %v2830, %v2836
        %v2852 = vmul.f32 %v2831, %v2836
        %v2853 = vadd.f32 %v2800, %v2837
        %v2854 = vadd.f32 %v2801, %v2838
        %v2855 = vadd.f32 %v2802, %v2839
        %v2856 = vadd.f32 %v2803, %v2840
        %v2857 = vadd.f32 %v2804, %v2841
        %v2858 = vadd.f32 %v2805, %v2842
        %v2859 = vadd.f32 %v2806, %v2843
        %v2860 = vadd.f32 %v2807, %v2844
        %v2861 = vadd.f32 %v2808, %v2845
        %v2862 = vadd.f32 %v2809, %v2846
        %v2863 = vadd.f32 %v2810, %v2847
        %v2864 = vadd.f32 %v2811, %v2848
        %v2865 = vadd.f32 %v2812, %v2849
        %v2866 = vadd.f32 %v2813, %v2850
        %v2867 = vadd.f32 %v2814, %v2851
        %v2868 = vadd.f32 %v2815, %v2852
        %v2869 = vld [vmem:[%s2762 + $0x2] sm:$0xff]
        %v2870 = vld [vmem:[%s2762 + $0xa] sm:$0xff]
        %v2871 = vld [vmem:[%s2762 + $0x1a] sm:$0xff]
        %v2872 = vld [vmem:[%s2762 + $0x22] sm:$0xff]
        %v2873 = vld [vmem:[%s2762 + $0x32] sm:$0xff]
        %v2874 = vld [vmem:[%s2762 + $0x3a] sm:$0xff]
        %v2875 = vld [vmem:[%s2762 + $0x4a] sm:$0xff]
        %v2876 = vld [vmem:[%s2762 + $0x52] sm:$0xff]
        %v2877 = vld [vmem:[%s2762 + $0x62] sm:$0xff]
        %v2878 = vld [vmem:[%s2762 + $0x6a] sm:$0xff]
        %v2879 = vld [vmem:[%s2762 + $0x7a] sm:$0xff]
        %v2880 = vld [vmem:[%s2762 + $0x82] sm:$0xff]
        %v2881 = vld [vmem:[%s2762 + $0x92] sm:$0xff]
        %v2882 = vld [vmem:[%s2762 + $0x9a] sm:$0xff]
        %v2883 = vld [vmem:[%s2762 + $0xaa] sm:$0xff]
        %v2884 = vld [vmem:[%s2762 + $0xb2] sm:$0xff]
        %v2885 = vld [vmem:[%s1 + $0x2c] sm:$0x1]
        %v2886 = vlaneseq
        %v2887 = vshrl.u32 %v2886, 7
        %v2888 = vsub.s32 0, %v2887
        %v2889 = vrot.slane %v2885, %v2888
        %v2890 = vmul.f32 %v2869, %v2889
        %v2891 = vmul.f32 %v2870, %v2889
        %v2892 = vmul.f32 %v2871, %v2889
        %v2893 = vmul.f32 %v2872, %v2889
        %v2894 = vmul.f32 %v2873, %v2889
        %v2895 = vmul.f32 %v2874, %v2889
        %v2896 = vmul.f32 %v2875, %v2889
        %v2897 = vmul.f32 %v2876, %v2889
        %v2898 = vmul.f32 %v2877, %v2889
        %v2899 = vmul.f32 %v2878, %v2889
        %v2900 = vmul.f32 %v2879, %v2889
        %v2901 = vmul.f32 %v2880, %v2889
        %v2902 = vmul.f32 %v2881, %v2889
        %v2903 = vmul.f32 %v2882, %v2889
        %v2904 = vmul.f32 %v2883, %v2889
        %v2905 = vmul.f32 %v2884, %v2889
        %v2906 = vadd.f32 %v2853, %v2890
        %v2907 = vadd.f32 %v2854, %v2891
        %v2908 = vadd.f32 %v2855, %v2892
        %v2909 = vadd.f32 %v2856, %v2893
        %v2910 = vadd.f32 %v2857, %v2894
        %v2911 = vadd.f32 %v2858, %v2895
        %v2912 = vadd.f32 %v2859, %v2896
        %v2913 = vadd.f32 %v2860, %v2897
        %v2914 = vadd.f32 %v2861, %v2898
        %v2915 = vadd.f32 %v2862, %v2899
        %v2916 = vadd.f32 %v2863, %v2900
        %v2917 = vadd.f32 %v2864, %v2901
        %v2918 = vadd.f32 %v2865, %v2902
        %v2919 = vadd.f32 %v2866, %v2903
        %v2920 = vadd.f32 %v2867, %v2904
        %v2921 = vadd.f32 %v2868, %v2905
        %v2922 = vld [vmem:[%s2762 + $0x3] sm:$0xff]
        %v2923 = vld [vmem:[%s2762 + $0xb] sm:$0xff]
        %v2924 = vld [vmem:[%s2762 + $0x1b] sm:$0xff]
        %v2925 = vld [vmem:[%s2762 + $0x23] sm:$0xff]
        %v2926 = vld [vmem:[%s2762 + $0x33] sm:$0xff]
        %v2927 = vld [vmem:[%s2762 + $0x3b] sm:$0xff]
        %v2928 = vld [vmem:[%s2762 + $0x4b] sm:$0xff]
        %v2929 = vld [vmem:[%s2762 + $0x53] sm:$0xff]
        %v2930 = vld [vmem:[%s2762 + $0x63] sm:$0xff]
        %v2931 = vld [vmem:[%s2762 + $0x6b] sm:$0xff]
        %v2932 = vld [vmem:[%s2762 + $0x7b] sm:$0xff]
        %v2933 = vld [vmem:[%s2762 + $0x83] sm:$0xff]
        %v2934 = vld [vmem:[%s2762 + $0x93] sm:$0xff]
        %v2935 = vld [vmem:[%s2762 + $0x9b] sm:$0xff]
        %v2936 = vld [vmem:[%s2762 + $0xab] sm:$0xff]
        %v2937 = vld [vmem:[%s2762 + $0xb3] sm:$0xff]
        %v2938 = vld [vmem:[%s1 + $0x2d] sm:$0x1]
        %v2939 = vlaneseq
        %v2940 = vshrl.u32 %v2939, 7
        %v2941 = vsub.s32 0, %v2940
        %v2942 = vrot.slane %v2938, %v2941
        %v2943 = vmul.f32 %v2922, %v2942
        %v2944 = vmul.f32 %v2923, %v2942
        %v2945 = vmul.f32 %v2924, %v2942
        %v2946 = vmul.f32 %v2925, %v2942
        %v2947 = vmul.f32 %v2926, %v2942
        %v2948 = vmul.f32 %v2927, %v2942
        %v2949 = vmul.f32 %v2928, %v2942
        %v2950 = vmul.f32 %v2929, %v2942
        %v2951 = vmul.f32 %v2930, %v2942
        %v2952 = vmul.f32 %v2931, %v2942
        %v2953 = vmul.f32 %v2932, %v2942
        %v2954 = vmul.f32 %v2933, %v2942
        %v2955 = vmul.f32 %v2934, %v2942
        %v2956 = vmul.f32 %v2935, %v2942
        %v2957 = vmul.f32 %v2936, %v2942
        %v2958 = vmul.f32 %v2937, %v2942
        %v2959 = vadd.f32 %v2906, %v2943
        %v2960 = vadd.f32 %v2907, %v2944
        %v2961 = vadd.f32 %v2908, %v2945
        %v2962 = vadd.f32 %v2909, %v2946
        %v2963 = vadd.f32 %v2910, %v2947
        %v2964 = vadd.f32 %v2911, %v2948
        %v2965 = vadd.f32 %v2912, %v2949
        %v2966 = vadd.f32 %v2913, %v2950
        %v2967 = vadd.f32 %v2914, %v2951
        %v2968 = vadd.f32 %v2915, %v2952
        %v2969 = vadd.f32 %v2916, %v2953
        %v2970 = vadd.f32 %v2917, %v2954
        %v2971 = vadd.f32 %v2918, %v2955
        %v2972 = vadd.f32 %v2919, %v2956
        %v2973 = vadd.f32 %v2920, %v2957
        %v2974 = vadd.f32 %v2921, %v2958
        %v2975 = vld [vmem:[%s2762 + $0x4] sm:$0xff]
        %v2976 = vld [vmem:[%s2762 + $0xc] sm:$0xff]
        %v2977 = vld [vmem:[%s2762 + $0x1c] sm:$0xff]
        %v2978 = vld [vmem:[%s2762 + $0x24] sm:$0xff]
        %v2979 = vld [vmem:[%s2762 + $0x34] sm:$0xff]
        %v2980 = vld [vmem:[%s2762 + $0x3c] sm:$0xff]
        %v2981 = vld [vmem:[%s2762 + $0x4c] sm:$0xff]
        %v2982 = vld [vmem:[%s2762 + $0x54] sm:$0xff]
        %v2983 = vld [vmem:[%s2762 + $0x64] sm:$0xff]
        %v2984 = vld [vmem:[%s2762 + $0x6c] sm:$0xff]
        %v2985 = vld [vmem:[%s2762 + $0x7c] sm:$0xff]
        %v2986 = vld [vmem:[%s2762 + $0x84] sm:$0xff]
        %v2987 = vld [vmem:[%s2762 + $0x94] sm:$0xff]
        %v2988 = vld [vmem:[%s2762 + $0x9c] sm:$0xff]
        %v2989 = vld [vmem:[%s2762 + $0xac] sm:$0xff]
        %v2990 = vld [vmem:[%s2762 + $0xb4] sm:$0xff]
        %v2991 = vld [vmem:[%s1 + $0x2e] sm:$0x1]
        %v2992 = vlaneseq
        %v2993 = vshrl.u32 %v2992, 7
        %v2994 = vsub.s32 0, %v2993
        %v2995 = vrot.slane %v2991, %v2994
        %v2996 = vmul.f32 %v2975, %v2995
        %v2997 = vmul.f32 %v2976, %v2995
        %v2998 = vmul.f32 %v2977, %v2995
        %v2999 = vmul.f32 %v2978, %v2995
        %v3000 = vmul.f32 %v2979, %v2995
        %v3001 = vmul.f32 %v2980, %v2995
        %v3002 = vmul.f32 %v2981, %v2995
        %v3003 = vmul.f32 %v2982, %v2995
        %v3004 = vmul.f32 %v2983, %v2995
        %v3005 = vmul.f32 %v2984, %v2995
        %v3006 = vmul.f32 %v2985, %v2995
        %v3007 = vmul.f32 %v2986, %v2995
        %v3008 = vmul.f32 %v2987, %v2995
        %v3009 = vmul.f32 %v2988, %v2995
        %v3010 = vmul.f32 %v2989, %v2995
        %v3011 = vmul.f32 %v2990, %v2995
        %v3012 = vadd.f32 %v2959, %v2996
        %v3013 = vadd.f32 %v2960, %v2997
        %v3014 = vadd.f32 %v2961, %v2998
        %v3015 = vadd.f32 %v2962, %v2999
        %v3016 = vadd.f32 %v2963, %v3000
        %v3017 = vadd.f32 %v2964, %v3001
        %v3018 = vadd.f32 %v2965, %v3002
        %v3019 = vadd.f32 %v2966, %v3003
        %v3020 = vadd.f32 %v2967, %v3004
        %v3021 = vadd.f32 %v2968, %v3005
        %v3022 = vadd.f32 %v2969, %v3006
        %v3023 = vadd.f32 %v2970, %v3007
        %v3024 = vadd.f32 %v2971, %v3008
        %v3025 = vadd.f32 %v2972, %v3009
        %v3026 = vadd.f32 %v2973, %v3010
        %v3027 = vadd.f32 %v2974, %v3011
        %v3028 = vld [vmem:[%s2762 + $0x5] sm:$0xff]
        %v3029 = vld [vmem:[%s2762 + $0xd] sm:$0xff]
        %v3030 = vld [vmem:[%s2762 + $0x1d] sm:$0xff]
        %v3031 = vld [vmem:[%s2762 + $0x25] sm:$0xff]
        %v3032 = vld [vmem:[%s2762 + $0x35] sm:$0xff]
        %v3033 = vld [vmem:[%s2762 + $0x3d] sm:$0xff]
        %v3034 = vld [vmem:[%s2762 + $0x4d] sm:$0xff]
        %v3035 = vld [vmem:[%s2762 + $0x55] sm:$0xff]
        %v3036 = vld [vmem:[%s2762 + $0x65] sm:$0xff]
        %v3037 = vld [vmem:[%s2762 + $0x6d] sm:$0xff]
        %v3038 = vld [vmem:[%s2762 + $0x7d] sm:$0xff]
        %v3039 = vld [vmem:[%s2762 + $0x85] sm:$0xff]
        %v3040 = vld [vmem:[%s2762 + $0x95] sm:$0xff]
        %v3041 = vld [vmem:[%s2762 + $0x9d] sm:$0xff]
        %v3042 = vld [vmem:[%s2762 + $0xad] sm:$0xff]
        %v3043 = vld [vmem:[%s2762 + $0xb5] sm:$0xff]
        %v3044 = vld [vmem:[%s1 + $0x2f] sm:$0x1]
        %v3045 = vlaneseq
        %v3046 = vshrl.u32 %v3045, 7
        %v3047 = vsub.s32 0, %v3046
        %v3048 = vrot.slane %v3044, %v3047
        %v3049 = vmul.f32 %v3028, %v3048
        %v3050 = vmul.f32 %v3029, %v3048
        %v3051 = vmul.f32 %v3030, %v3048
        %v3052 = vmul.f32 %v3031, %v3048
        %v3053 = vmul.f32 %v3032, %v3048
        %v3054 = vmul.f32 %v3033, %v3048
        %v3055 = vmul.f32 %v3034, %v3048
        %v3056 = vmul.f32 %v3035, %v3048
        %v3057 = vmul.f32 %v3036, %v3048
        %v3058 = vmul.f32 %v3037, %v3048
        %v3059 = vmul.f32 %v3038, %v3048
        %v3060 = vmul.f32 %v3039, %v3048
        %v3061 = vmul.f32 %v3040, %v3048
        %v3062 = vmul.f32 %v3041, %v3048
        %v3063 = vmul.f32 %v3042, %v3048
        %v3064 = vmul.f32 %v3043, %v3048
        %v3065 = vadd.f32 %v3012, %v3049
        %v3066 = vadd.f32 %v3013, %v3050
        %v3067 = vadd.f32 %v3014, %v3051
        %v3068 = vadd.f32 %v3015, %v3052
        %v3069 = vadd.f32 %v3016, %v3053
        %v3070 = vadd.f32 %v3017, %v3054
        %v3071 = vadd.f32 %v3018, %v3055
        %v3072 = vadd.f32 %v3019, %v3056
        %v3073 = vadd.f32 %v3020, %v3057
        %v3074 = vadd.f32 %v3021, %v3058
        %v3075 = vadd.f32 %v3022, %v3059
        %v3076 = vadd.f32 %v3023, %v3060
        %v3077 = vadd.f32 %v3024, %v3061
        %v3078 = vadd.f32 %v3025, %v3062
        %v3079 = vadd.f32 %v3026, %v3063
        %v3080 = vadd.f32 %v3027, %v3064
        %v3081 = vld [vmem:[%s2762 + $0x6] sm:$0xff]
        %v3082 = vld [vmem:[%s2762 + $0xe] sm:$0xff]
        %v3083 = vld [vmem:[%s2762 + $0x1e] sm:$0xff]
        %v3084 = vld [vmem:[%s2762 + $0x26] sm:$0xff]
        %v3085 = vld [vmem:[%s2762 + $0x36] sm:$0xff]
        %v3086 = vld [vmem:[%s2762 + $0x3e] sm:$0xff]
        %v3087 = vld [vmem:[%s2762 + $0x4e] sm:$0xff]
        %v3088 = vld [vmem:[%s2762 + $0x56] sm:$0xff]
        %v3089 = vld [vmem:[%s2762 + $0x66] sm:$0xff]
        %v3090 = vld [vmem:[%s2762 + $0x6e] sm:$0xff]
        %v3091 = vld [vmem:[%s2762 + $0x7e] sm:$0xff]
        %v3092 = vld [vmem:[%s2762 + $0x86] sm:$0xff]
        %v3093 = vld [vmem:[%s2762 + $0x96] sm:$0xff]
        %v3094 = vld [vmem:[%s2762 + $0x9e] sm:$0xff]
        %v3095 = vld [vmem:[%s2762 + $0xae] sm:$0xff]
        %v3096 = vld [vmem:[%s2762 + $0xb6] sm:$0xff]
        %v3097 = vld [vmem:[%s1 + $0x30] sm:$0x1]
        %v3098 = vlaneseq
        %v3099 = vshrl.u32 %v3098, 7
        %v3100 = vsub.s32 0, %v3099
        %v3101 = vrot.slane %v3097, %v3100
        %v3102 = vmul.f32 %v3081, %v3101
        %v3103 = vmul.f32 %v3082, %v3101
        %v3104 = vmul.f32 %v3083, %v3101
        %v3105 = vmul.f32 %v3084, %v3101
        %v3106 = vmul.f32 %v3085, %v3101
        %v3107 = vmul.f32 %v3086, %v3101
        %v3108 = vmul.f32 %v3087, %v3101
        %v3109 = vmul.f32 %v3088, %v3101
        %v3110 = vmul.f32 %v3089, %v3101
        %v3111 = vmul.f32 %v3090, %v3101
        %v3112 = vmul.f32 %v3091, %v3101
        %v3113 = vmul.f32 %v3092, %v3101
        %v3114 = vmul.f32 %v3093, %v3101
        %v3115 = vmul.f32 %v3094, %v3101
        %v3116 = vmul.f32 %v3095, %v3101
        %v3117 = vmul.f32 %v3096, %v3101
        %v3118 = vadd.f32 %v3065, %v3102
        %v3119 = vadd.f32 %v3066, %v3103
        %v3120 = vadd.f32 %v3067, %v3104
        %v3121 = vadd.f32 %v3068, %v3105
        %v3122 = vadd.f32 %v3069, %v3106
        %v3123 = vadd.f32 %v3070, %v3107
        %v3124 = vadd.f32 %v3071, %v3108
        %v3125 = vadd.f32 %v3072, %v3109
        %v3126 = vadd.f32 %v3073, %v3110
        %v3127 = vadd.f32 %v3074, %v3111
        %v3128 = vadd.f32 %v3075, %v3112
        %v3129 = vadd.f32 %v3076, %v3113
        %v3130 = vadd.f32 %v3077, %v3114
        %v3131 = vadd.f32 %v3078, %v3115
        %v3132 = vadd.f32 %v3079, %v3116
        %v3133 = vadd.f32 %v3080, %v3117
        %s3134 = smul.u32 %s510, 16
        %s3135 = scalar_lea.vmem [#allocation3], %s3134
        %3136 = vst [vmem:[%s3135] sm:$0xff] %v3118
        %3137 = vst [vmem:[%s3135 + $0x8] sm:$0xff] %v3119
        %3138 = vst [vmem:[%s3135 + $0x10] sm:$0xff] %v3120
        %3139 = vst [vmem:[%s3135 + $0x18] sm:$0xff] %v3121
        %3140 = vst [vmem:[%s3135 + $0x20] sm:$0xff] %v3122
        %3141 = vst [vmem:[%s3135 + $0x28] sm:$0xff] %v3123
        %3142 = vst [vmem:[%s3135 + $0x30] sm:$0xff] %v3124
        %3143 = vst [vmem:[%s3135 + $0x38] sm:$0xff] %v3125
        %3144 = vst [vmem:[%s3135 + $0x40] sm:$0xff] %v3126
        %3145 = vst [vmem:[%s3135 + $0x48] sm:$0xff] %v3127
        %3146 = vst [vmem:[%s3135 + $0x50] sm:$0xff] %v3128
        %3147 = vst [vmem:[%s3135 + $0x58] sm:$0xff] %v3129
        %3148 = vst [vmem:[%s3135 + $0x60] sm:$0xff] %v3130
        %3149 = vst [vmem:[%s3135 + $0x68] sm:$0xff] %v3131
        %3150 = vst [vmem:[%s3135 + $0x70] sm:$0xff] %v3132
        %3151 = vst [vmem:[%s3135 + $0x78] sm:$0xff] %v3133
      $region69: #{convnext_block.1} parent=63 // loop_footer
        %s509 = sadd.s32 1, %s505
      $region70: #{convnext_block.1} parent=63 // loop_footer_branch
        %504 = sbr.rel target = $region66
      $region71: #{convnext_block.1} parent=63 // loop_exit
        _
      %v3152 = vld [vmem:[%s3] sm:$0x1]
      %v3153 = vld [vmem:[%s4] sm:$0x1]
      %v3154 = vld [vmem:[%s6] sm:$0x1]
      %v3155 = vld [vmem:[#allocation3] sm:$0xff]
      %v3156 = vld [vmem:[#allocation3 + $0x8] sm:$0xff]
      %v3157 = vld [vmem:[#allocation3 + $0x10] sm:$0xff]
      %v3158 = vld [vmem:[#allocation3 + $0x18] sm:$0xff]
      %v3159 = vld [vmem:[#allocation3 + $0x20] sm:$0xff]
      %v3160 = vld [vmem:[#allocation3 + $0x28] sm:$0xff]
      %v3161 = vld [vmem:[#allocation3 + $0x30] sm:$0xff]
      %v3162 = vld [vmem:[#allocation3 + $0x38] sm:$0xff]
      %v3163 = vld [vmem:[#allocation3 + $0x40] sm:$0xff]
      %v3164 = vld [vmem:[#allocation3 + $0x48] sm:$0xff]
      %v3165 = vld [vmem:[#allocation3 + $0x50] sm:$0xff]
      %v3166 = vld [vmem:[#allocation3 + $0x58] sm:$0xff]
      %v3167 = vld [vmem:[#allocation3 + $0x60] sm:$0xff]
      %v3168 = vld [vmem:[#allocation3 + $0x68] sm:$0xff]
      %v3169 = vld [vmem:[#allocation3 + $0x70] sm:$0xff]
      %v3170 = vld [vmem:[#allocation3 + $0x78] sm:$0xff]
      %v3171 = vld [vmem:[#allocation3 + $0x80] sm:$0xff]
      %v3172 = vld [vmem:[#allocation3 + $0x88] sm:$0xff]
      %v3173 = vld [vmem:[#allocation3 + $0x90] sm:$0xff]
      %v3174 = vld [vmem:[#allocation3 + $0x98] sm:$0xff]
      %v3175 = vld [vmem:[#allocation3 + $0xa0] sm:$0xff]
      %v3176 = vld [vmem:[#allocation3 + $0xa8] sm:$0xff]
      %v3177 = vld [vmem:[#allocation3 + $0xb0] sm:$0xff]
      %v3178 = vld [vmem:[#allocation3 + $0xb8] sm:$0xff]
      %v3179 = vld [vmem:[#allocation3 + $0xc0] sm:$0xff]
      %v3180 = vld [vmem:[#allocation3 + $0xc8] sm:$0xff]
      %v3181 = vld [vmem:[#allocation3 + $0xd0] sm:$0xff]
      %v3182 = vld [vmem:[#allocation3 + $0xd8] sm:$0xff]
      %v3183 = vld [vmem:[#allocation3 + $0xe0] sm:$0xff]
      %v3184 = vld [vmem:[#allocation3 + $0xe8] sm:$0xff]
      %v3185 = vld [vmem:[#allocation3 + $0xf0] sm:$0xff]
      %v3186 = vld [vmem:[#allocation3 + $0xf8] sm:$0xff]
      %3187 = vadd.xlane.f32.xlu0 %v3155
      %v3188 = vpop.xlane.xlu0 %3187
      %3189 = vadd.xlane.f32.xlu0 %v3156
      %v3190 = vpop.xlane.xlu0 %3189
      %3191 = vadd.xlane.f32.xlu0 %v3157
      %v3192 = vpop.xlane.xlu0 %3191
      %3193 = vadd.xlane.f32.xlu0 %v3158
      %v3194 = vpop.xlane.xlu0 %3193
      %3195 = vadd.xlane.f32.xlu0 %v3159
      %v3196 = vpop.xlane.xlu0 %3195
      %3197 = vadd.xlane.f32.xlu0 %v3160
      %v3198 = vpop.xlane.xlu0 %3197
      %3199 = vadd.xlane.f32.xlu0 %v3161
      %v3200 = vpop.xlane.xlu0 %3199
      %3201 = vadd.xlane.f32.xlu0 %v3162
      %v3202 = vpop.xlane.xlu0 %3201
      %3203 = vadd.xlane.f32.xlu0 %v3163
      %v3204 = vpop.xlane.xlu0 %3203
      %3205 = vadd.xlane.f32.xlu0 %v3164
      %v3206 = vpop.xlane.xlu0 %3205
      %3207 = vadd.xlane.f32.xlu0 %v3165
      %v3208 = vpop.xlane.xlu0 %3207
      %3209 = vadd.xlane.f32.xlu0 %v3166
      %v3210 = vpop.xlane.xlu0 %3209
      %3211 = vadd.xlane.f32.xlu0 %v3167
      %v3212 = vpop.xlane.xlu0 %3211
      %3213 = vadd.xlane.f32.xlu0 %v3168
      %v3214 = vpop.xlane.xlu0 %3213
      %3215 = vadd.xlane.f32.xlu0 %v3169
      %v3216 = vpop.xlane.xlu0 %3215
      %3217 = vadd.xlane.f32.xlu0 %v3170
      %v3218 = vpop.xlane.xlu0 %3217
      %3219 = vadd.xlane.f32.xlu0 %v3171
      %v3220 = vpop.xlane.xlu0 %3219
      %3221 = vadd.xlane.f32.xlu0 %v3172
      %v3222 = vpop.xlane.xlu0 %3221
      %3223 = vadd.xlane.f32.xlu0 %v3173
      %v3224 = vpop.xlane.xlu0 %3223
      %3225 = vadd.xlane.f32.xlu0 %v3174
      %v3226 = vpop.xlane.xlu0 %3225
      %3227 = vadd.xlane.f32.xlu0 %v3175
      %v3228 = vpop.xlane.xlu0 %3227
      %3229 = vadd.xlane.f32.xlu0 %v3176
      %v3230 = vpop.xlane.xlu0 %3229
      %3231 = vadd.xlane.f32.xlu0 %v3177
      %v3232 = vpop.xlane.xlu0 %3231
      %3233 = vadd.xlane.f32.xlu0 %v3178
      %v3234 = vpop.xlane.xlu0 %3233
      %3235 = vadd.xlane.f32.xlu0 %v3179
      %v3236 = vpop.xlane.xlu0 %3235
      %3237 = vadd.xlane.f32.xlu0 %v3180
      %v3238 = vpop.xlane.xlu0 %3237
      %3239 = vadd.xlane.f32.xlu0 %v3181
      %v3240 = vpop.xlane.xlu0 %3239
      %3241 = vadd.xlane.f32.xlu0 %v3182
      %v3242 = vpop.xlane.xlu0 %3241
      %3243 = vadd.xlane.f32.xlu0 %v3183
      %v3244 = vpop.xlane.xlu0 %3243
      %3245 = vadd.xlane.f32.xlu0 %v3184
      %v3246 = vpop.xlane.xlu0 %3245
      %3247 = vadd.xlane.f32.xlu0 %v3185
      %v3248 = vpop.xlane.xlu0 %3247
      %3249 = vadd.xlane.f32.xlu0 %v3186
      %v3250 = vpop.xlane.xlu0 %3249
      %v3251 = vmul.f32 %v3188, 0.25
      %v3252 = vmul.f32 %v3190, 0.25
      %v3253 = vmul.f32 %v3192, 0.25
      %v3254 = vmul.f32 %v3194, 0.25
      %v3255 = vmul.f32 %v3196, 0.25
      %v3256 = vmul.f32 %v3198, 0.25
      %v3257 = vmul.f32 %v3200, 0.25
      %v3258 = vmul.f32 %v3202, 0.25
      %v3259 = vmul.f32 %v3204, 0.25
      %v3260 = vmul.f32 %v3206, 0.25
      %v3261 = vmul.f32 %v3208, 0.25
      %v3262 = vmul.f32 %v3210, 0.25
      %v3263 = vmul.f32 %v3212, 0.25
      %v3264 = vmul.f32 %v3214, 0.25
      %v3265 = vmul.f32 %v3216, 0.25
      %v3266 = vmul.f32 %v3218, 0.25
      %v3267 = vmul.f32 %v3220, 0.25
      %v3268 = vmul.f32 %v3222, 0.25
      %v3269 = vmul.f32 %v3224, 0.25
      %v3270 = vmul.f32 %v3226, 0.25
      %v3271 = vmul.f32 %v3228, 0.25
      %v3272 = vmul.f32 %v3230, 0.25
      %v3273 = vmul.f32 %v3232, 0.25
      %v3274 = vmul.f32 %v3234, 0.25
      %v3275 = vmul.f32 %v3236, 0.25
      %v3276 = vmul.f32 %v3238, 0.25
      %v3277 = vmul.f32 %v3240, 0.25
      %v3278 = vmul.f32 %v3242, 0.25
      %v3279 = vmul.f32 %v3244, 0.25
      %v3280 = vmul.f32 %v3246, 0.25
      %v3281 = vmul.f32 %v3248, 0.25
      %v3282 = vmul.f32 %v3250, 0.25
      %v3283 = vmul.f32 %v3155, %v3155
      %v3284 = vmul.f32 %v3156, %v3156
      %v3285 = vmul.f32 %v3157, %v3157
      %v3286 = vmul.f32 %v3158, %v3158
      %v3287 = vmul.f32 %v3159, %v3159
      %v3288 = vmul.f32 %v3160, %v3160
      %v3289 = vmul.f32 %v3161, %v3161
      %v3290 = vmul.f32 %v3162, %v3162
      %v3291 = vmul.f32 %v3163, %v3163
      %v3292 = vmul.f32 %v3164, %v3164
      %v3293 = vmul.f32 %v3165, %v3165
      %v3294 = vmul.f32 %v3166, %v3166
      %v3295 = vmul.f32 %v3167, %v3167
      %v3296 = vmul.f32 %v3168, %v3168
      %v3297 = vmul.f32 %v3169, %v3169
      %v3298 = vmul.f32 %v3170, %v3170
      %v3299 = vmul.f32 %v3171, %v3171
      %v3300 = vmul.f32 %v3172, %v3172
      %v3301 = vmul.f32 %v3173, %v3173
      %v3302 = vmul.f32 %v3174, %v3174
      %v3303 = vmul.f32 %v3175, %v3175
      %v3304 = vmul.f32 %v3176, %v3176
      %v3305 = vmul.f32 %v3177, %v3177
      %v3306 = vmul.f32 %v3178, %v3178
      %v3307 = vmul.f32 %v3179, %v3179
      %v3308 = vmul.f32 %v3180, %v3180
      %v3309 = vmul.f32 %v3181, %v3181
      %v3310 = vmul.f32 %v3182, %v3182
      %v3311 = vmul.f32 %v3183, %v3183
      %v3312 = vmul.f32 %v3184, %v3184
      %v3313 = vmul.f32 %v3185, %v3185
      %v3314 = vmul.f32 %v3186, %v3186
      %3315 = vadd.xlane.f32.xlu0 %v3283
      %v3316 = vpop.xlane.xlu0 %3315
      %3317 = vadd.xlane.f32.xlu0 %v3284
      %v3318 = vpop.xlane.xlu0 %3317
      %3319 = vadd.xlane.f32.xlu0 %v3285
      %v3320 = vpop.xlane.xlu0 %3319
      %3321 = vadd.xlane.f32.xlu0 %v3286
      %v3322 = vpop.xlane.xlu0 %3321
      %3323 = vadd.xlane.f32.xlu0 %v3287
      %v3324 = vpop.xlane.xlu0 %3323
      %3325 = vadd.xlane.f32.xlu0 %v3288
      %v3326 = vpop.xlane.xlu0 %3325
      %3327 = vadd.xlane.f32.xlu0 %v3289
      %v3328 = vpop.xlane.xlu0 %3327
      %3329 = vadd.xlane.f32.xlu0 %v3290
      %v3330 = vpop.xlane.xlu0 %3329
      %3331 = vadd.xlane.f32.xlu0 %v3291
      %v3332 = vpop.xlane.xlu0 %3331
      %3333 = vadd.xlane.f32.xlu0 %v3292
      %v3334 = vpop.xlane.xlu0 %3333
      %3335 = vadd.xlane.f32.xlu0 %v3293
      %v3336 = vpop.xlane.xlu0 %3335
      %3337 = vadd.xlane.f32.xlu0 %v3294
      %v3338 = vpop.xlane.xlu0 %3337
      %3339 = vadd.xlane.f32.xlu0 %v3295
      %v3340 = vpop.xlane.xlu0 %3339
      %3341 = vadd.xlane.f32.xlu0 %v3296
      %v3342 = vpop.xlane.xlu0 %3341
      %3343 = vadd.xlane.f32.xlu0 %v3297
      %v3344 = vpop.xlane.xlu0 %3343
      %3345 = vadd.xlane.f32.xlu0 %v3298
      %v3346 = vpop.xlane.xlu0 %3345
      %3347 = vadd.xlane.f32.xlu0 %v3299
      %v3348 = vpop.xlane.xlu0 %3347
      %3349 = vadd.xlane.f32.xlu0 %v3300
      %v3350 = vpop.xlane.xlu0 %3349
      %3351 = vadd.xlane.f32.xlu0 %v3301
      %v3352 = vpop.xlane.xlu0 %3351
      %3353 = vadd.xlane.f32.xlu0 %v3302
      %v3354 = vpop.xlane.xlu0 %3353
      %3355 = vadd.xlane.f32.xlu0 %v3303
      %v3356 = vpop.xlane.xlu0 %3355
      %3357 = vadd.xlane.f32.xlu0 %v3304
      %v3358 = vpop.xlane.xlu0 %3357
      %3359 = vadd.xlane.f32.xlu0 %v3305
      %v3360 = vpop.xlane.xlu0 %3359
      %3361 = vadd.xlane.f32.xlu0 %v3306
      %v3362 = vpop.xlane.xlu0 %3361
      %3363 = vadd.xlane.f32.xlu0 %v3307
      %v3364 = vpop.xlane.xlu0 %3363
      %3365 = vadd.xlane.f32.xlu0 %v3308
      %v3366 = vpop.xlane.xlu0 %3365
      %3367 = vadd.xlane.f32.xlu0 %v3309
      %v3368 = vpop.xlane.xlu0 %3367
      %3369 = vadd.xlane.f32.xlu0 %v3310
      %v3370 = vpop.xlane.xlu0 %3369
      %3371 = vadd.xlane.f32.xlu0 %v3311
      %v3372 = vpop.xlane.xlu0 %3371
      %3373 = vadd.xlane.f32.xlu0 %v3312
      %v3374 = vpop.xlane.xlu0 %3373
      %3375 = vadd.xlane.f32.xlu0 %v3313
      %v3376 = vpop.xlane.xlu0 %3375
      %3377 = vadd.xlane.f32.xlu0 %v3314
      %v3378 = vpop.xlane.xlu0 %3377
      %v3379 = vmul.f32 %v3316, 0.25
      %v3380 = vmul.f32 %v3318, 0.25
      %v3381 = vmul.f32 %v3320, 0.25
      %v3382 = vmul.f32 %v3322, 0.25
      %v3383 = vmul.f32 %v3324, 0.25
      %v3384 = vmul.f32 %v3326, 0.25
      %v3385 = vmul.f32 %v3328, 0.25
      %v3386 = vmul.f32 %v3330, 0.25
      %v3387 = vmul.f32 %v3332, 0.25
      %v3388 = vmul.f32 %v3334, 0.25
      %v3389 = vmul.f32 %v3336, 0.25
      %v3390 = vmul.f32 %v3338, 0.25
      %v3391 = vmul.f32 %v3340, 0.25
      %v3392 = vmul.f32 %v3342, 0.25
      %v3393 = vmul.f32 %v3344, 0.25
      %v3394 = vmul.f32 %v3346, 0.25
      %v3395 = vmul.f32 %v3348, 0.25
      %v3396 = vmul.f32 %v3350, 0.25
      %v3397 = vmul.f32 %v3352, 0.25
      %v3398 = vmul.f32 %v3354, 0.25
      %v3399 = vmul.f32 %v3356, 0.25
      %v3400 = vmul.f32 %v3358, 0.25
      %v3401 = vmul.f32 %v3360, 0.25
      %v3402 = vmul.f32 %v3362, 0.25
      %v3403 = vmul.f32 %v3364, 0.25
      %v3404 = vmul.f32 %v3366, 0.25
      %v3405 = vmul.f32 %v3368, 0.25
      %v3406 = vmul.f32 %v3370, 0.25
      %v3407 = vmul.f32 %v3372, 0.25
      %v3408 = vmul.f32 %v3374, 0.25
      %v3409 = vmul.f32 %v3376, 0.25
      %v3410 = vmul.f32 %v3378, 0.25
      %v3411 = vmul.f32 %v3251, %v3251
      %v3412 = vmul.f32 %v3252, %v3252
      %v3413 = vmul.f32 %v3253, %v3253
      %v3414 = vmul.f32 %v3254, %v3254
      %v3415 = vmul.f32 %v3255, %v3255
      %v3416 = vmul.f32 %v3256, %v3256
      %v3417 = vmul.f32 %v3257, %v3257
      %v3418 = vmul.f32 %v3258, %v3258
      %v3419 = vmul.f32 %v3259, %v3259
      %v3420 = vmul.f32 %v3260, %v3260
      %v3421 = vmul.f32 %v3261, %v3261
      %v3422 = vmul.f32 %v3262, %v3262
      %v3423 = vmul.f32 %v3263, %v3263
      %v3424 = vmul.f32 %v3264, %v3264
      %v3425 = vmul.f32 %v3265, %v3265
      %v3426 = vmul.f32 %v3266, %v3266
      %v3427 = vmul.f32 %v3267, %v3267
      %v3428 = vmul.f32 %v3268, %v3268
      %v3429 = vmul.f32 %v3269, %v3269
      %v3430 = vmul.f32 %v3270, %v3270
      %v3431 = vmul.f32 %v3271, %v3271
      %v3432 = vmul.f32 %v3272, %v3272
      %v3433 = vmul.f32 %v3273, %v3273
      %v3434 = vmul.f32 %v3274, %v3274
      %v3435 = vmul.f32 %v3275, %v3275
      %v3436 = vmul.f32 %v3276, %v3276
      %v3437 = vmul.f32 %v3277, %v3277
      %v3438 = vmul.f32 %v3278, %v3278
      %v3439 = vmul.f32 %v3279, %v3279
      %v3440 = vmul.f32 %v3280, %v3280
      %v3441 = vmul.f32 %v3281, %v3281
      %v3442 = vmul.f32 %v3282, %v3282
      %v3443 = vsub.f32 %v3379, %v3411
      %v3444 = vsub.f32 %v3380, %v3412
      %v3445 = vsub.f32 %v3381, %v3413
      %v3446 = vsub.f32 %v3382, %v3414
      %v3447 = vsub.f32 %v3383, %v3415
      %v3448 = vsub.f32 %v3384, %v3416
      %v3449 = vsub.f32 %v3385, %v3417
      %v3450 = vsub.f32 %v3386, %v3418
      %v3451 = vsub.f32 %v3387, %v3419
      %v3452 = vsub.f32 %v3388, %v3420
      %v3453 = vsub.f32 %v3389, %v3421
      %v3454 = vsub.f32 %v3390, %v3422
      %v3455 = vsub.f32 %v3391, %v3423
      %v3456 = vsub.f32 %v3392, %v3424
      %v3457 = vsub.f32 %v3393, %v3425
      %v3458 = vsub.f32 %v3394, %v3426
      %v3459 = vsub.f32 %v3395, %v3427
      %v3460 = vsub.f32 %v3396, %v3428
      %v3461 = vsub.f32 %v3397, %v3429
      %v3462 = vsub.f32 %v3398, %v3430
      %v3463 = vsub.f32 %v3399, %v3431
      %v3464 = vsub.f32 %v3400, %v3432
      %v3465 = vsub.f32 %v3401, %v3433
      %v3466 = vsub.f32 %v3402, %v3434
      %v3467 = vsub.f32 %v3403, %v3435
      %v3468 = vsub.f32 %v3404, %v3436
      %v3469 = vsub.f32 %v3405, %v3437
      %v3470 = vsub.f32 %v3406, %v3438
      %v3471 = vsub.f32 %v3407, %v3439
      %v3472 = vsub.f32 %v3408, %v3440
      %v3473 = vsub.f32 %v3409, %v3441
      %v3474 = vsub.f32 %v3410, %v3442
      %v3475 = vsub.f32 %v3155, %v3251
      %v3476 = vsub.f32 %v3156, %v3252
      %v3477 = vsub.f32 %v3157, %v3253
      %v3478 = vsub.f32 %v3158, %v3254
      %v3479 = vsub.f32 %v3159, %v3255
      %v3480 = vsub.f32 %v3160, %v3256
      %v3481 = vsub.f32 %v3161, %v3257
      %v3482 = vsub.f32 %v3162, %v3258
      %v3483 = vsub.f32 %v3163, %v3259
      %v3484 = vsub.f32 %v3164, %v3260
      %v3485 = vsub.f32 %v3165, %v3261
      %v3486 = vsub.f32 %v3166, %v3262
      %v3487 = vsub.f32 %v3167, %v3263
      %v3488 = vsub.f32 %v3168, %v3264
      %v3489 = vsub.f32 %v3169, %v3265
      %v3490 = vsub.f32 %v3170, %v3266
      %v3491 = vsub.f32 %v3171, %v3267
      %v3492 = vsub.f32 %v3172, %v3268
      %v3493 = vsub.f32 %v3173, %v3269
      %v3494 = vsub.f32 %v3174, %v3270
      %v3495 = vsub.f32 %v3175, %v3271
      %v3496 = vsub.f32 %v3176, %v3272
      %v3497 = vsub.f32 %v3177, %v3273
      %v3498 = vsub.f32 %v3178, %v3274
      %v3499 = vsub.f32 %v3179, %v3275
      %v3500 = vsub.f32 %v3180, %v3276
      %v3501 = vsub.f32 %v3181, %v3277
      %v3502 = vsub.f32 %v3182, %v3278
      %v3503 = vsub.f32 %v3183, %v3279
      %v3504 = vsub.f32 %v3184, %v3280
      %v3505 = vsub.f32 %v3185, %v3281
      %v3506 = vsub.f32 %v3186, %v3282
      %v3507 = vadd.f32 %v3443, 1e-06
      %v3508 = vadd.f32 %v3444, 1e-06
      %v3509 = vadd.f32 %v3445, 1e-06
      %v3510 = vadd.f32 %v3446, 1e-06
      %v3511 = vadd.f32 %v3447, 1e-06
      %v3512 = vadd.f32 %v3448, 1e-06
      %v3513 = vadd.f32 %v3449, 1e-06
      %v3514 = vadd.f32 %v3450, 1e-06
      %v3515 = vadd.f32 %v3451, 1e-06
      %v3516 = vadd.f32 %v3452, 1e-06
      %v3517 = vadd.f32 %v3453, 1e-06
      %v3518 = vadd.f32 %v3454, 1e-06
      %v3519 = vadd.f32 %v3455, 1e-06
      %v3520 = vadd.f32 %v3456, 1e-06
      %v3521 = vadd.f32 %v3457, 1e-06
      %v3522 = vadd.f32 %v3458, 1e-06
      %v3523 = vadd.f32 %v3459, 1e-06
      %v3524 = vadd.f32 %v3460, 1e-06
      %v3525 = vadd.f32 %v3461, 1e-06
      %v3526 = vadd.f32 %v3462, 1e-06
      %v3527 = vadd.f32 %v3463, 1e-06
      %v3528 = vadd.f32 %v3464, 1e-06
      %v3529 = vadd.f32 %v3465, 1e-06
      %v3530 = vadd.f32 %v3466, 1e-06
      %v3531 = vadd.f32 %v3467, 1e-06
      %v3532 = vadd.f32 %v3468, 1e-06
      %v3533 = vadd.f32 %v3469, 1e-06
      %v3534 = vadd.f32 %v3470, 1e-06
      %v3535 = vadd.f32 %v3471, 1e-06
      %v3536 = vadd.f32 %v3472, 1e-06
      %v3537 = vadd.f32 %v3473, 1e-06
      %v3538 = vadd.f32 %v3474, 1e-06
      %v3539 = vrsqrt.pop %v3507
      %v3540 = vrsqrt.pop %v3508
      %v3541 = vrsqrt.pop %v3509
      %v3542 = vrsqrt.pop %v3510
      %v3543 = vrsqrt.pop %v3511
      %v3544 = vrsqrt.pop %v3512
      %v3545 = vrsqrt.pop %v3513
      %v3546 = vrsqrt.pop %v3514
      %v3547 = vrsqrt.pop %v3515
      %v3548 = vrsqrt.pop %v3516
      %v3549 = vrsqrt.pop %v3517
      %v3550 = vrsqrt.pop %v3518
      %v3551 = vrsqrt.pop %v3519
      %v3552 = vrsqrt.pop %v3520
      %v3553 = vrsqrt.pop %v3521
      %v3554 = vrsqrt.pop %v3522
      %v3555 = vrsqrt.pop %v3523
      %v3556 = vrsqrt.pop %v3524
      %v3557 = vrsqrt.pop %v3525
      %v3558 = vrsqrt.pop %v3526
      %v3559 = vrsqrt.pop %v3527
      %v3560 = vrsqrt.pop %v3528
      %v3561 = vrsqrt.pop %v3529
      %v3562 = vrsqrt.pop %v3530
      %v3563 = vrsqrt.pop %v3531
      %v3564 = vrsqrt.pop %v3532
      %v3565 = vrsqrt.pop %v3533
      %v3566 = vrsqrt.pop %v3534
      %v3567 = vrsqrt.pop %v3535
      %v3568 = vrsqrt.pop %v3536
      %v3569 = vrsqrt.pop %v3537
      %v3570 = vrsqrt.pop %v3538
      %v3571 = vmul.f32 %v3475, %v3539
      %v3572 = vmul.f32 %v3476, %v3540
      %v3573 = vmul.f32 %v3477, %v3541
      %v3574 = vmul.f32 %v3478, %v3542
      %v3575 = vmul.f32 %v3479, %v3543
      %v3576 = vmul.f32 %v3480, %v3544
      %v3577 = vmul.f32 %v3481, %v3545
      %v3578 = vmul.f32 %v3482, %v3546
      %v3579 = vmul.f32 %v3483, %v3547
      %v3580 = vmul.f32 %v3484, %v3548
      %v3581 = vmul.f32 %v3485, %v3549
      %v3582 = vmul.f32 %v3486, %v3550
      %v3583 = vmul.f32 %v3487, %v3551
      %v3584 = vmul.f32 %v3488, %v3552
      %v3585 = vmul.f32 %v3489, %v3553
      %v3586 = vmul.f32 %v3490, %v3554
      %v3587 = vmul.f32 %v3491, %v3555
      %v3588 = vmul.f32 %v3492, %v3556
      %v3589 = vmul.f32 %v3493, %v3557
      %v3590 = vmul.f32 %v3494, %v3558
      %v3591 = vmul.f32 %v3495, %v3559
      %v3592 = vmul.f32 %v3496, %v3560
      %v3593 = vmul.f32 %v3497, %v3561
      %v3594 = vmul.f32 %v3498, %v3562
      %v3595 = vmul.f32 %v3499, %v3563
      %v3596 = vmul.f32 %v3500, %v3564
      %v3597 = vmul.f32 %v3501, %v3565
      %v3598 = vmul.f32 %v3502, %v3566
      %v3599 = vmul.f32 %v3503, %v3567
      %v3600 = vmul.f32 %v3504, %v3568
      %v3601 = vmul.f32 %v3505, %v3569
      %v3602 = vmul.f32 %v3506, %v3570
      %v3604 = vlaneseq
      %v3605 = vshrl.u32 %v3604, 7
      %v3606 = vsub.s32 0, %v3605
      %v3607 = vrot.slane %v3152, %v3606
      %v3609 = vmul.f32 %v3571, %v3607
      %v3610 = vmul.f32 %v3572, %v3607
      %v3611 = vmul.f32 %v3573, %v3607
      %v3612 = vmul.f32 %v3574, %v3607
      %v3613 = vmul.f32 %v3575, %v3607
      %v3614 = vmul.f32 %v3576, %v3607
      %v3615 = vmul.f32 %v3577, %v3607
      %v3616 = vmul.f32 %v3578, %v3607
      %v3617 = vmul.f32 %v3579, %v3607
      %v3618 = vmul.f32 %v3580, %v3607
      %v3619 = vmul.f32 %v3581, %v3607
      %v3620 = vmul.f32 %v3582, %v3607
      %v3621 = vmul.f32 %v3583, %v3607
      %v3622 = vmul.f32 %v3584, %v3607
      %v3623 = vmul.f32 %v3585, %v3607
      %v3624 = vmul.f32 %v3586, %v3607
      %v3625 = vmul.f32 %v3587, %v3607
      %v3626 = vmul.f32 %v3588, %v3607
      %v3627 = vmul.f32 %v3589, %v3607
      %v3628 = vmul.f32 %v3590, %v3607
      %v3629 = vmul.f32 %v3591, %v3607
      %v3630 = vmul.f32 %v3592, %v3607
      %v3631 = vmul.f32 %v3593, %v3607
      %v3632 = vmul.f32 %v3594, %v3607
      %v3633 = vmul.f32 %v3595, %v3607
      %v3634 = vmul.f32 %v3596, %v3607
      %v3635 = vmul.f32 %v3597, %v3607
      %v3636 = vmul.f32 %v3598, %v3607
      %v3637 = vmul.f32 %v3599, %v3607
      %v3638 = vmul.f32 %v3600, %v3607
      %v3639 = vmul.f32 %v3601, %v3607
      %v3640 = vmul.f32 %v3602, %v3607
      %v3642 = vlaneseq
      %v3643 = vshrl.u32 %v3642, 7
      %v3644 = vsub.s32 0, %v3643
      %v3645 = vrot.slane %v3153, %v3644
      %v3647 = vadd.f32 %v3609, %v3645
      %v3648 = vadd.f32 %v3610, %v3645
      %v3649 = vadd.f32 %v3611, %v3645
      %v3650 = vadd.f32 %v3612, %v3645
      %v3651 = vadd.f32 %v3613, %v3645
      %v3652 = vadd.f32 %v3614, %v3645
      %v3653 = vadd.f32 %v3615, %v3645
      %v3654 = vadd.f32 %v3616, %v3645
      %v3655 = vadd.f32 %v3617, %v3645
      %v3656 = vadd.f32 %v3618, %v3645
      %v3657 = vadd.f32 %v3619, %v3645
      %v3658 = vadd.f32 %v3620, %v3645
      %v3659 = vadd.f32 %v3621, %v3645
      %v3660 = vadd.f32 %v3622, %v3645
      %v3661 = vadd.f32 %v3623, %v3645
      %v3662 = vadd.f32 %v3624, %v3645
      %v3663 = vadd.f32 %v3625, %v3645
      %v3664 = vadd.f32 %v3626, %v3645
      %v3665 = vadd.f32 %v3627, %v3645
      %v3666 = vadd.f32 %v3628, %v3645
      %v3667 = vadd.f32 %v3629, %v3645
      %v3668 = vadd.f32 %v3630, %v3645
      %v3669 = vadd.f32 %v3631, %v3645
      %v3670 = vadd.f32 %v3632, %v3645
      %v3671 = vadd.f32 %v3633, %v3645
      %v3672 = vadd.f32 %v3634, %v3645
      %v3673 = vadd.f32 %v3635, %v3645
      %v3674 = vadd.f32 %v3636, %v3645
      %v3675 = vadd.f32 %v3637, %v3645
      %v3676 = vadd.f32 %v3638, %v3645
      %v3677 = vadd.f32 %v3639, %v3645
      %v3678 = vadd.f32 %v3640, %v3645
      %v3679 = vld [vmem:[%s5] sm:$0xff]
      %v3680 = vld [vmem:[%s5 + $0x8] sm:$0xff]
      %v3681 = vld [vmem:[%s5 + $0x10] sm:$0xff]
      %v3682 = vld [vmem:[%s5 + $0x18] sm:$0xff]
      %v3683 = vld [vmem:[%s5 + $0x20] sm:$0xff]
      %v3684 = vld [vmem:[%s5 + $0x28] sm:$0xff]
      %v3685 = vld [vmem:[%s5 + $0x30] sm:$0xff]
      %v3686 = vld [vmem:[%s5 + $0x38] sm:$0xff]
      %v3687 = vld [vmem:[%s5 + $0x40] sm:$0xff]
      %v3688 = vld [vmem:[%s5 + $0x48] sm:$0xff]
      %v3689 = vld [vmem:[%s5 + $0x50] sm:$0xff]
      %v3690 = vld [vmem:[%s5 + $0x58] sm:$0xff]
      %v3691 = vld [vmem:[%s5 + $0x60] sm:$0xff]
      %v3692 = vld [vmem:[%s5 + $0x68] sm:$0xff]
      %v3693 = vld [vmem:[%s5 + $0x70] sm:$0xff]
      %v3694 = vld [vmem:[%s5 + $0x78] sm:$0xff]
      %v3696 = vlaneseq
      %v3697 = vshrl.u32 %v3696, 7
      %v3698 = vsub.s32 0, %v3697
      %v3699 = vrot.slane %v3154, %v3698
      %3701 = vmatprep.subr.mxu0 0.0
      %3702 = vmatpush1.msra.mxu0 %v3679
      %3703 = vmatprep.subr.mxu0 0.0
      %3704 = vmatpush1.msra.mxu0 %v3680
      %3705 = vmatprep.subr.mxu0 0.0
      %3706 = vmatpush1.msra.mxu0 %v3681
      %3707 = vmatprep.subr.mxu0 0.0
      %3708 = vmatpush1.msra.mxu0 %v3682
      %3709 = vmatprep.subr.mxu0 0.0
      %3710 = vmatpush1.msra.mxu0 %v3683
      %3711 = vmatprep.subr.mxu0 0.0
      %3712 = vmatpush1.msra.mxu0 %v3684
      %3713 = vmatprep.subr.mxu0 0.0
      %3714 = vmatpush1.msra.mxu0 %v3685
      %3715 = vmatprep.subr.mxu0 0.0
      %3716 = vmatpush1.msra.mxu0 %v3686
      %3717 = vmatprep.subr.mxu0 0.0
      %3718 = vmatpush1.msra.mxu0 %v3687
      %3719 = vmatprep.subr.mxu0 0.0
      %3720 = vmatpush1.msra.mxu0 %v3688
      %3721 = vmatprep.subr.mxu0 0.0
      %3722 = vmatpush1.msra.mxu0 %v3689
      %3723 = vmatprep.subr.mxu0 0.0
      %3724 = vmatpush1.msra.mxu0 %v3690
      %3725 = vmatprep.subr.mxu0 0.0
      %3726 = vmatpush1.msra.mxu0 %v3691
      %3727 = vmatprep.subr.mxu0 0.0
      %3728 = vmatpush1.msra.mxu0 %v3692
      %3729 = vmatprep.subr.mxu0 0.0
      %3730 = vmatpush1.msra.mxu0 %v3693
      %3731 = vmatprep.subr.mxu0 0.0
      %3732 = vmatpush1.msra.mxu0 %v3694
      %3733 = vmatprep.subr.mxu0 0.0
      %3734 = vmatpush1.msra.mxu0 0.0
      %3735 = vmatprep.subr.mxu0 0.0
      %3736 = vmatpush1.msra.mxu0 0.0
      %3737 = vmatprep.subr.mxu0 0.0
      %3738 = vmatpush1.msra.mxu0 0.0
      %3739 = vmatprep.subr.mxu0 0.0
      %3740 = vmatpush1.msra.mxu0 0.0
      %3741 = vmatprep.subr.mxu0 0.0
      %3742 = vmatpush1.msra.mxu0 0.0
      %3743 = vmatprep.subr.mxu0 0.0
      %3744 = vmatpush1.msra.mxu0 0.0
      %3745 = vmatprep.subr.mxu0 0.0
      %3746 = vmatpush1.msra.mxu0 0.0
      %3747 = vmatprep.subr.mxu0 0.0
      %3748 = vmatpush1.msra.mxu0 0.0
      %3749 = vmatprep.subr.mxu0 0.0
      %3750 = vmatpush1.msra.mxu0 0.0
      %3751 = vmatprep.subr.mxu0 0.0
      %3752 = vmatpush1.msra.mxu0 0.0
      %3753 = vmatprep.subr.mxu0 0.0
      %3754 = vmatpush1.msra.mxu0 0.0
      %3755 = vmatprep.subr.mxu0 0.0
      %3756 = vmatpush1.msra.mxu0 0.0
      %3757 = vmatprep.subr.mxu0 0.0
      %3758 = vmatpush1.msra.mxu0 0.0
      %3759 = vmatprep.subr.mxu0 0.0
      %3760 = vmatpush1.msra.mxu0 0.0
      %3761 = vmatprep.subr.mxu0 0.0
      %3762 = vmatpush1.msra.mxu0 0.0
      %3763 = vmatprep.subr.mxu0 0.0
      %3764 = vmatpush1.msra.mxu0 0.0
      %3765 = vmatprep.mubr.f32.mxu0 0.0
      %3766 = vmatmul.mubr.f32.gmra.mrb[0].mxu0 %v3647
      %v3767 = vpop.f32.mrb[0].mxu0
      %v3768 = vadd.f32 %v3699, %v3767
      %v3769 = vpop.f32.mrb[0].mxu0
      %3770 = vmatprep.mubr.f32.mxu0 0.0
      %3771 = vmatmul.mubr.f32.gmra.mrb[0].mxu0 %v3648
      %v3772 = vpop.f32.mrb[0].mxu0
      %v3773 = vadd.f32 %v3699, %v3772
      %v3774 = vpop.f32.mrb[0].mxu0
      %3775 = vmatprep.mubr.f32.mxu0 0.0
      %3776 = vmatmul.mubr.f32.gmra.mrb[0].mxu0 %v3649
      %v3777 = vpop.f32.mrb[0].mxu0
      %v3778 = vadd.f32 %v3699, %v3777
      %v3779 = vpop.f32.mrb[0].mxu0
      %3780 = vmatprep.mubr.f32.mxu0 0.0
      %3781 = vmatmul.mubr.f32.gmra.mrb[0].mxu0 %v3650
      %v3782 = vpop.f32.mrb[0].mxu0
      %v3783 = vadd.f32 %v3699, %v3782
      %v3784 = vpop.f32.mrb[0].mxu0
      %3785 = vmatprep.mubr.f32.mxu0 0.0
      %3786 = vmatmul.mubr.f32.gmra.mrb[0].mxu0 %v3651
      %v3787 = vpop.f32.mrb[0].mxu0
      %v3788 = vadd.f32 %v3699, %v3787
      %v3789 = vpop.f32.mrb[0].mxu0
      %3790 = vmatprep.mubr.f32.mxu0 0.0
      %3791 = vmatmul.mubr.f32.gmra.mrb[0].mxu0 %v3652
      %v3792 = vpop.f32.mrb[0].mxu0
      %v3793 = vadd.f32 %v3699, %v3792
      %v3794 = vpop.f32.mrb[0].mxu0
      %3795 = vmatprep.mubr.f32.mxu0 0.0
      %3796 = vmatmul.mubr.f32.gmra.mrb[0].mxu0 %v3653
      %v3797 = vpop.f32.mrb[0].mxu0
      %v3798 = vadd.f32 %v3699, %v3797
      %v3799 = vpop.f32.mrb[0].mxu0
      %3800 = vmatprep.mubr.f32.mxu0 0.0
      %3801 = vmatmul.mubr.f32.gmra.mrb[0].mxu0 %v3654
      %v3802 = vpop.f32.mrb[0].mxu0
      %v3803 = vadd.f32 %v3699, %v3802
      %v3804 = vpop.f32.mrb[0].mxu0
      %3805 = vmatprep.mubr.f32.mxu0 0.0
      %3806 = vmatmul.mubr.f32.gmra.mrb[0].mxu0 %v3655
      %v3807 = vpop.f32.mrb[0].mxu0
      %v3808 = vadd.f32 %v3699, %v3807
      %v3809 = vpop.f32.mrb[0].mxu0
      %3810 = vmatprep.mubr.f32.mxu0 0.0
      %3811 = vmatmul.mubr.f32.gmra.mrb[0].mxu0 %v3656
      %v3812 = vpop.f32.mrb[0].mxu0
      %v3813 = vadd.f32 %v3699, %v3812
      %v3814 = vpop.f32.mrb[0].mxu0
      %3815 = vmatprep.mubr.f32.mxu0 0.0
      %3816 = vmatmul.mubr.f32.gmra.mrb[0].mxu0 %v3657
      %v3817 = vpop.f32.mrb[0].mxu0
      %v3818 = vadd.f32 %v3699, %v3817
      %v3819 = vpop.f32.mrb[0].mxu0
      %3820 = vmatprep.mubr.f32.mxu0 0.0
      %3821 = vmatmul.mubr.f32.gmra.mrb[0].mxu0 %v3658
      %v3822 = vpop.f32.mrb[0].mxu0
      %v3823 = vadd.f32 %v3699, %v3822
      %v3824 = vpop.f32.mrb[0].mxu0
      %3825 = vmatprep.mubr.f32.mxu0 0.0
      %3826 = vmatmul.mubr.f32.gmra.mrb[0].mxu0 %v3659
      %v3827 = vpop.f32.mrb[0].mxu0
      %v3828 = vadd.f32 %v3699, %v3827
      %v3829 = vpop.f32.mrb[0].mxu0
      %3830 = vmatprep.mubr.f32.mxu0 0.0
      %3831 = vmatmul.mubr.f32.gmra.mrb[0].mxu0 %v3660
      %v3832 = vpop.f32.mrb[0].mxu0
      %v3833 = vadd.f32 %v3699, %v3832
      %v3834 = vpop.f32.mrb[0].mxu0
      %3835 = vmatprep.mubr.f32.mxu0 0.0
      %3836 = vmatmul.mubr.f32.gmra.mrb[0].mxu0 %v3661
      %v3837 = vpop.f32.mrb[0].mxu0
      %v3838 = vadd.f32 %v3699, %v3837
      %v3839 = vpop.f32.mrb[0].mxu0
      %3840 = vmatprep.mubr.f32.mxu0 0.0
      %3841 = vmatmul.mubr.f32.gmra.mrb[0].mxu0 %v3662
      %v3842 = vpop.f32.mrb[0].mxu0
      %v3843 = vadd.f32 %v3699, %v3842
      %v3844 = vpop.f32.mrb[0].mxu0
      %3845 = vmatprep.mubr.f32.mxu0 0.0
      %3846 = vmatmul.mubr.f32.gmra.mrb[0].mxu0 %v3663
      %v3847 = vpop.f32.mrb[0].mxu0
      %v3848 = vadd.f32 %v3699, %v3847
      %v3849 = vpop.f32.mrb[0].mxu0
      %3850 = vmatprep.mubr.f32.mxu0 0.0
      %3851 = vmatmul.mubr.f32.gmra.mrb[0].mxu0 %v3664
      %v3852 = vpop.f32.mrb[0].mxu0
      %v3853 = vadd.f32 %v3699, %v3852
      %v3854 = vpop.f32.mrb[0].mxu0
      %3855 = vmatprep.mubr.f32.mxu0 0.0
      %3856 = vmatmul.mubr.f32.gmra.mrb[0].mxu0 %v3665
      %v3857 = vpop.f32.mrb[0].mxu0
      %v3858 = vadd.f32 %v3699, %v3857
      %v3859 = vpop.f32.mrb[0].mxu0
      %3860 = vmatprep.mubr.f32.mxu0 0.0
      %3861 = vmatmul.mubr.f32.gmra.mrb[0].mxu0 %v3666
      %v3862 = vpop.f32.mrb[0].mxu0
      %v3863 = vadd.f32 %v3699, %v3862
      %v3864 = vpop.f32.mrb[0].mxu0
      %3865 = vmatprep.mubr.f32.mxu0 0.0
      %3866 = vmatmul.mubr.f32.gmra.mrb[0].mxu0 %v3667
      %v3867 = vpop.f32.mrb[0].mxu0
      %v3868 = vadd.f32 %v3699, %v3867
      %v3869 = vpop.f32.mrb[0].mxu0
      %3870 = vmatprep.mubr.f32.mxu0 0.0
      %3871 = vmatmul.mubr.f32.gmra.mrb[0].mxu0 %v3668
      %v3872 = vpop.f32.mrb[0].mxu0
      %v3873 = vadd.f32 %v3699, %v3872
      %v3874 = vpop.f32.mrb[0].mxu0
      %3875 = vmatprep.mubr.f32.mxu0 0.0
      %3876 = vmatmul.mubr.f32.gmra.mrb[0].mxu0 %v3669
      %v3877 = vpop.f32.mrb[0].mxu0
      %v3878 = vadd.f32 %v3699, %v3877
      %v3879 = vpop.f32.mrb[0].mxu0
      %3880 = vmatprep.mubr.f32.mxu0 0.0
      %3881 = vmatmul.mubr.f32.gmra.mrb[0].mxu0 %v3670
      %v3882 = vpop.f32.mrb[0].mxu0
      %v3883 = vadd.f32 %v3699, %v3882
      %v3884 = vpop.f32.mrb[0].mxu0
      %3885 = vmatprep.mubr.f32.mxu0 0.0
      %3886 = vmatmul.mubr.f32.gmra.mrb[0].mxu0 %v3671
      %v3887 = vpop.f32.mrb[0].mxu0
      %v3888 = vadd.f32 %v3699, %v3887
      %v3889 = vpop.f32.mrb[0].mxu0
      %3890 = vmatprep.mubr.f32.mxu0 0.0
      %3891 = vmatmul.mubr.f32.gmra.mrb[0].mxu0 %v3672
      %v3892 = vpop.f32.mrb[0].mxu0
      %v3893 = vadd.f32 %v3699, %v3892
      %v3894 = vpop.f32.mrb[0].mxu0
      %3895 = vmatprep.mubr.f32.mxu0 0.0
      %3896 = vmatmul.mubr.f32.gmra.mrb[0].mxu0 %v3673
      %v3897 = vpop.f32.mrb[0].mxu0
      %v3898 = vadd.f32 %v3699, %v3897
      %v3899 = vpop.f32.mrb[0].mxu0
      %3900 = vmatprep.mubr.f32.mxu0 0.0
      %3901 = vmatmul.mubr.f32.gmra.mrb[0].mxu0 %v3674
      %v3902 = vpop.f32.mrb[0].mxu0
      %v3903 = vadd.f32 %v3699, %v3902
      %v3904 = vpop.f32.mrb[0].mxu0
      %3905 = vmatprep.mubr.f32.mxu0 0.0
      %3906 = vmatmul.mubr.f32.gmra.mrb[0].mxu0 %v3675
      %v3907 = vpop.f32.mrb[0].mxu0
      %v3908 = vadd.f32 %v3699, %v3907
      %v3909 = vpop.f32.mrb[0].mxu0
      %3910 = vmatprep.mubr.f32.mxu0 0.0
      %3911 = vmatmul.mubr.f32.gmra.mrb[0].mxu0 %v3676
      %v3912 = vpop.f32.mrb[0].mxu0
      %v3913 = vadd.f32 %v3699, %v3912
      %v3914 = vpop.f32.mrb[0].mxu0
      %3915 = vmatprep.mubr.f32.mxu0 0.0
      %3916 = vmatmul.mubr.f32.gmra.mrb[0].mxu0 %v3677
      %v3917 = vpop.f32.mrb[0].mxu0
      %v3918 = vadd.f32 %v3699, %v3917
      %v3919 = vpop.f32.mrb[0].mxu0
      %3920 = vmatprep.mubr.f32.mxu0 0.0
      %3921 = vmatmul.mubr.f32.gmra.mrb[0].mxu0 %v3678
      %v3922 = vpop.f32.mrb[0].mxu0
      %v3923 = vadd.f32 %v3699, %v3922
      %v3924 = vpop.f32.mrb[0].mxu0
      %3925 = vdwg.mxu0
      %v3926 = vmul.f32 %v3768, 0.5
      %v3927 = vmul.f32 %v3773, 0.5
      %v3928 = vmul.f32 %v3778, 0.5
      %v3929 = vmul.f32 %v3783, 0.5
      %v3930 = vmul.f32 %v3788, 0.5
      %v3931 = vmul.f32 %v3793, 0.5
      %v3932 = vmul.f32 %v3798, 0.5
      %v3933 = vmul.f32 %v3803, 0.5
      %v3934 = vmul.f32 %v3808, 0.5
      %v3935 = vmul.f32 %v3813, 0.5
      %v3936 = vmul.f32 %v3818, 0.5
      %v3937 = vmul.f32 %v3823, 0.5
      %v3938 = vmul.f32 %v3828, 0.5
      %v3939 = vmul.f32 %v3833, 0.5
      %v3940 = vmul.f32 %v3838, 0.5
      %v3941 = vmul.f32 %v3843, 0.5
      %v3942 = vmul.f32 %v3848, 0.5
      %v3943 = vmul.f32 %v3853, 0.5
      %v3944 = vmul.f32 %v3858, 0.5
      %v3945 = vmul.f32 %v3863, 0.5
      %v3946 = vmul.f32 %v3868, 0.5
      %v3947 = vmul.f32 %v3873, 0.5
      %v3948 = vmul.f32 %v3878, 0.5
      %v3949 = vmul.f32 %v3883, 0.5
      %v3950 = vmul.f32 %v3888, 0.5
      %v3951 = vmul.f32 %v3893, 0.5
      %v3952 = vmul.f32 %v3898, 0.5
      %v3953 = vmul.f32 %v3903, 0.5
      %v3954 = vmul.f32 %v3908, 0.5
      %v3955 = vmul.f32 %v3913, 0.5
      %v3956 = vmul.f32 %v3918, 0.5
      %v3957 = vmul.f32 %v3923, 0.5
      %v3958 = vmul.f32 %v3768, 0.70710677
      %v3959 = vmul.f32 %v3773, 0.70710677
      %v3960 = vmul.f32 %v3778, 0.70710677
      %v3961 = vmul.f32 %v3783, 0.70710677
      %v3962 = vmul.f32 %v3788, 0.70710677
      %v3963 = vmul.f32 %v3793, 0.70710677
      %v3964 = vmul.f32 %v3798, 0.70710677
      %v3965 = vmul.f32 %v3803, 0.70710677
      %v3966 = vmul.f32 %v3808, 0.70710677
      %v3967 = vmul.f32 %v3813, 0.70710677
      %v3968 = vmul.f32 %v3818, 0.70710677
      %v3969 = vmul.f32 %v3823, 0.70710677
      %v3970 = vmul.f32 %v3828, 0.70710677
      %v3971 = vmul.f32 %v3833, 0.70710677
      %v3972 = vmul.f32 %v3838, 0.70710677
      %v3973 = vmul.f32 %v3843, 0.70710677
      %v3974 = vmul.f32 %v3848, 0.70710677
      %v3975 = vmul.f32 %v3853, 0.70710677
      %v3976 = vmul.f32 %v3858, 0.70710677
      %v3977 = vmul.f32 %v3863, 0.70710677
      %v3978 = vmul.f32 %v3868, 0.70710677
      %v3979 = vmul.f32 %v3873, 0.70710677
      %v3980 = vmul.f32 %v3878, 0.70710677
      %v3981 = vmul.f32 %v3883, 0.70710677
      %v3982 = vmul.f32 %v3888, 0.70710677
      %v3983 = vmul.f32 %v3893, 0.70710677
      %v3984 = vmul.f32 %v3898, 0.70710677
      %v3985 = vmul.f32 %v3903, 0.70710677
      %v3986 = vmul.f32 %v3908, 0.70710677
      %v3987 = vmul.f32 %v3913, 0.70710677
      %v3988 = vmul.f32 %v3918, 0.70710677
      %v3989 = vmul.f32 %v3923, 0.70710677
      %v3990 = verf.f32.pop %v3958
      %v3991 = verf.f32.pop %v3959
      %v3992 = verf.f32.pop %v3960
      %v3993 = verf.f32.pop %v3961
      %v3994 = verf.f32.pop %v3962
      %v3995 = verf.f32.pop %v3963
      %v3996 = verf.f32.pop %v3964
      %v3997 = verf.f32.pop %v3965
      %v3998 = verf.f32.pop %v3966
      %v3999 = verf.f32.pop %v3967
      %v4000 = verf.f32.pop %v3968
      %v4001 = verf.f32.pop %v3969
      %v4002 = verf.f32.pop %v3970
      %v4003 = verf.f32.pop %v3971
      %v4004 = verf.f32.pop %v3972
      %v4005 = verf.f32.pop %v3973
      %v4006 = verf.f32.pop %v3974
      %v4007 = verf.f32.pop %v3975
      %v4008 = verf.f32.pop %v3976
      %v4009 = verf.f32.pop %v3977
      %v4010 = verf.f32.pop %v3978
      %v4011 = verf.f32.pop %v3979
      %v4012 = verf.f32.pop %v3980
      %v4013 = verf.f32.pop %v3981
      %v4014 = verf.f32.pop %v3982
      %v4015 = verf.f32.pop %v3983
      %v4016 = verf.f32.pop %v3984
      %v4017 = verf.f32.pop %v3985
      %v4018 = verf.f32.pop %v3986
      %v4019 = verf.f32.pop %v3987
      %v4020 = verf.f32.pop %v3988
      %v4021 = verf.f32.pop %v3989
      %v4022 = vadd.f32 %v3990, 1.0
      %v4023 = vadd.f32 %v3991, 1.0
      %v4024 = vadd.f32 %v3992, 1.0
      %v4025 = vadd.f32 %v3993, 1.0
      %v4026 = vadd.f32 %v3994, 1.0
      %v4027 = vadd.f32 %v3995, 1.0
      %v4028 = vadd.f32 %v3996, 1.0
      %v4029 = vadd.f32 %v3997, 1.0
      %v4030 = vadd.f32 %v3998, 1.0
      %v4031 = vadd.f32 %v3999, 1.0
      %v4032 = vadd.f32 %v4000, 1.0
      %v4033 = vadd.f32 %v4001, 1.0
      %v4034 = vadd.f32 %v4002, 1.0
      %v4035 = vadd.f32 %v4003, 1.0
      %v4036 = vadd.f32 %v4004, 1.0
      %v4037 = vadd.f32 %v4005, 1.0
      %v4038 = vadd.f32 %v4006, 1.0
      %v4039 = vadd.f32 %v4007, 1.0
      %v4040 = vadd.f32 %v4008, 1.0
      %v4041 = vadd.f32 %v4009, 1.0
      %v4042 = vadd.f32 %v4010, 1.0
      %v4043 = vadd.f32 %v4011, 1.0
      %v4044 = vadd.f32 %v4012, 1.0
      %v4045 = vadd.f32 %v4013, 1.0
      %v4046 = vadd.f32 %v4014, 1.0
      %v4047 = vadd.f32 %v4015, 1.0
      %v4048 = vadd.f32 %v4016, 1.0
      %v4049 = vadd.f32 %v4017, 1.0
      %v4050 = vadd.f32 %v4018, 1.0
      %v4051 = vadd.f32 %v4019, 1.0
      %v4052 = vadd.f32 %v4020, 1.0
      %v4053 = vadd.f32 %v4021, 1.0
      %v4054 = vmul.f32 %v3926, %v4022
      %v4055 = vmul.f32 %v3927, %v4023
      %v4056 = vmul.f32 %v3928, %v4024
      %v4057 = vmul.f32 %v3929, %v4025
      %v4058 = vmul.f32 %v3930, %v4026
      %v4059 = vmul.f32 %v3931, %v4027
      %v4060 = vmul.f32 %v3932, %v4028
      %v4061 = vmul.f32 %v3933, %v4029
      %v4062 = vmul.f32 %v3934, %v4030
      %v4063 = vmul.f32 %v3935, %v4031
      %v4064 = vmul.f32 %v3936, %v4032
      %v4065 = vmul.f32 %v3937, %v4033
      %v4066 = vmul.f32 %v3938, %v4034
      %v4067 = vmul.f32 %v3939, %v4035
      %v4068 = vmul.f32 %v3940, %v4036
      %v4069 = vmul.f32 %v3941, %v4037
      %v4070 = vmul.f32 %v3942, %v4038
      %v4071 = vmul.f32 %v3943, %v4039
      %v4072 = vmul.f32 %v3944, %v4040
      %v4073 = vmul.f32 %v3945, %v4041
      %v4074 = vmul.f32 %v3946, %v4042
      %v4075 = vmul.f32 %v3947, %v4043
      %v4076 = vmul.f32 %v3948, %v4044
      %v4077 = vmul.f32 %v3949, %v4045
      %v4078 = vmul.f32 %v3950, %v4046
      %v4079 = vmul.f32 %v3951, %v4047
      %v4080 = vmul.f32 %v3952, %v4048
      %v4081 = vmul.f32 %v3953, %v4049
      %v4082 = vmul.f32 %v3954, %v4050
      %v4083 = vmul.f32 %v3955, %v4051
      %v4084 = vmul.f32 %v3956, %v4052
      %v4085 = vmul.f32 %v3957, %v4053
      %4086 = vst [vmem:[#allocation4] sm:$0xff] %v4054
      %4087 = vst [vmem:[#allocation4 + $0x8] sm:$0xff] %v4055
      %4088 = vst [vmem:[#allocation4 + $0x10] sm:$0xff] %v4056
      %4089 = vst [vmem:[#allocation4 + $0x18] sm:$0xff] %v4057
      %4090 = vst [vmem:[#allocation4 + $0x20] sm:$0xff] %v4058
      %4091 = vst [vmem:[#allocation4 + $0x28] sm:$0xff] %v4059
      %4092 = vst [vmem:[#allocation4 + $0x30] sm:$0xff] %v4060
      %4093 = vst [vmem:[#allocation4 + $0x38] sm:$0xff] %v4061
      %4094 = vst [vmem:[#allocation4 + $0x40] sm:$0xff] %v4062
      %4095 = vst [vmem:[#allocation4 + $0x48] sm:$0xff] %v4063
      %4096 = vst [vmem:[#allocation4 + $0x50] sm:$0xff] %v4064
      %4097 = vst [vmem:[#allocation4 + $0x58] sm:$0xff] %v4065
      %4098 = vst [vmem:[#allocation4 + $0x60] sm:$0xff] %v4066
      %4099 = vst [vmem:[#allocation4 + $0x68] sm:$0xff] %v4067
      %4100 = vst [vmem:[#allocation4 + $0x70] sm:$0xff] %v4068
      %4101 = vst [vmem:[#allocation4 + $0x78] sm:$0xff] %v4069
      %4102 = vst [vmem:[#allocation4 + $0x80] sm:$0xff] %v4070
      %4103 = vst [vmem:[#allocation4 + $0x88] sm:$0xff] %v4071
      %4104 = vst [vmem:[#allocation4 + $0x90] sm:$0xff] %v4072
      %4105 = vst [vmem:[#allocation4 + $0x98] sm:$0xff] %v4073
      %4106 = vst [vmem:[#allocation4 + $0xa0] sm:$0xff] %v4074
      %4107 = vst [vmem:[#allocation4 + $0xa8] sm:$0xff] %v4075
      %4108 = vst [vmem:[#allocation4 + $0xb0] sm:$0xff] %v4076
      %4109 = vst [vmem:[#allocation4 + $0xb8] sm:$0xff] %v4077
      %4110 = vst [vmem:[#allocation4 + $0xc0] sm:$0xff] %v4078
      %4111 = vst [vmem:[#allocation4 + $0xc8] sm:$0xff] %v4079
      %4112 = vst [vmem:[#allocation4 + $0xd0] sm:$0xff] %v4080
      %4113 = vst [vmem:[#allocation4 + $0xd8] sm:$0xff] %v4081
      %4114 = vst [vmem:[#allocation4 + $0xe0] sm:$0xff] %v4082
      %4115 = vst [vmem:[#allocation4 + $0xe8] sm:$0xff] %v4083
      %4116 = vst [vmem:[#allocation4 + $0xf0] sm:$0xff] %v4084
      %4117 = vst [vmem:[#allocation4 + $0xf8] sm:$0xff] %v4085
      %v4118 = vmul.f32 %v4054, %v4054
      %v4119 = vmul.f32 %v4055, %v4055
      %v4120 = vmul.f32 %v4056, %v4056
      %v4121 = vmul.f32 %v4057, %v4057
      %v4122 = vmul.f32 %v4058, %v4058
      %v4123 = vmul.f32 %v4059, %v4059
      %v4124 = vmul.f32 %v4060, %v4060
      %v4125 = vmul.f32 %v4061, %v4061
      %v4126 = vmul.f32 %v4062, %v4062
      %v4127 = vmul.f32 %v4063, %v4063
      %v4128 = vmul.f32 %v4064, %v4064
      %v4129 = vmul.f32 %v4065, %v4065
      %v4130 = vmul.f32 %v4066, %v4066
      %v4131 = vmul.f32 %v4067, %v4067
      %v4132 = vmul.f32 %v4068, %v4068
      %v4133 = vmul.f32 %v4069, %v4069
      %v4134 = vmul.f32 %v4070, %v4070
      %v4135 = vmul.f32 %v4071, %v4071
      %v4136 = vmul.f32 %v4072, %v4072
      %v4137 = vmul.f32 %v4073, %v4073
      %v4138 = vmul.f32 %v4074, %v4074
      %v4139 = vmul.f32 %v4075, %v4075
      %v4140 = vmul.f32 %v4076, %v4076
      %v4141 = vmul.f32 %v4077, %v4077
      %v4142 = vmul.f32 %v4078, %v4078
      %v4143 = vmul.f32 %v4079, %v4079
      %v4144 = vmul.f32 %v4080, %v4080
      %v4145 = vmul.f32 %v4081, %v4081
      %v4146 = vmul.f32 %v4082, %v4082
      %v4147 = vmul.f32 %v4083, %v4083
      %v4148 = vmul.f32 %v4084, %v4084
      %v4149 = vmul.f32 %v4085, %v4085
      %v4150 = vadd.f32 %v4118, %v4119
      %v4151 = vadd.f32 %v4150, %v4120
      %v4152 = vadd.f32 %v4151, %v4121
      %v4153 = vadd.f32 %v4152, %v4122
      %v4154 = vadd.f32 %v4153, %v4123
      %v4155 = vadd.f32 %v4154, %v4124
      %v4156 = vadd.f32 %v4155, %v4125
      %v4157 = vadd.f32 %v4156, %v4126
      %v4158 = vadd.f32 %v4157, %v4127
      %v4159 = vadd.f32 %v4158, %v4128
      %v4160 = vadd.f32 %v4159, %v4129
      %v4161 = vadd.f32 %v4160, %v4130
      %v4162 = vadd.f32 %v4161, %v4131
      %v4163 = vadd.f32 %v4162, %v4132
      %v4164 = vadd.f32 %v4163, %v4133
      %v4165 = vadd.f32 %v4164, %v4134
      %v4166 = vadd.f32 %v4165, %v4135
      %v4167 = vadd.f32 %v4166, %v4136
      %v4168 = vadd.f32 %v4167, %v4137
      %v4169 = vadd.f32 %v4168, %v4138
      %v4170 = vadd.f32 %v4169, %v4139
      %v4171 = vadd.f32 %v4170, %v4140
      %v4172 = vadd.f32 %v4171, %v4141
      %v4173 = vadd.f32 %v4172, %v4142
      %v4174 = vadd.f32 %v4173, %v4143
      %v4175 = vadd.f32 %v4174, %v4144
      %v4176 = vadd.f32 %v4175, %v4145
      %v4177 = vadd.f32 %v4176, %v4146
      %v4178 = vadd.f32 %v4177, %v4147
      %v4179 = vadd.f32 %v4178, %v4148
      %v4180 = vadd.f32 %v4179, %v4149
      %v4181 = vrot.slane %v4180, 4
      %v4182 = vadd.f32 %v4180, %v4181
      %v4183 = vrot.slane %v4182, 2
      %v4184 = vadd.f32 %v4182, %v4183
      %v4185 = vrot.slane %v4184, 1
      %v4186 = vadd.f32 %v4184, %v4185
      %v4187 = vadd.f32 %v4186, 0.0
      %v4188 = vrsqrt.pop %v4187
      %v4189 = vmul.f32 %v4187, %v4188
      %vm4190 = vcmp.eq.f32.partialorder %v4187, inf
      %v4191 = vsel %vm4190, %v4187, %v4189
      %vm4192 = vcmp.eq.f32.partialorder %v4187, 0.0
      %v4193 = vand.u32 %v4187, 2147483648
      %v4194 = vsel %vm4192, %v4193, %v4191
      %4195 = vadd.xlane.f32.xlu0 %v4194
      %v4196 = vpop.xlane.xlu0 %4195
      %v4197 = vmul.f32 %v4196, 0.0625
      %v4198 = vadd.f32 %v4197, 1e-06
      %v4199 = vrcp.pop %v4198
      %v4200 = vmul.f32 %v4194, %v4199
      %v4201 = vld [vmem:[%s7] sm:$0x1]
      %v4202 = vld [vmem:[%s8] sm:$0x1]
      %v4203 = vld [vmem:[%s10] sm:$0x1]
      %v4204 = vld [vmem:[#allocation4] sm:$0xff]
      %v4205 = vld [vmem:[#allocation4 + $0x8] sm:$0xff]
      %v4206 = vld [vmem:[#allocation4 + $0x10] sm:$0xff]
      %v4207 = vld [vmem:[#allocation4 + $0x18] sm:$0xff]
      %v4208 = vld [vmem:[#allocation4 + $0x20] sm:$0xff]
      %v4209 = vld [vmem:[#allocation4 + $0x28] sm:$0xff]
      %v4210 = vld [vmem:[#allocation4 + $0x30] sm:$0xff]
      %v4211 = vld [vmem:[#allocation4 + $0x38] sm:$0xff]
      %v4212 = vld [vmem:[#allocation4 + $0x40] sm:$0xff]
      %v4213 = vld [vmem:[#allocation4 + $0x48] sm:$0xff]
      %v4214 = vld [vmem:[#allocation4 + $0x50] sm:$0xff]
      %v4215 = vld [vmem:[#allocation4 + $0x58] sm:$0xff]
      %v4216 = vld [vmem:[#allocation4 + $0x60] sm:$0xff]
      %v4217 = vld [vmem:[#allocation4 + $0x68] sm:$0xff]
      %v4218 = vld [vmem:[#allocation4 + $0x70] sm:$0xff]
      %v4219 = vld [vmem:[#allocation4 + $0x78] sm:$0xff]
      %v4220 = vld [vmem:[#allocation4 + $0x80] sm:$0xff]
      %v4221 = vld [vmem:[#allocation4 + $0x88] sm:$0xff]
      %v4222 = vld [vmem:[#allocation4 + $0x90] sm:$0xff]
      %v4223 = vld [vmem:[#allocation4 + $0x98] sm:$0xff]
      %v4224 = vld [vmem:[#allocation4 + $0xa0] sm:$0xff]
      %v4225 = vld [vmem:[#allocation4 + $0xa8] sm:$0xff]
      %v4226 = vld [vmem:[#allocation4 + $0xb0] sm:$0xff]
      %v4227 = vld [vmem:[#allocation4 + $0xb8] sm:$0xff]
      %v4228 = vld [vmem:[#allocation4 + $0xc0] sm:$0xff]
      %v4229 = vld [vmem:[#allocation4 + $0xc8] sm:$0xff]
      %v4230 = vld [vmem:[#allocation4 + $0xd0] sm:$0xff]
      %v4231 = vld [vmem:[#allocation4 + $0xd8] sm:$0xff]
      %v4232 = vld [vmem:[#allocation4 + $0xe0] sm:$0xff]
      %v4233 = vld [vmem:[#allocation4 + $0xe8] sm:$0xff]
      %v4234 = vld [vmem:[#allocation4 + $0xf0] sm:$0xff]
      %v4235 = vld [vmem:[#allocation4 + $0xf8] sm:$0xff]
      %v4236 = vmul.f32 %v4204, %v4200
      %v4237 = vmul.f32 %v4205, %v4200
      %v4238 = vmul.f32 %v4206, %v4200
      %v4239 = vmul.f32 %v4207, %v4200
      %v4240 = vmul.f32 %v4208, %v4200
      %v4241 = vmul.f32 %v4209, %v4200
      %v4242 = vmul.f32 %v4210, %v4200
      %v4243 = vmul.f32 %v4211, %v4200
      %v4244 = vmul.f32 %v4212, %v4200
      %v4245 = vmul.f32 %v4213, %v4200
      %v4246 = vmul.f32 %v4214, %v4200
      %v4247 = vmul.f32 %v4215, %v4200
      %v4248 = vmul.f32 %v4216, %v4200
      %v4249 = vmul.f32 %v4217, %v4200
      %v4250 = vmul.f32 %v4218, %v4200
      %v4251 = vmul.f32 %v4219, %v4200
      %v4252 = vmul.f32 %v4220, %v4200
      %v4253 = vmul.f32 %v4221, %v4200
      %v4254 = vmul.f32 %v4222, %v4200
      %v4255 = vmul.f32 %v4223, %v4200
      %v4256 = vmul.f32 %v4224, %v4200
      %v4257 = vmul.f32 %v4225, %v4200
      %v4258 = vmul.f32 %v4226, %v4200
      %v4259 = vmul.f32 %v4227, %v4200
      %v4260 = vmul.f32 %v4228, %v4200
      %v4261 = vmul.f32 %v4229, %v4200
      %v4262 = vmul.f32 %v4230, %v4200
      %v4263 = vmul.f32 %v4231, %v4200
      %v4264 = vmul.f32 %v4232, %v4200
      %v4265 = vmul.f32 %v4233, %v4200
      %v4266 = vmul.f32 %v4234, %v4200
      %v4267 = vmul.f32 %v4235, %v4200
      %v4269 = vlaneseq
      %v4270 = vshrl.u32 %v4269, 7
      %v4271 = vsub.s32 0, %v4270
      %v4272 = vrot.slane %v4201, %v4271
      %v4274 = vmul.f32 %v4272, %v4236
      %v4275 = vmul.f32 %v4272, %v4237
      %v4276 = vmul.f32 %v4272, %v4238
      %v4277 = vmul.f32 %v4272, %v4239
      %v4278 = vmul.f32 %v4272, %v4240
      %v4279 = vmul.f32 %v4272, %v4241
      %v4280 = vmul.f32 %v4272, %v4242
      %v4281 = vmul.f32 %v4272, %v4243
      %v4282 = vmul.f32 %v4272, %v4244
      %v4283 = vmul.f32 %v4272, %v4245
      %v4284 = vmul.f32 %v4272, %v4246
      %v4285 = vmul.f32 %v4272, %v4247
      %v4286 = vmul.f32 %v4272, %v4248
      %v4287 = vmul.f32 %v4272, %v4249
      %v4288 = vmul.f32 %v4272, %v4250
      %v4289 = vmul.f32 %v4272, %v4251
      %v4290 = vmul.f32 %v4272, %v4252
      %v4291 = vmul.f32 %v4272, %v4253
      %v4292 = vmul.f32 %v4272, %v4254
      %v4293 = vmul.f32 %v4272, %v4255
      %v4294 = vmul.f32 %v4272, %v4256
      %v4295 = vmul.f32 %v4272, %v4257
      %v4296 = vmul.f32 %v4272, %v4258
      %v4297 = vmul.f32 %v4272, %v4259
      %v4298 = vmul.f32 %v4272, %v4260
      %v4299 = vmul.f32 %v4272, %v4261
      %v4300 = vmul.f32 %v4272, %v4262
      %v4301 = vmul.f32 %v4272, %v4263
      %v4302 = vmul.f32 %v4272, %v4264
      %v4303 = vmul.f32 %v4272, %v4265
      %v4304 = vmul.f32 %v4272, %v4266
      %v4305 = vmul.f32 %v4272, %v4267
      %v4307 = vlaneseq
      %v4308 = vshrl.u32 %v4307, 7
      %v4309 = vsub.s32 0, %v4308
      %v4310 = vrot.slane %v4202, %v4309
      %v4312 = vadd.f32 %v4274, %v4310
      %v4313 = vadd.f32 %v4275, %v4310
      %v4314 = vadd.f32 %v4276, %v4310
      %v4315 = vadd.f32 %v4277, %v4310
      %v4316 = vadd.f32 %v4278, %v4310
      %v4317 = vadd.f32 %v4279, %v4310
      %v4318 = vadd.f32 %v4280, %v4310
      %v4319 = vadd.f32 %v4281, %v4310
      %v4320 = vadd.f32 %v4282, %v4310
      %v4321 = vadd.f32 %v4283, %v4310
      %v4322 = vadd.f32 %v4284, %v4310
      %v4323 = vadd.f32 %v4285, %v4310
      %v4324 = vadd.f32 %v4286, %v4310
      %v4325 = vadd.f32 %v4287, %v4310
      %v4326 = vadd.f32 %v4288, %v4310
      %v4327 = vadd.f32 %v4289, %v4310
      %v4328 = vadd.f32 %v4290, %v4310
      %v4329 = vadd.f32 %v4291, %v4310
      %v4330 = vadd.f32 %v4292, %v4310
      %v4331 = vadd.f32 %v4293, %v4310
      %v4332 = vadd.f32 %v4294, %v4310
      %v4333 = vadd.f32 %v4295, %v4310
      %v4334 = vadd.f32 %v4296, %v4310
      %v4335 = vadd.f32 %v4297, %v4310
      %v4336 = vadd.f32 %v4298, %v4310
      %v4337 = vadd.f32 %v4299, %v4310
      %v4338 = vadd.f32 %v4300, %v4310
      %v4339 = vadd.f32 %v4301, %v4310
      %v4340 = vadd.f32 %v4302, %v4310
      %v4341 = vadd.f32 %v4303, %v4310
      %v4342 = vadd.f32 %v4304, %v4310
      %v4343 = vadd.f32 %v4305, %v4310
      %v4344 = vadd.f32 %v4312, %v4204
      %v4345 = vadd.f32 %v4313, %v4205
      %v4346 = vadd.f32 %v4314, %v4206
      %v4347 = vadd.f32 %v4315, %v4207
      %v4348 = vadd.f32 %v4316, %v4208
      %v4349 = vadd.f32 %v4317, %v4209
      %v4350 = vadd.f32 %v4318, %v4210
      %v4351 = vadd.f32 %v4319, %v4211
      %v4352 = vadd.f32 %v4320, %v4212
      %v4353 = vadd.f32 %v4321, %v4213
      %v4354 = vadd.f32 %v4322, %v4214
      %v4355 = vadd.f32 %v4323, %v4215
      %v4356 = vadd.f32 %v4324, %v4216
      %v4357 = vadd.f32 %v4325, %v4217
      %v4358 = vadd.f32 %v4326, %v4218
      %v4359 = vadd.f32 %v4327, %v4219
      %v4360 = vadd.f32 %v4328, %v4220
      %v4361 = vadd.f32 %v4329, %v4221
      %v4362 = vadd.f32 %v4330, %v4222
      %v4363 = vadd.f32 %v4331, %v4223
      %v4364 = vadd.f32 %v4332, %v4224
      %v4365 = vadd.f32 %v4333, %v4225
      %v4366 = vadd.f32 %v4334, %v4226
      %v4367 = vadd.f32 %v4335, %v4227
      %v4368 = vadd.f32 %v4336, %v4228
      %v4369 = vadd.f32 %v4337, %v4229
      %v4370 = vadd.f32 %v4338, %v4230
      %v4371 = vadd.f32 %v4339, %v4231
      %v4372 = vadd.f32 %v4340, %v4232
      %v4373 = vadd.f32 %v4341, %v4233
      %v4374 = vadd.f32 %v4342, %v4234
      %v4375 = vadd.f32 %v4343, %v4235
      %v4376 = vld [vmem:[%s9] sm:$0xff]
      %v4377 = vld [vmem:[%s9 + $0x8] sm:$0xff]
      %v4378 = vld [vmem:[%s9 + $0x10] sm:$0xff]
      %v4379 = vld [vmem:[%s9 + $0x18] sm:$0xff]
      %v4380 = vld [vmem:[%s9 + $0x20] sm:$0xff]
      %v4381 = vld [vmem:[%s9 + $0x28] sm:$0xff]
      %v4382 = vld [vmem:[%s9 + $0x30] sm:$0xff]
      %v4383 = vld [vmem:[%s9 + $0x38] sm:$0xff]
      %v4384 = vld [vmem:[%s9 + $0x40] sm:$0xff]
      %v4385 = vld [vmem:[%s9 + $0x48] sm:$0xff]
      %v4386 = vld [vmem:[%s9 + $0x50] sm:$0xff]
      %v4387 = vld [vmem:[%s9 + $0x58] sm:$0xff]
      %v4388 = vld [vmem:[%s9 + $0x60] sm:$0xff]
      %v4389 = vld [vmem:[%s9 + $0x68] sm:$0xff]
      %v4390 = vld [vmem:[%s9 + $0x70] sm:$0xff]
      %v4391 = vld [vmem:[%s9 + $0x78] sm:$0xff]
      %v4393 = vlaneseq
      %v4394 = vshrl.u32 %v4393, 7
      %v4395 = vsub.s32 0, %v4394
      %v4396 = vrot.slane %v4203, %v4395
      %4398 = vmatprep.subr.mxu0 0.0
      %4399 = vmatpush1.msra.mxu0 %v4376
      %4400 = vmatprep.subr.mxu0 0.0
      %4401 = vmatpush1.msra.mxu0 %v4377
      %4402 = vmatprep.subr.mxu0 0.0
      %4403 = vmatpush1.msra.mxu0 %v4378
      %4404 = vmatprep.subr.mxu0 0.0
      %4405 = vmatpush1.msra.mxu0 %v4379
      %4406 = vmatprep.subr.mxu0 0.0
      %4407 = vmatpush1.msra.mxu0 %v4380
      %4408 = vmatprep.subr.mxu0 0.0
      %4409 = vmatpush1.msra.mxu0 %v4381
      %4410 = vmatprep.subr.mxu0 0.0
      %4411 = vmatpush1.msra.mxu0 %v4382
      %4412 = vmatprep.subr.mxu0 0.0
      %4413 = vmatpush1.msra.mxu0 %v4383
      %4414 = vmatprep.subr.mxu0 0.0
      %4415 = vmatpush1.msra.mxu0 %v4384
      %4416 = vmatprep.subr.mxu0 0.0
      %4417 = vmatpush1.msra.mxu0 %v4385
      %4418 = vmatprep.subr.mxu0 0.0
      %4419 = vmatpush1.msra.mxu0 %v4386
      %4420 = vmatprep.subr.mxu0 0.0
      %4421 = vmatpush1.msra.mxu0 %v4387
      %4422 = vmatprep.subr.mxu0 0.0
      %4423 = vmatpush1.msra.mxu0 %v4388
      %4424 = vmatprep.subr.mxu0 0.0
      %4425 = vmatpush1.msra.mxu0 %v4389
      %4426 = vmatprep.subr.mxu0 0.0
      %4427 = vmatpush1.msra.mxu0 %v4390
      %4428 = vmatprep.subr.mxu0 0.0
      %4429 = vmatpush1.msra.mxu0 %v4391
      %4430 = vmatprep.subr.mxu0 0.0
      %4431 = vmatpush1.msra.mxu0 0.0
      %4432 = vmatprep.subr.mxu0 0.0
      %4433 = vmatpush1.msra.mxu0 0.0
      %4434 = vmatprep.subr.mxu0 0.0
      %4435 = vmatpush1.msra.mxu0 0.0
      %4436 = vmatprep.subr.mxu0 0.0
      %4437 = vmatpush1.msra.mxu0 0.0
      %4438 = vmatprep.subr.mxu0 0.0
      %4439 = vmatpush1.msra.mxu0 0.0
      %4440 = vmatprep.subr.mxu0 0.0
      %4441 = vmatpush1.msra.mxu0 0.0
      %4442 = vmatprep.subr.mxu0 0.0
      %4443 = vmatpush1.msra.mxu0 0.0
      %4444 = vmatprep.subr.mxu0 0.0
      %4445 = vmatpush1.msra.mxu0 0.0
      %4446 = vmatprep.subr.mxu0 0.0
      %4447 = vmatpush1.msra.mxu0 0.0
      %4448 = vmatprep.subr.mxu0 0.0
      %4449 = vmatpush1.msra.mxu0 0.0
      %4450 = vmatprep.subr.mxu0 0.0
      %4451 = vmatpush1.msra.mxu0 0.0
      %4452 = vmatprep.subr.mxu0 0.0
      %4453 = vmatpush1.msra.mxu0 0.0
      %4454 = vmatprep.subr.mxu0 0.0
      %4455 = vmatpush1.msra.mxu0 0.0
      %4456 = vmatprep.subr.mxu0 0.0
      %4457 = vmatpush1.msra.mxu0 0.0
      %4458 = vmatprep.subr.mxu0 0.0
      %4459 = vmatpush1.msra.mxu0 0.0
      %4460 = vmatprep.subr.mxu0 0.0
      %4461 = vmatpush1.msra.mxu0 0.0
      %4462 = vmatprep.mubr.f32.mxu0 0.0
      %4463 = vmatmul.mubr.f32.gmra.mrb[0].mxu0 %v4344
      %v4464 = vpop.f32.mrb[0].mxu0
      %v4465 = vadd.f32 %v4396, %v4464
      %v4466 = vpop.f32.mrb[0].mxu0
      %4467 = vmatprep.mubr.f32.mxu0 0.0
      %4468 = vmatmul.mubr.f32.gmra.mrb[0].mxu0 %v4345
      %v4469 = vpop.f32.mrb[0].mxu0
      %v4470 = vadd.f32 %v4396, %v4469
      %v4471 = vpop.f32.mrb[0].mxu0
      %4472 = vmatprep.mubr.f32.mxu0 0.0
      %4473 = vmatmul.mubr.f32.gmra.mrb[0].mxu0 %v4346
      %v4474 = vpop.f32.mrb[0].mxu0
      %v4475 = vadd.f32 %v4396, %v4474
      %v4476 = vpop.f32.mrb[0].mxu0
      %4477 = vmatprep.mubr.f32.mxu0 0.0
      %4478 = vmatmul.mubr.f32.gmra.mrb[0].mxu0 %v4347
      %v4479 = vpop.f32.mrb[0].mxu0
      %v4480 = vadd.f32 %v4396, %v4479
      %v4481 = vpop.f32.mrb[0].mxu0
      %4482 = vmatprep.mubr.f32.mxu0 0.0
      %4483 = vmatmul.mubr.f32.gmra.mrb[0].mxu0 %v4348
      %v4484 = vpop.f32.mrb[0].mxu0
      %v4485 = vadd.f32 %v4396, %v4484
      %v4486 = vpop.f32.mrb[0].mxu0
      %4487 = vmatprep.mubr.f32.mxu0 0.0
      %4488 = vmatmul.mubr.f32.gmra.mrb[0].mxu0 %v4349
      %v4489 = vpop.f32.mrb[0].mxu0
      %v4490 = vadd.f32 %v4396, %v4489
      %v4491 = vpop.f32.mrb[0].mxu0
      %4492 = vmatprep.mubr.f32.mxu0 0.0
      %4493 = vmatmul.mubr.f32.gmra.mrb[0].mxu0 %v4350
      %v4494 = vpop.f32.mrb[0].mxu0
      %v4495 = vadd.f32 %v4396, %v4494
      %v4496 = vpop.f32.mrb[0].mxu0
      %4497 = vmatprep.mubr.f32.mxu0 0.0
      %4498 = vmatmul.mubr.f32.gmra.mrb[0].mxu0 %v4351
      %v4499 = vpop.f32.mrb[0].mxu0
      %v4500 = vadd.f32 %v4396, %v4499
      %v4501 = vpop.f32.mrb[0].mxu0
      %4502 = vmatprep.mubr.f32.mxu0 0.0
      %4503 = vmatmul.mubr.f32.gmra.mrb[0].mxu0 %v4352
      %v4504 = vpop.f32.mrb[0].mxu0
      %v4505 = vadd.f32 %v4396, %v4504
      %v4506 = vpop.f32.mrb[0].mxu0
      %4507 = vmatprep.mubr.f32.mxu0 0.0
      %4508 = vmatmul.mubr.f32.gmra.mrb[0].mxu0 %v4353
      %v4509 = vpop.f32.mrb[0].mxu0
      %v4510 = vadd.f32 %v4396, %v4509
      %v4511 = vpop.f32.mrb[0].mxu0
      %4512 = vmatprep.mubr.f32.mxu0 0.0
      %4513 = vmatmul.mubr.f32.gmra.mrb[0].mxu0 %v4354
      %v4514 = vpop.f32.mrb[0].mxu0
      %v4515 = vadd.f32 %v4396, %v4514
      %v4516 = vpop.f32.mrb[0].mxu0
      %4517 = vmatprep.mubr.f32.mxu0 0.0
      %4518 = vmatmul.mubr.f32.gmra.mrb[0].mxu0 %v4355
      %v4519 = vpop.f32.mrb[0].mxu0
      %v4520 = vadd.f32 %v4396, %v4519
      %v4521 = vpop.f32.mrb[0].mxu0
      %4522 = vmatprep.mubr.f32.mxu0 0.0
      %4523 = vmatmul.mubr.f32.gmra.mrb[0].mxu0 %v4356
      %v4524 = vpop.f32.mrb[0].mxu0
      %v4525 = vadd.f32 %v4396, %v4524
      %v4526 = vpop.f32.mrb[0].mxu0
      %4527 = vmatprep.mubr.f32.mxu0 0.0
      %4528 = vmatmul.mubr.f32.gmra.mrb[0].mxu0 %v4357
      %v4529 = vpop.f32.mrb[0].mxu0
      %v4530 = vadd.f32 %v4396, %v4529
      %v4531 = vpop.f32.mrb[0].mxu0
      %4532 = vmatprep.mubr.f32.mxu0 0.0
      %4533 = vmatmul.mubr.f32.gmra.mrb[0].mxu0 %v4358
      %v4534 = vpop.f32.mrb[0].mxu0
      %v4535 = vadd.f32 %v4396, %v4534
      %v4536 = vpop.f32.mrb[0].mxu0
      %4537 = vmatprep.mubr.f32.mxu0 0.0
      %4538 = vmatmul.mubr.f32.gmra.mrb[0].mxu0 %v4359
      %v4539 = vpop.f32.mrb[0].mxu0
      %v4540 = vadd.f32 %v4396, %v4539
      %v4541 = vpop.f32.mrb[0].mxu0
      %4542 = vmatprep.mubr.f32.mxu0 0.0
      %4543 = vmatmul.mubr.f32.gmra.mrb[0].mxu0 %v4360
      %v4544 = vpop.f32.mrb[0].mxu0
      %v4545 = vadd.f32 %v4396, %v4544
      %v4546 = vpop.f32.mrb[0].mxu0
      %4547 = vmatprep.mubr.f32.mxu0 0.0
      %4548 = vmatmul.mubr.f32.gmra.mrb[0].mxu0 %v4361
      %v4549 = vpop.f32.mrb[0].mxu0
      %v4550 = vadd.f32 %v4396, %v4549
      %v4551 = vpop.f32.mrb[0].mxu0
      %4552 = vmatprep.mubr.f32.mxu0 0.0
      %4553 = vmatmul.mubr.f32.gmra.mrb[0].mxu0 %v4362
      %v4554 = vpop.f32.mrb[0].mxu0
      %v4555 = vadd.f32 %v4396, %v4554
      %v4556 = vpop.f32.mrb[0].mxu0
      %4557 = vmatprep.mubr.f32.mxu0 0.0
      %4558 = vmatmul.mubr.f32.gmra.mrb[0].mxu0 %v4363
      %v4559 = vpop.f32.mrb[0].mxu0
      %v4560 = vadd.f32 %v4396, %v4559
      %v4561 = vpop.f32.mrb[0].mxu0
      %4562 = vmatprep.mubr.f32.mxu0 0.0
      %4563 = vmatmul.mubr.f32.gmra.mrb[0].mxu0 %v4364
      %v4564 = vpop.f32.mrb[0].mxu0
      %v4565 = vadd.f32 %v4396, %v4564
      %v4566 = vpop.f32.mrb[0].mxu0
      %4567 = vmatprep.mubr.f32.mxu0 0.0
      %4568 = vmatmul.mubr.f32.gmra.mrb[0].mxu0 %v4365
      %v4569 = vpop.f32.mrb[0].mxu0
      %v4570 = vadd.f32 %v4396, %v4569
      %v4571 = vpop.f32.mrb[0].mxu0
      %4572 = vmatprep.mubr.f32.mxu0 0.0
      %4573 = vmatmul.mubr.f32.gmra.mrb[0].mxu0 %v4366
      %v4574 = vpop.f32.mrb[0].mxu0
      %v4575 = vadd.f32 %v4396, %v4574
      %v4576 = vpop.f32.mrb[0].mxu0
      %4577 = vmatprep.mubr.f32.mxu0 0.0
      %4578 = vmatmul.mubr.f32.gmra.mrb[0].mxu0 %v4367
      %v4579 = vpop.f32.mrb[0].mxu0
      %v4580 = vadd.f32 %v4396, %v4579
      %v4581 = vpop.f32.mrb[0].mxu0
      %4582 = vmatprep.mubr.f32.mxu0 0.0
      %4583 = vmatmul.mubr.f32.gmra.mrb[0].mxu0 %v4368
      %v4584 = vpop.f32.mrb[0].mxu0
      %v4585 = vadd.f32 %v4396, %v4584
      %v4586 = vpop.f32.mrb[0].mxu0
      %4587 = vmatprep.mubr.f32.mxu0 0.0
      %4588 = vmatmul.mubr.f32.gmra.mrb[0].mxu0 %v4369
      %v4589 = vpop.f32.mrb[0].mxu0
      %v4590 = vadd.f32 %v4396, %v4589
      %v4591 = vpop.f32.mrb[0].mxu0
      %4592 = vmatprep.mubr.f32.mxu0 0.0
      %4593 = vmatmul.mubr.f32.gmra.mrb[0].mxu0 %v4370
      %v4594 = vpop.f32.mrb[0].mxu0
      %v4595 = vadd.f32 %v4396, %v4594
      %v4596 = vpop.f32.mrb[0].mxu0
      %4597 = vmatprep.mubr.f32.mxu0 0.0
      %4598 = vmatmul.mubr.f32.gmra.mrb[0].mxu0 %v4371
      %v4599 = vpop.f32.mrb[0].mxu0
      %v4600 = vadd.f32 %v4396, %v4599
      %v4601 = vpop.f32.mrb[0].mxu0
      %4602 = vmatprep.mubr.f32.mxu0 0.0
      %4603 = vmatmul.mubr.f32.gmra.mrb[0].mxu0 %v4372
      %v4604 = vpop.f32.mrb[0].mxu0
      %v4605 = vadd.f32 %v4396, %v4604
      %v4606 = vpop.f32.mrb[0].mxu0
      %4607 = vmatprep.mubr.f32.mxu0 0.0
      %4608 = vmatmul.mubr.f32.gmra.mrb[0].mxu0 %v4373
      %v4609 = vpop.f32.mrb[0].mxu0
      %v4610 = vadd.f32 %v4396, %v4609
      %v4611 = vpop.f32.mrb[0].mxu0
      %4612 = vmatprep.mubr.f32.mxu0 0.0
      %4613 = vmatmul.mubr.f32.gmra.mrb[0].mxu0 %v4374
      %v4614 = vpop.f32.mrb[0].mxu0
      %v4615 = vadd.f32 %v4396, %v4614
      %v4616 = vpop.f32.mrb[0].mxu0
      %4617 = vmatprep.mubr.f32.mxu0 0.0
      %4618 = vmatmul.mubr.f32.gmra.mrb[0].mxu0 %v4375
      %v4619 = vpop.f32.mrb[0].mxu0
      %v4620 = vadd.f32 %v4396, %v4619
      %v4621 = vpop.f32.mrb[0].mxu0
      %4622 = vdwg.mxu0
      %v4623 = vld [vmem:[%s381] sm:$0xff]
      %v4624 = vld [vmem:[%s381 + $0x8] sm:$0xff]
      %v4625 = vld [vmem:[%s381 + $0x10] sm:$0xff]
      %v4626 = vld [vmem:[%s381 + $0x18] sm:$0xff]
      %v4627 = vld [vmem:[%s381 + $0x20] sm:$0xff]
      %v4628 = vld [vmem:[%s381 + $0x28] sm:$0xff]
      %v4629 = vld [vmem:[%s381 + $0x30] sm:$0xff]
      %v4630 = vld [vmem:[%s381 + $0x38] sm:$0xff]
      %v4631 = vld [vmem:[%s381 + $0x40] sm:$0xff]
      %v4632 = vld [vmem:[%s381 + $0x48] sm:$0xff]
      %v4633 = vld [vmem:[%s381 + $0x50] sm:$0xff]
      %v4634 = vld [vmem:[%s381 + $0x58] sm:$0xff]
      %v4635 = vld [vmem:[%s381 + $0x60] sm:$0xff]
      %v4636 = vld [vmem:[%s381 + $0x68] sm:$0xff]
      %v4637 = vld [vmem:[%s381 + $0x70] sm:$0xff]
      %v4638 = vld [vmem:[%s381 + $0x78] sm:$0xff]
      %v4639 = vld [vmem:[%s381 + $0x80] sm:$0xff]
      %v4640 = vld [vmem:[%s381 + $0x88] sm:$0xff]
      %v4641 = vld [vmem:[%s381 + $0x90] sm:$0xff]
      %v4642 = vld [vmem:[%s381 + $0x98] sm:$0xff]
      %v4643 = vld [vmem:[%s381 + $0xa0] sm:$0xff]
      %v4644 = vld [vmem:[%s381 + $0xa8] sm:$0xff]
      %v4645 = vld [vmem:[%s381 + $0xb0] sm:$0xff]
      %v4646 = vld [vmem:[%s381 + $0xb8] sm:$0xff]
      %v4647 = vld [vmem:[%s381 + $0xc0] sm:$0xff]
      %v4648 = vld [vmem:[%s381 + $0xc8] sm:$0xff]
      %v4649 = vld [vmem:[%s381 + $0xd0] sm:$0xff]
      %v4650 = vld [vmem:[%s381 + $0xd8] sm:$0xff]
      %v4651 = vld [vmem:[%s381 + $0xe0] sm:$0xff]
      %v4652 = vld [vmem:[%s381 + $0xe8] sm:$0xff]
      %v4653 = vld [vmem:[%s381 + $0xf0] sm:$0xff]
      %v4654 = vld [vmem:[%s381 + $0xf8] sm:$0xff]
      %v4655 = vadd.f32 %v4623, %v4465
      %v4656 = vadd.f32 %v4624, %v4470
      %v4657 = vadd.f32 %v4625, %v4475
      %v4658 = vadd.f32 %v4626, %v4480
      %v4659 = vadd.f32 %v4627, %v4485
      %v4660 = vadd.f32 %v4628, %v4490
      %v4661 = vadd.f32 %v4629, %v4495
      %v4662 = vadd.f32 %v4630, %v4500
      %v4663 = vadd.f32 %v4631, %v4505
      %v4664 = vadd.f32 %v4632, %v4510
      %v4665 = vadd.f32 %v4633, %v4515
      %v4666 = vadd.f32 %v4634, %v4520
      %v4667 = vadd.f32 %v4635, %v4525
      %v4668 = vadd.f32 %v4636, %v4530
      %v4669 = vadd.f32 %v4637, %v4535
      %v4670 = vadd.f32 %v4638, %v4540
      %v4671 = vadd.f32 %v4639, %v4545
      %v4672 = vadd.f32 %v4640, %v4550
      %v4673 = vadd.f32 %v4641, %v4555
      %v4674 = vadd.f32 %v4642, %v4560
      %v4675 = vadd.f32 %v4643, %v4565
      %v4676 = vadd.f32 %v4644, %v4570
      %v4677 = vadd.f32 %v4645, %v4575
      %v4678 = vadd.f32 %v4646, %v4580
      %v4679 = vadd.f32 %v4647, %v4585
      %v4680 = vadd.f32 %v4648, %v4590
      %v4681 = vadd.f32 %v4649, %v4595
      %v4682 = vadd.f32 %v4650, %v4600
      %v4683 = vadd.f32 %v4651, %v4605
      %v4684 = vadd.f32 %v4652, %v4610
      %v4685 = vadd.f32 %v4653, %v4615
      %v4686 = vadd.f32 %v4654, %v4620
      %4687 = vst [vmem:[%s386] sm:$0xff] %v4655
      %4688 = vst [vmem:[%s386 + $0x8] sm:$0xff] %v4656
      %4689 = vst [vmem:[%s386 + $0x10] sm:$0xff] %v4657
      %4690 = vst [vmem:[%s386 + $0x18] sm:$0xff] %v4658
      %4691 = vst [vmem:[%s386 + $0x20] sm:$0xff] %v4659
      %4692 = vst [vmem:[%s386 + $0x28] sm:$0xff] %v4660
      %4693 = vst [vmem:[%s386 + $0x30] sm:$0xff] %v4661
      %4694 = vst [vmem:[%s386 + $0x38] sm:$0xff] %v4662
      %4695 = vst [vmem:[%s386 + $0x40] sm:$0xff] %v4663
      %4696 = vst [vmem:[%s386 + $0x48] sm:$0xff] %v4664
      %4697 = vst [vmem:[%s386 + $0x50] sm:$0xff] %v4665
      %4698 = vst [vmem:[%s386 + $0x58] sm:$0xff] %v4666
      %4699 = vst [vmem:[%s386 + $0x60] sm:$0xff] %v4667
      %4700 = vst [vmem:[%s386 + $0x68] sm:$0xff] %v4668
      %4701 = vst [vmem:[%s386 + $0x70] sm:$0xff] %v4669
      %4702 = vst [vmem:[%s386 + $0x78] sm:$0xff] %v4670
      %4703 = vst [vmem:[%s386 + $0x80] sm:$0xff] %v4671
      %4704 = vst [vmem:[%s386 + $0x88] sm:$0xff] %v4672
      %4705 = vst [vmem:[%s386 + $0x90] sm:$0xff] %v4673
      %4706 = vst [vmem:[%s386 + $0x98] sm:$0xff] %v4674
      %4707 = vst [vmem:[%s386 + $0xa0] sm:$0xff] %v4675
      %4708 = vst [vmem:[%s386 + $0xa8] sm:$0xff] %v4676
      %4709 = vst [vmem:[%s386 + $0xb0] sm:$0xff] %v4677
      %4710 = vst [vmem:[%s386 + $0xb8] sm:$0xff] %v4678
      %4711 = vst [vmem:[%s386 + $0xc0] sm:$0xff] %v4679
      %4712 = vst [vmem:[%s386 + $0xc8] sm:$0xff] %v4680
      %4713 = vst [vmem:[%s386 + $0xd0] sm:$0xff] %v4681
      %4714 = vst [vmem:[%s386 + $0xd8] sm:$0xff] %v4682
      %4715 = vst [vmem:[%s386 + $0xe0] sm:$0xff] %v4683
      %4716 = vst [vmem:[%s386 + $0xe8] sm:$0xff] %v4684
      %4717 = vst [vmem:[%s386 + $0xf0] sm:$0xff] %v4685
      %4718 = vst [vmem:[%s386 + $0xf8] sm:$0xff] %v4686
      %p4719 = scmp.lt.s32.totalorder %s22, 1
      %s4720 = scalar_select %p4719, %s22, 1
      %s4721 = smul.addr %s4720, 32
      %s4722 = smul.addr %s4721, 8
      %s4723 = scalar_lea.vmem %s11, %s4722
      // Predicated region
      $region72: #{convnext_block.1} parent=63 // pred_check
        %p4724 = pneg %p276
      $region73: #{convnext_block.1} parent=63 // pred_check_branch
        %4726 = sbr.rel (%p4724) target = $region75
      $region74: #{convnext_block.1} parent=63 // pred_region
        _
      $region75: #{convnext_block.1} parent=63 // pred_fallthru
        _
    $region64: #{convnext_block.1} parent=5 // pred_fallthru
      _
    %p4727 = scmp.le.s32.totalorder 2, %s17
    // Predicated region
    $region76: #{convnext_block.1} parent=5 // pred_check
      %p4728 = pneg %p4727
    $region77: #{convnext_block.1} parent=5 // pred_check_branch
      %4730 = sbr.rel (%p4728) target = $region79
    $region78: #{convnext_block.1} parent=5 // pred_region
      %s4731 = ssub.s32 %s17, 2
      // Predicated region
      $region80: #{convnext_block.1} parent=78 // pred_check
        %p4732 = pneg %p282
      $region81: #{convnext_block.1} parent=78 // pred_check_branch
        %4734 = sbr.rel (%p4732) target = $region83
      $region82: #{convnext_block.1} parent=78 // pred_region
        %p4735 = scmp.lt.s32.totalorder %s23, 1
        %s4736 = scalar_select %p4735, %s23, 1
        %s4737 = smul.addr %s4736, 32
        %s4738 = smul.addr %s4737, 8
        %s4739 = scalar_lea.vmem %s11, %s4738
      $region83: #{convnext_block.1} parent=78 // pred_fallthru
        _
    $region79: #{convnext_block.1} parent=5 // pred_fallthru
      _
  $region6: #{convnext_block.1} parent=0 // loop_footer
    %s21 = sadd.s32 1, %s17
  $region7: #{convnext_block.1} parent=0 // loop_footer_branch
    %16 = sbr.rel target = $region3
  $region8: #{convnext_block.1} parent=0 // loop_exit
    _

</llo_original>
